<compile_context>
chip_gen: v5e
topology: v5e:2x2
jax: 0.10.0
libtpu: 0.0.40
codegen_flags: <defaults>
</compile_context>

<pallas_src>
import functools
import math

import jax
import jax.numpy as jnp
import numpy as np
from jax.experimental import pallas as pl
from jax.experimental.pallas import tpu as pltpu

# ----------------------------- model constants (from the nn.Module __init__) --
INPUT_DIM = 4
PATCH_SIZE = 12
D_MODEL = 64
N_HEADS = 2
NUM_LAYERS = 2
OUTPUT_LEN = 24
D_FF = 2048            # nn.TransformerEncoderLayer default dim_feedforward
LN_EPS = 1e-5
HEAD_DIM = D_MODEL // N_HEADS

F_IN = PATCH_SIZE * INPUT_DIM          # 48 real input features per token
F_PAD = 64                             # token features padded for a clean MXU K

# -------- packed-slab geometry (every per-layer row offset is a multiple of 8)
ATTN_STRIDE = D_MODEL + 8              # 72 rows/layer: 64 weight rows + 8 vector rows
ATTN_COLS = 5 * D_MODEL                # [wq*s | wk | wv | zeros | wo]
FF1_STRIDE = D_MODEL + 8               # 72 rows/layer: 64 wf1 rows + bf1 row + pad
EO_EMB_W = 0                           # emb_w rows 0:64   (rows 48:64 zero)
EO_EMB_B = F_PAD                       # emb_b row 64
EO_OUT_W = F_PAD + 8                   # out_w rows 72:136 (cols 24:64 zero)
EO_OUT_B = EO_OUT_W + D_MODEL          # out_b row 136
EO_ROWS = EO_OUT_B + 8                 # 144


# ------------------------------------------------------------ fused kernel ---
def _fused_forward_kernel(x_ref, eo_ref, attn_ref, ff1_ref, ff2_ref, o_ref,
                          *, L, N, NP):
    """Whole PatchTST forward on VMEM-resident packed slabs.

    Token rows are l-major with a padded patch axis: row = l*NP + n,
    l in [0, L) (PyTorch seq axis = batch), n in [0, NP) with rows n >= N
    zero-padded so L*NP is a multiple of 8 (whole sublane tiles, no
    misaligned row slices anywhere in the kernel).
    """
    f32 = jnp.float32
    LNP = L * NP

    # ---- constants, built once and reused by every layer ---------------------
    lane = jax.lax.broadcasted_iota(jnp.int32, (1, D_MODEL), 1)
    head_masks = [
        ((lane >= hh * HEAD_DIM) & (lane < (hh + 1) * HEAD_DIM)).astype(f32)
        for hh in range(N_HEADS)
    ]
    # One-hot row permutations: bring the keys/values of sequence position
    # (l + j) mod L onto the same sublanes as the queries of position l
    # (same patch index n), so cross terms are pure whole-vreg elementwise ops.
    pr = jax.lax.broadcasted_iota(jnp.int32, (LNP, LNP), 0)
    pc = jax.lax.broadcasted_iota(jnp.int32, (LNP, LNP), 1)
    perms = [(pc == (pr + j * NP) % LNP).astype(f32) for j in range(1, L)]
    # Masked patch-mean matrix: averages the N real patches of each batch row
    # (padded rows excluded), fused with the output projection below.
    mr = jax.lax.broadcasted_iota(jnp.int32, (L, LNP), 0)
    mc = jax.lax.broadcasted_iota(jnp.int32, (L, LNP), 1)
    mean_mat = ((mc >= mr * NP) & (mc < mr * NP + N)).astype(f32) * (1.0 / N)

    def layer_norm(t, g, b):
        mu = jnp.mean(t, axis=-1, keepdims=True)
        var = jnp.mean((t - mu) ** 2, axis=-1, keepdims=True)
        return (t - mu) * jax.lax.rsqrt(var + LN_EPS) * g + b

    # ---- embedding ------------------------------------------------------------
    emb_w = eo_ref[EO_EMB_W:EO_EMB_W + F_PAD, :]              # (64, 64)
    emb_b = eo_ref[EO_EMB_B:EO_EMB_B + 1, :]                  # (1, 64)
    h = jnp.dot(x_ref[...], emb_w, preferred_element_type=f32) + emb_b   # (LNP, 64)

    # ---- transformer encoder layers (unrolled, weights stay in VMEM) ----------
    for l in range(NUM_LAYERS):
        ab = l * ATTN_STRIDE
        w_l = attn_ref[ab:ab + D_MODEL, :]                    # (64, 320)
        vec = attn_ref[ab + D_MODEL:ab + D_MODEL + 8, :]      # (8, 320)
        w_qkv = w_l[:, :3 * D_MODEL]                          # (64, 192)  [wq*s|wk|wv]
        w_o = w_l[:, 4 * D_MODEL:5 * D_MODEL]                 # (64, 64)
        b_qkv = vec[0:1, :3 * D_MODEL]                        # (1, 192)   [bq*s|bk|bv]
        b_o = vec[0:1, 4 * D_MODEL:5 * D_MODEL]
        g1 = vec[1:2, :D_MODEL]
        be1 = vec[2:3, :D_MODEL]
        g2 = vec[3:4, :D_MODEL]
        be2 = vec[4:5, :D_MODEL]
        b_f2 = vec[5:6, :D_MODEL]

        # --- fused QKV projection: one MXU pass, one bias add -----------------
        qkv = jnp.dot(h, w_qkv, preferred_element_type=f32) + b_qkv   # (LNP, 192)
        q = qkv[:, :D_MODEL]
        k_sh = [qkv[:, D_MODEL:2 * D_MODEL]]
        v_sh = [qkv[:, 2 * D_MODEL:3 * D_MODEL]]
        for perm in perms:
            qkv_sw = jnp.dot(perm, qkv, preferred_element_type=f32)   # row-aligned swap
            k_sh.append(qkv_sw[:, D_MODEL:2 * D_MODEL])
            v_sh.append(qkv_sw[:, 2 * D_MODEL:3 * D_MODEL])

        # --- attention: shared q*k products + per-head masked lane reductions --
        prods = [q * kk for kk in k_sh]                       # L x (LNP, 64)
        probs = [jnp.zeros((LNP, D_MODEL), f32) for _ in range(L)]
        for mask in head_masks:
            s = [jnp.sum(p * mask, axis=-1, keepdims=True) for p in prods]  # (LNP, 1)
            m = s[0]
            for j in range(1, L):
                m = jnp.maximum(m, s[j])
            e = [jnp.exp(sj - m) for sj in s]
            den = e[0]
            for j in range(1, L):
                den = den + e[j]
            inv = 1.0 / den                                   # exact division (tolerance)
            for j in range(L):
                probs[j] = probs[j] + (e[j] * inv) * mask     # prob -> this head's lanes
        attn = probs[0] * v_sh[0]                             # one fused MAC per offset
        for j in range(1, L):
            attn = attn + probs[j] * v_sh[j]

        attn_out = jnp.dot(attn, w_o, preferred_element_type=f32) + b_o
        h1 = layer_norm(h + attn_out, g1, be1)

        # --- fused FFN1 + ReLU + FFN2 (the (LNP, 2048) slab never leaves VMEM) --
        fb = l * FF1_STRIDE
        w_f1 = ff1_ref[fb:fb + D_MODEL, :]                    # (64, 2048)
        b_f1 = ff1_ref[fb + D_MODEL:fb + D_MODEL + 1, :]      # (1, 2048)
        w_f2 = ff2_ref[l * D_FF:(l + 1) * D_FF, :]            # (2048, 64)
        ff = jnp.maximum(jnp.dot(h1, w_f1, preferred_element_type=f32) + b_f1, 0.0)
        ff = jnp.dot(ff, w_f2, preferred_element_type=f32) + b_f2
        h = layer_norm(h1 + ff, g2, be2)

    # ---- output head fused with the (masked) patch mean ------------------------
    out_w = eo_ref[EO_OUT_W:EO_OUT_W + D_MODEL, :]            # (64, 64), cols >=24 zero
    out_b = eo_ref[EO_OUT_B:EO_OUT_B + 1, :]                  # (1, 64),  lanes >=24 zero
    hm = jnp.dot(mean_mat, h, preferred_element_type=f32)     # (L, 64)
    y = jnp.dot(hm, out_w, preferred_element_type=f32) + out_b
    o_ref[...] = y[:, :OUTPUT_LEN].astype(o_ref.dtype)


# --------------------------------------------------------------- parameters --
def init_params(key):
    keys = jax.random.split(key, 2 + 6 * NUM_LAYERS)
    it = iter(keys)

    def dense(k, n_in, n_out, scale=0.02):
        w = scale * jax.random.normal(k, (n_in, n_out), jnp.float32)
        b = jnp.zeros((1, n_out), jnp.float32)
        return w, b

    params = {"emb": dense(next(it), PATCH_SIZE * INPUT_DIM, D_MODEL)}
    layers = []
    for _ in range(NUM_LAYERS):
        wq, bq = dense(next(it), D_MODEL, D_MODEL)
        wk, bk = dense(next(it), D_MODEL, D_MODEL)
        wv, bv = dense(next(it), D_MODEL, D_MODEL)
        wo, bo = dense(next(it), D_MODEL, D_MODEL)
        wf1, bf1 = dense(next(it), D_MODEL, D_FF)
        wf2, bf2 = dense(next(it), D_FF, D_MODEL)
        layers.append({
            "wq": wq, "bq": bq, "wk": wk, "bk": bk, "wv": wv, "bv": bv,
            "wo": wo, "bo": bo,
            "wf1": wf1, "bf1": bf1, "wf2": wf2, "bf2": bf2,
            "g1": jnp.ones((1, D_MODEL), jnp.float32),
            "be1": jnp.zeros((1, D_MODEL), jnp.float32),
            "g2": jnp.ones((1, D_MODEL), jnp.float32),
            "be2": jnp.zeros((1, D_MODEL), jnp.float32),
        })
    params["layers"] = layers
    params["out"] = dense(next(it), D_MODEL, OUTPUT_LEN)
    return params


def pack_params(params):
    """One-time packing of all weights into 4 kernel slabs (done at init time,
    NOT per forward call).  Also folds 1/sqrt(head_dim) into wq / bq."""
    f32 = jnp.float32
    scale = 1.0 / float(np.sqrt(HEAD_DIM))

    emb_w, emb_b = params["emb"]
    out_w, out_b = params["out"]
    eo = jnp.zeros((EO_ROWS, D_MODEL), f32)
    eo = eo.at[EO_EMB_W:EO_EMB_W + F_IN, :].set(emb_w)
    eo = eo.at[EO_EMB_B, :].set(emb_b[0])
    eo = eo.at[EO_OUT_W:EO_OUT_W + D_MODEL, :OUTPUT_LEN].set(out_w)
    eo = eo.at[EO_OUT_B, :OUTPUT_LEN].set(out_b[0])

    attn = jnp.zeros((NUM_LAYERS * ATTN_STRIDE, ATTN_COLS), f32)
    ff1 = jnp.zeros((NUM_LAYERS * FF1_STRIDE, D_FF), f32)
    ff2 = jnp.zeros((NUM_LAYERS * D_FF, D_MODEL), f32)
    for l, lyr in enumerate(params["layers"]):
        ab = l * ATTN_STRIDE
        attn = attn.at[ab:ab + D_MODEL, 0:D_MODEL].set(lyr["wq"] * scale)
        attn = attn.at[ab:ab + D_MODEL, D_MODEL:2 * D_MODEL].set(lyr["wk"])
        attn = attn.at[ab:ab + D_MODEL, 2 * D_MODEL:3 * D_MODEL].set(lyr["wv"])
        attn = attn.at[ab:ab + D_MODEL, 4 * D_MODEL:5 * D_MODEL].set(lyr["wo"])
        vr = ab + D_MODEL
        attn = attn.at[vr, 0:D_MODEL].set(lyr["bq"][0] * scale)
        attn = attn.at[vr, D_MODEL:2 * D_MODEL].set(lyr["bk"][0])
        attn = attn.at[vr, 2 * D_MODEL:3 * D_MODEL].set(lyr["bv"][0])
        attn = attn.at[vr, 4 * D_MODEL:5 * D_MODEL].set(lyr["bo"][0])
        attn = attn.at[vr + 1, 0:D_MODEL].set(lyr["g1"][0])
        attn = attn.at[vr + 2, 0:D_MODEL].set(lyr["be1"][0])
        attn = attn.at[vr + 3, 0:D_MODEL].set(lyr["g2"][0])
        attn = attn.at[vr + 4, 0:D_MODEL].set(lyr["be2"][0])
        attn = attn.at[vr + 5, 0:D_MODEL].set(lyr["bf2"][0])

        fb = l * FF1_STRIDE
        ff1 = ff1.at[fb:fb + D_MODEL, :].set(lyr["wf1"])
        ff1 = ff1.at[fb + D_MODEL, :].set(lyr["bf1"][0])
        ff2 = ff2.at[l * D_FF:(l + 1) * D_FF, :].set(lyr["wf2"])
    return {"emb_out": eo, "attn": attn, "ff1": ff1, "ff2": ff2}


# ------------------------------------------------------------------ forward --
def patchtst_forward(packed, x):
    B, T, D = x.shape
    P = T // PATCH_SIZE
    # Pad the patch axis so every batch row owns a whole number of sublanes
    # (B*NP divisible by 8); padded token rows are zero and never read back.
    step = 8 // math.gcd(B, 8)
    NP = ((P + step - 1) // step) * step
    x3 = x[:, :P * PATCH_SIZE, :].reshape(B, P, PATCH_SIZE * D)
    x3 = jnp.pad(x3, ((0, 0), (0, NP - P), (0, F_PAD - PATCH_SIZE * D)))
    x2d = x3.reshape(B * NP, F_PAD)

    vmem = pl.BlockSpec(memory_space=pltpu.MemorySpace.VMEM)
    kernel = functools.partial(_fused_forward_kernel, L=B, N=P, NP=NP)
    # Single fused, grid-less invocation on one TensorCore: 5 input DMAs
    # (~2.4 MB total), everything resident in VMEM for the whole call.
    return pl.pallas_call(
        kernel,
        out_shape=jax.ShapeDtypeStruct((B, OUTPUT_LEN), x.dtype),
        in_specs=[vmem] * 5,
        out_specs=vmem,
    )(x2d, packed["emb_out"], packed["attn"], packed["ff1"], packed["ff2"])


# ----------------------------------------------------- pure-JAX reference ----
def reference_forward(params, x):
    B, T, D = x.shape
    P = T // PATCH_SIZE
    x = x[:, :P * PATCH_SIZE, :].reshape(B, P, PATCH_SIZE * D)
    w, b = params["emb"]
    h = x @ w + b[0]                       # (L=B, N=P, E) under batch_first=False
    L, N = B, P
    for lyr in params["layers"]:
        src = h
        q = src @ lyr["wq"] + lyr["bq"][0]
        k = src @ lyr["wk"] + lyr["bk"][0]
        v = src @ lyr["wv"] + lyr["bv"][0]
        q = q.reshape(L, N, N_HEADS, HEAD_DIM)
        k = k.reshape(L, N, N_HEADS, HEAD_DIM)
        v = v.reshape(L, N, N_HEADS, HEAD_DIM)
        s = jnp.einsum("inhd,jnhd->nhij", q, k) / np.sqrt(HEAD_DIM)
        p = jax.nn.softmax(s, axis=-1)
        o = jnp.einsum("nhij,jnhd->inhd", p, v).reshape(L, N, D_MODEL)
        attn_out = o @ lyr["wo"] + lyr["bo"][0]

        def ln(t, g, bb):
            mu = t.mean(-1, keepdims=True)
            var = ((t - mu) ** 2).mean(-1, keepdims=True)
            return (t - mu) / jnp.sqrt(var + LN_EPS) * g[0] + bb[0]

        h1 = ln(src + attn_out, lyr["g1"], lyr["be1"])
        ff = jnp.maximum(h1 @ lyr["wf1"] + lyr["bf1"][0], 0.0) @ lyr["wf2"] + lyr["bf2"][0]
        h = ln(h1 + ff, lyr["g2"], lyr["be2"])
    wout, bout = params["out"]
    out = h @ wout + bout[0]
    return out.mean(axis=1)


# --------------------------------------------------------------------- main --
if __name__ == "__main__":
    key = jax.random.PRNGKey(0)
    pkey, xkey = jax.random.split(key)
    params = init_params(pkey)
    packed = pack_params(params)           # one-time weight packing

    B, T = 2, 36                           # 3 patches of size 12
    x = jax.random.normal(xkey, (B, T, INPUT_DIM), jnp.float32)

    out = jax.jit(patchtst_forward)(packed, x)
    out = jax.block_until_ready(out)
    assert out.shape == (B, OUTPUT_LEN)

    ref = reference_forward(params, x)
    np.testing.assert_allclose(np.asarray(out), np.asarray(ref),
                               rtol=2e-4, atol=2e-4)
    print("KERNEL_OK")
</pallas_src>

<mosaic_0001>
module attributes {stable_mosaic.version = 11 : i64} {
  func.func @_fused_forward_kernel(%arg0: memref<8x64xf32, #tpu.memory_space<vmem>>, %arg1: memref<144x64xf32, #tpu.memory_space<vmem>>, %arg2: memref<144x320xf32, #tpu.memory_space<vmem>>, %arg3: memref<144x2048xf32, #tpu.memory_space<vmem>>, %arg4: memref<4096x64xf32, #tpu.memory_space<vmem>>, %arg5: memref<2x24xf32, #tpu.memory_space<vmem>>) attributes {dimension_semantics = [], scalar_prefetch = 0 : i64, scratch_operands = 0 : i64, tpu.core_type = #tpu.core_type<tc>} {
    %0 = tpu.iota {dimensions = array<i32: 1>} : vector<1x64xi32>
    %c0_i32 = arith.constant 0 : i32
    %1 = vector.broadcast %c0_i32 : i32 to vector<1x64xi32>
    %2 = arith.cmpi sge, %0, %1 : vector<1x64xi32>
    %c32_i32 = arith.constant 32 : i32
    %3 = vector.broadcast %c32_i32 : i32 to vector<1x64xi32>
    %4 = arith.cmpi slt, %0, %3 : vector<1x64xi32>
    %5 = arith.andi %2, %4 : vector<1x64xi1>
    %6 = arith.extui %5 : vector<1x64xi1> to vector<1x64xi32>
    %7 = arith.sitofp %6 : vector<1x64xi32> to vector<1x64xf32>
    %c32_i32_0 = arith.constant 32 : i32
    %8 = vector.broadcast %c32_i32_0 : i32 to vector<1x64xi32>
    %9 = arith.cmpi sge, %0, %8 : vector<1x64xi32>
    %c64_i32 = arith.constant 64 : i32
    %10 = vector.broadcast %c64_i32 : i32 to vector<1x64xi32>
    %11 = arith.cmpi slt, %0, %10 : vector<1x64xi32>
    %12 = arith.andi %9, %11 : vector<1x64xi1>
    %13 = arith.extui %12 : vector<1x64xi1> to vector<1x64xi32>
    %14 = arith.sitofp %13 : vector<1x64xi32> to vector<1x64xf32>
    %15 = tpu.iota {dimensions = array<i32: 0>} : vector<8x8xi32>
    %16 = tpu.iota {dimensions = array<i32: 1>} : vector<8x8xi32>
    %c4_i32 = arith.constant 4 : i32
    %17 = vector.broadcast %c4_i32 : i32 to vector<8x8xi32>
    %18 = arith.addi %15, %17 : vector<8x8xi32>
    %c8_i32 = arith.constant 8 : i32
    %c0_i32_1 = arith.constant 0 : i32
    %19 = arith.cmpi eq, %c8_i32, %c0_i32_1 : i32
    %c1_i32 = arith.constant 1 : i32
    %20 = arith.select %19, %c1_i32, %c8_i32 : i32
    %21 = vector.broadcast %20 : i32 to vector<8x8xi32>
    %22 = arith.remsi %18, %21 : vector<8x8xi32>
    %c0_i32_2 = arith.constant 0 : i32
    %23 = vector.broadcast %c0_i32_2 : i32 to vector<8x8xi32>
    %24 = arith.cmpi ne, %22, %23 : vector<8x8xi32>
    %c0_i32_3 = arith.constant 0 : i32
    %25 = vector.broadcast %c0_i32_3 : i32 to vector<8x8xi32>
    %26 = arith.cmpi slt, %22, %25 : vector<8x8xi32>
    %c0_i32_4 = arith.constant 0 : i32
    %27 = arith.cmpi slt, %20, %c0_i32_4 : i32
    %28 = vector.broadcast %27 : i1 to vector<8x8xi1>
    %29 = vector.broadcast %28 : vector<8x8xi1> to vector<8x8xi1>
    %30 = arith.xori %26, %29 : vector<8x8xi1>
    %31 = arith.andi %30, %24 : vector<8x8xi1>
    %32 = vector.broadcast %20 : i32 to vector<8x8xi32>
    %33 = arith.addi %22, %32 : vector<8x8xi32>
    %34 = arith.select %31, %33, %22 : vector<8x8xi1>, vector<8x8xi32>
    %35 = arith.cmpi eq, %16, %34 : vector<8x8xi32>
    %36 = arith.extui %35 : vector<8x8xi1> to vector<8x8xi32>
    %37 = arith.sitofp %36 : vector<8x8xi32> to vector<8x8xf32>
    %38 = tpu.iota {dimensions = array<i32: 0>} : vector<2x8xi32>
    %39 = tpu.iota {dimensions = array<i32: 1>} : vector<2x8xi32>
    %c4_i32_5 = arith.constant 4 : i32
    %40 = vector.broadcast %c4_i32_5 : i32 to vector<2x8xi32>
    %41 = arith.muli %38, %40 : vector<2x8xi32>
    %42 = arith.cmpi sge, %39, %41 : vector<2x8xi32>
    %c4_i32_6 = arith.constant 4 : i32
    %43 = vector.broadcast %c4_i32_6 : i32 to vector<2x8xi32>
    %44 = arith.muli %38, %43 : vector<2x8xi32>
    %c3_i32 = arith.constant 3 : i32
    %45 = vector.broadcast %c3_i32 : i32 to vector<2x8xi32>
    %46 = arith.addi %44, %45 : vector<2x8xi32>
    %47 = arith.cmpi slt, %39, %46 : vector<2x8xi32>
    %48 = arith.andi %42, %47 : vector<2x8xi1>
    %49 = arith.extui %48 : vector<2x8xi1> to vector<2x8xi32>
    %50 = arith.sitofp %49 : vector<2x8xi32> to vector<2x8xf32>
    %cst = arith.constant 0.333333343 : f32
    %51 = vector.broadcast %cst : f32 to vector<2x8xf32>
    %52 = arith.mulf %50, %51 : vector<2x8xf32>
    %c0 = arith.constant 0 : index
    %c0_7 = arith.constant 0 : index
    %53 = vector.load %arg1[%c0, %c0_7] : memref<144x64xf32, #tpu.memory_space<vmem>>, vector<64x64xf32>
    %c64 = arith.constant 64 : index
    %c0_8 = arith.constant 0 : index
    %54 = vector.load %arg1[%c64, %c0_8] : memref<144x64xf32, #tpu.memory_space<vmem>>, vector<1x64xf32>
    %c0_9 = arith.constant 0 : index
    %c0_10 = arith.constant 0 : index
    %55 = vector.load %arg0[%c0_9, %c0_10] : memref<8x64xf32, #tpu.memory_space<vmem>>, vector<8x64xf32>
    %cst_11 = arith.constant dense<0.000000e+00> : vector<8x64xf32>
    %56 = tpu.matmul %55, %53, %cst_11 {dimension_numbers = #tpu.dot_dimension_numbers<[1], [0], [0], [1], [0, 0, 1, 1], [], []>} : vector<8x64xf32>, vector<64x64xf32>, vector<8x64xf32> -> vector<8x64xf32>
    %57 = vector.broadcast %54 : vector<1x64xf32> to vector<8x64xf32>
    %58 = arith.addf %56, %57 : vector<8x64xf32>
    %c0_12 = arith.constant 0 : index
    %c0_13 = arith.constant 0 : index
    %59 = vector.load %arg2[%c0_12, %c0_13] : memref<144x320xf32, #tpu.memory_space<vmem>>, vector<64x320xf32>
    %c64_14 = arith.constant 64 : index
    %c0_15 = arith.constant 0 : index
    %60 = vector.load %arg2[%c64_14, %c0_15] : memref<144x320xf32, #tpu.memory_space<vmem>>, vector<8x320xf32>
    %61 = vector.extract_strided_slice %59 {offsets = [0, 0], sizes = [64, 192], strides = [1, 1]} : vector<64x320xf32> to vector<64x192xf32>
    %62 = vector.extract_strided_slice %59 {offsets = [0, 256], sizes = [64, 64], strides = [1, 1]} : vector<64x320xf32> to vector<64x64xf32>
    %63 = vector.extract_strided_slice %60 {offsets = [0, 0], sizes = [1, 192], strides = [1, 1]} : vector<8x320xf32> to vector<1x192xf32>
    %64 = vector.extract_strided_slice %60 {offsets = [0, 256], sizes = [1, 64], strides = [1, 1]} : vector<8x320xf32> to vector<1x64xf32>
    %65 = vector.extract_strided_slice %60 {offsets = [1, 0], sizes = [1, 64], strides = [1, 1]} : vector<8x320xf32> to vector<1x64xf32>
    %66 = vector.extract_strided_slice %60 {offsets = [2, 0], sizes = [1, 64], strides = [1, 1]} : vector<8x320xf32> to vector<1x64xf32>
    %67 = vector.extract_strided_slice %60 {offsets = [3, 0], sizes = [1, 64], strides = [1, 1]} : vector<8x320xf32> to vector<1x64xf32>
    %68 = vector.extract_strided_slice %60 {offsets = [4, 0], sizes = [1, 64], strides = [1, 1]} : vector<8x320xf32> to vector<1x64xf32>
    %69 = vector.extract_strided_slice %60 {offsets = [5, 0], sizes = [1, 64], strides = [1, 1]} : vector<8x320xf32> to vector<1x64xf32>
    %cst_16 = arith.constant dense<0.000000e+00> : vector<8x192xf32>
    %70 = tpu.matmul %58, %61, %cst_16 {dimension_numbers = #tpu.dot_dimension_numbers<[1], [0], [0], [1], [0, 0, 1, 1], [], []>} : vector<8x64xf32>, vector<64x192xf32>, vector<8x192xf32> -> vector<8x192xf32>
    %71 = vector.broadcast %63 : vector<1x192xf32> to vector<8x192xf32>
    %72 = arith.addf %70, %71 : vector<8x192xf32>
    %73 = vector.extract_strided_slice %72 {offsets = [0, 0], sizes = [8, 64], strides = [1, 1]} : vector<8x192xf32> to vector<8x64xf32>
    %74 = vector.extract_strided_slice %72 {offsets = [0, 64], sizes = [8, 64], strides = [1, 1]} : vector<8x192xf32> to vector<8x64xf32>
    %75 = vector.extract_strided_slice %72 {offsets = [0, 128], sizes = [8, 64], strides = [1, 1]} : vector<8x192xf32> to vector<8x64xf32>
    %cst_17 = arith.constant dense<0.000000e+00> : vector<8x192xf32>
    %76 = tpu.matmul %37, %72, %cst_17 {dimension_numbers = #tpu.dot_dimension_numbers<[1], [0], [0], [1], [0, 0, 1, 1], [], []>} : vector<8x8xf32>, vector<8x192xf32>, vector<8x192xf32> -> vector<8x192xf32>
    %77 = vector.extract_strided_slice %76 {offsets = [0, 64], sizes = [8, 64], strides = [1, 1]} : vector<8x192xf32> to vector<8x64xf32>
    %78 = vector.extract_strided_slice %76 {offsets = [0, 128], sizes = [8, 64], strides = [1, 1]} : vector<8x192xf32> to vector<8x64xf32>
    %79 = arith.mulf %73, %74 : vector<8x64xf32>
    %80 = arith.mulf %73, %77 : vector<8x64xf32>
    %cst_18 = arith.constant 0.000000e+00 : f32
    %81 = vector.broadcast %cst_18 : f32 to vector<8x64xf32>
    %cst_19 = arith.constant 0.000000e+00 : f32
    %82 = vector.broadcast %cst_19 : f32 to vector<8x64xf32>
    %83 = vector.broadcast %7 : vector<1x64xf32> to vector<8x64xf32>
    %84 = arith.mulf %79, %83 : vector<8x64xf32>
    %cst_20 = arith.constant dense<0.000000e+00> : vector<8xf32>
    %85 = vector.multi_reduction <add>, %84, %cst_20 [1] : vector<8x64xf32> to vector<8xf32>
    %86 = vector.shape_cast %85 : vector<8xf32> to vector<8x1xf32>
    %87 = vector.broadcast %7 : vector<1x64xf32> to vector<8x64xf32>
    %88 = arith.mulf %80, %87 : vector<8x64xf32>
    %cst_21 = arith.constant dense<0.000000e+00> : vector<8xf32>
    %89 = vector.multi_reduction <add>, %88, %cst_21 [1] : vector<8x64xf32> to vector<8xf32>
    %90 = vector.shape_cast %89 : vector<8xf32> to vector<8x1xf32>
    %91 = arith.maximumf %86, %90 : vector<8x1xf32>
    %92 = arith.subf %86, %91 : vector<8x1xf32>
    %93 = math.exp %92 : vector<8x1xf32>
    %94 = arith.subf %90, %91 : vector<8x1xf32>
    %95 = math.exp %94 : vector<8x1xf32>
    %96 = arith.addf %93, %95 : vector<8x1xf32>
    %cst_22 = arith.constant 1.000000e+00 : f32
    %97 = vector.broadcast %cst_22 : f32 to vector<8x1xf32>
    %98 = arith.divf %97, %96 : vector<8x1xf32>
    %99 = arith.mulf %93, %98 : vector<8x1xf32>
    %100 = vector.broadcast %99 : vector<8x1xf32> to vector<8x64xf32>
    %101 = vector.broadcast %7 : vector<1x64xf32> to vector<8x64xf32>
    %102 = arith.mulf %100, %101 : vector<8x64xf32>
    %103 = arith.addf %81, %102 : vector<8x64xf32>
    %104 = arith.mulf %95, %98 : vector<8x1xf32>
    %105 = vector.broadcast %104 : vector<8x1xf32> to vector<8x64xf32>
    %106 = vector.broadcast %7 : vector<1x64xf32> to vector<8x64xf32>
    %107 = arith.mulf %105, %106 : vector<8x64xf32>
    %108 = arith.addf %82, %107 : vector<8x64xf32>
    %109 = vector.broadcast %14 : vector<1x64xf32> to vector<8x64xf32>
    %110 = arith.mulf %79, %109 : vector<8x64xf32>
    %cst_23 = arith.constant dense<0.000000e+00> : vector<8xf32>
    %111 = vector.multi_reduction <add>, %110, %cst_23 [1] : vector<8x64xf32> to vector<8xf32>
    %112 = vector.shape_cast %111 : vector<8xf32> to vector<8x1xf32>
    %113 = vector.broadcast %14 : vector<1x64xf32> to vector<8x64xf32>
    %114 = arith.mulf %80, %113 : vector<8x64xf32>
    %cst_24 = arith.constant dense<0.000000e+00> : vector<8xf32>
    %115 = vector.multi_reduction <add>, %114, %cst_24 [1] : vector<8x64xf32> to vector<8xf32>
    %116 = vector.shape_cast %115 : vector<8xf32> to vector<8x1xf32>
    %117 = arith.maximumf %112, %116 : vector<8x1xf32>
    %118 = arith.subf %112, %117 : vector<8x1xf32>
    %119 = math.exp %118 : vector<8x1xf32>
    %120 = arith.subf %116, %117 : vector<8x1xf32>
    %121 = math.exp %120 : vector<8x1xf32>
    %122 = arith.addf %119, %121 : vector<8x1xf32>
    %cst_25 = arith.constant 1.000000e+00 : f32
    %123 = vector.broadcast %cst_25 : f32 to vector<8x1xf32>
    %124 = arith.divf %123, %122 : vector<8x1xf32>
    %125 = arith.mulf %119, %124 : vector<8x1xf32>
    %126 = vector.broadcast %125 : vector<8x1xf32> to vector<8x64xf32>
    %127 = vector.broadcast %14 : vector<1x64xf32> to vector<8x64xf32>
    %128 = arith.mulf %126, %127 : vector<8x64xf32>
    %129 = arith.addf %103, %128 : vector<8x64xf32>
    %130 = arith.mulf %121, %124 : vector<8x1xf32>
    %131 = vector.broadcast %130 : vector<8x1xf32> to vector<8x64xf32>
    %132 = vector.broadcast %14 : vector<1x64xf32> to vector<8x64xf32>
    %133 = arith.mulf %131, %132 : vector<8x64xf32>
    %134 = arith.addf %108, %133 : vector<8x64xf32>
    %135 = arith.mulf %129, %75 : vector<8x64xf32>
    %136 = arith.mulf %134, %78 : vector<8x64xf32>
    %137 = arith.addf %135, %136 : vector<8x64xf32>
    %cst_26 = arith.constant dense<0.000000e+00> : vector<8x64xf32>
    %138 = tpu.matmul %137, %62, %cst_26 {dimension_numbers = #tpu.dot_dimension_numbers<[1], [0], [0], [1], [0, 0, 1, 1], [], []>} : vector<8x64xf32>, vector<64x64xf32>, vector<8x64xf32> -> vector<8x64xf32>
    %139 = vector.broadcast %64 : vector<1x64xf32> to vector<8x64xf32>
    %140 = arith.addf %138, %139 : vector<8x64xf32>
    %141 = arith.addf %58, %140 : vector<8x64xf32>
    %cst_27 = arith.constant dense<0.000000e+00> : vector<8xf32>
    %142 = vector.multi_reduction <add>, %141, %cst_27 [1] : vector<8x64xf32> to vector<8xf32>
    %143 = vector.shape_cast %142 : vector<8xf32> to vector<8x1xf32>
    %cst_28 = arith.constant 6.400000e+01 : f32
    %144 = vector.broadcast %cst_28 : f32 to vector<8x1xf32>
    %145 = arith.divf %143, %144 : vector<8x1xf32>
    %146 = vector.broadcast %145 : vector<8x1xf32> to vector<8x64xf32>
    %147 = arith.subf %141, %146 : vector<8x64xf32>
    %148 = arith.mulf %147, %147 : vector<8x64xf32>
    %cst_29 = arith.constant dense<0.000000e+00> : vector<8xf32>
    %149 = vector.multi_reduction <add>, %148, %cst_29 [1] : vector<8x64xf32> to vector<8xf32>
    %150 = vector.shape_cast %149 : vector<8xf32> to vector<8x1xf32>
    %cst_30 = arith.constant 6.400000e+01 : f32
    %151 = vector.broadcast %cst_30 : f32 to vector<8x1xf32>
    %152 = arith.divf %150, %151 : vector<8x1xf32>
    %153 = vector.broadcast %145 : vector<8x1xf32> to vector<8x64xf32>
    %154 = arith.subf %141, %153 : vector<8x64xf32>
    %cst_31 = arith.constant 9.99999974E-6 : f32
    %155 = vector.broadcast %cst_31 : f32 to vector<8x1xf32>
    %156 = arith.addf %152, %155 : vector<8x1xf32>
    %157 = math.rsqrt %156 : vector<8x1xf32>
    %158 = vector.broadcast %157 : vector<8x1xf32> to vector<8x64xf32>
    %159 = arith.mulf %154, %158 : vector<8x64xf32>
    %160 = vector.broadcast %65 : vector<1x64xf32> to vector<8x64xf32>
    %161 = arith.mulf %159, %160 : vector<8x64xf32>
    %162 = vector.broadcast %66 : vector<1x64xf32> to vector<8x64xf32>
    %163 = arith.addf %161, %162 : vector<8x64xf32>
    %c0_32 = arith.constant 0 : index
    %c0_33 = arith.constant 0 : index
    %164 = vector.load %arg3[%c0_32, %c0_33] : memref<144x2048xf32, #tpu.memory_space<vmem>>, vector<64x2048xf32>
    %c64_34 = arith.constant 64 : index
    %c0_35 = arith.constant 0 : index
    %165 = vector.load %arg3[%c64_34, %c0_35] : memref<144x2048xf32, #tpu.memory_space<vmem>>, vector<1x2048xf32>
    %c0_36 = arith.constant 0 : index
    %c0_37 = arith.constant 0 : index
    %166 = vector.load %arg4[%c0_36, %c0_37] : memref<4096x64xf32, #tpu.memory_space<vmem>>, vector<2048x64xf32>
    %cst_38 = arith.constant dense<0.000000e+00> : vector<8x2048xf32>
    %167 = tpu.matmul %163, %164, %cst_38 {dimension_numbers = #tpu.dot_dimension_numbers<[1], [0], [0], [1], [0, 0, 1, 1], [], []>} : vector<8x64xf32>, vector<64x2048xf32>, vector<8x2048xf32> -> vector<8x2048xf32>
    %168 = vector.broadcast %165 : vector<1x2048xf32> to vector<8x2048xf32>
    %169 = arith.addf %167, %168 : vector<8x2048xf32>
    %cst_39 = arith.constant 0.000000e+00 : f32
    %170 = vector.broadcast %cst_39 : f32 to vector<8x2048xf32>
    %171 = arith.maximumf %169, %170 : vector<8x2048xf32>
    %cst_40 = arith.constant dense<0.000000e+00> : vector<8x64xf32>
    %172 = tpu.matmul %171, %166, %cst_40 {dimension_numbers = #tpu.dot_dimension_numbers<[1], [0], [0], [1], [0, 0, 1, 1], [], []>} : vector<8x2048xf32>, vector<2048x64xf32>, vector<8x64xf32> -> vector<8x64xf32>
    %173 = vector.broadcast %69 : vector<1x64xf32> to vector<8x64xf32>
    %174 = arith.addf %172, %173 : vector<8x64xf32>
    %175 = arith.addf %163, %174 : vector<8x64xf32>
    %cst_41 = arith.constant dense<0.000000e+00> : vector<8xf32>
    %176 = vector.multi_reduction <add>, %175, %cst_41 [1] : vector<8x64xf32> to vector<8xf32>
    %177 = vector.shape_cast %176 : vector<8xf32> to vector<8x1xf32>
    %cst_42 = arith.constant 6.400000e+01 : f32
    %178 = vector.broadcast %cst_42 : f32 to vector<8x1xf32>
    %179 = arith.divf %177, %178 : vector<8x1xf32>
    %180 = vector.broadcast %179 : vector<8x1xf32> to vector<8x64xf32>
    %181 = arith.subf %175, %180 : vector<8x64xf32>
    %182 = arith.mulf %181, %181 : vector<8x64xf32>
    %cst_43 = arith.constant dense<0.000000e+00> : vector<8xf32>
    %183 = vector.multi_reduction <add>, %182, %cst_43 [1] : vector<8x64xf32> to vector<8xf32>
    %184 = vector.shape_cast %183 : vector<8xf32> to vector<8x1xf32>
    %cst_44 = arith.constant 6.400000e+01 : f32
    %185 = vector.broadcast %cst_44 : f32 to vector<8x1xf32>
    %186 = arith.divf %184, %185 : vector<8x1xf32>
    %187 = vector.broadcast %179 : vector<8x1xf32> to vector<8x64xf32>
    %188 = arith.subf %175, %187 : vector<8x64xf32>
    %cst_45 = arith.constant 9.99999974E-6 : f32
    %189 = vector.broadcast %cst_45 : f32 to vector<8x1xf32>
    %190 = arith.addf %186, %189 : vector<8x1xf32>
    %191 = math.rsqrt %190 : vector<8x1xf32>
    %192 = vector.broadcast %191 : vector<8x1xf32> to vector<8x64xf32>
    %193 = arith.mulf %188, %192 : vector<8x64xf32>
    %194 = vector.broadcast %67 : vector<1x64xf32> to vector<8x64xf32>
    %195 = arith.mulf %193, %194 : vector<8x64xf32>
    %196 = vector.broadcast %68 : vector<1x64xf32> to vector<8x64xf32>
    %197 = arith.addf %195, %196 : vector<8x64xf32>
    %c72 = arith.constant 72 : index
    %c0_46 = arith.constant 0 : index
    %198 = vector.load %arg2[%c72, %c0_46] : memref<144x320xf32, #tpu.memory_space<vmem>>, vector<64x320xf32>
    %c136 = arith.constant 136 : index
    %c0_47 = arith.constant 0 : index
    %199 = vector.load %arg2[%c136, %c0_47] : memref<144x320xf32, #tpu.memory_space<vmem>>, vector<8x320xf32>
    %200 = vector.extract_strided_slice %198 {offsets = [0, 0], sizes = [64, 192], strides = [1, 1]} : vector<64x320xf32> to vector<64x192xf32>
    %201 = vector.extract_strided_slice %198 {offsets = [0, 256], sizes = [64, 64], strides = [1, 1]} : vector<64x320xf32> to vector<64x64xf32>
    %202 = vector.extract_strided_slice %199 {offsets = [0, 0], sizes = [1, 192], strides = [1, 1]} : vector<8x320xf32> to vector<1x192xf32>
    %203 = vector.extract_strided_slice %199 {offsets = [0, 256], sizes = [1, 64], strides = [1, 1]} : vector<8x320xf32> to vector<1x64xf32>
    %204 = vector.extract_strided_slice %199 {offsets = [1, 0], sizes = [1, 64], strides = [1, 1]} : vector<8x320xf32> to vector<1x64xf32>
    %205 = vector.extract_strided_slice %199 {offsets = [2, 0], sizes = [1, 64], strides = [1, 1]} : vector<8x320xf32> to vector<1x64xf32>
    %206 = vector.extract_strided_slice %199 {offsets = [3, 0], sizes = [1, 64], strides = [1, 1]} : vector<8x320xf32> to vector<1x64xf32>
    %207 = vector.extract_strided_slice %199 {offsets = [4, 0], sizes = [1, 64], strides = [1, 1]} : vector<8x320xf32> to vector<1x64xf32>
    %208 = vector.extract_strided_slice %199 {offsets = [5, 0], sizes = [1, 64], strides = [1, 1]} : vector<8x320xf32> to vector<1x64xf32>
    %cst_48 = arith.constant dense<0.000000e+00> : vector<8x192xf32>
    %209 = tpu.matmul %197, %200, %cst_48 {dimension_numbers = #tpu.dot_dimension_numbers<[1], [0], [0], [1], [0, 0, 1, 1], [], []>} : vector<8x64xf32>, vector<64x192xf32>, vector<8x192xf32> -> vector<8x192xf32>
    %210 = vector.broadcast %202 : vector<1x192xf32> to vector<8x192xf32>
    %211 = arith.addf %209, %210 : vector<8x192xf32>
    %212 = vector.extract_strided_slice %211 {offsets = [0, 0], sizes = [8, 64], strides = [1, 1]} : vector<8x192xf32> to vector<8x64xf32>
    %213 = vector.extract_strided_slice %211 {offsets = [0, 64], sizes = [8, 64], strides = [1, 1]} : vector<8x192xf32> to vector<8x64xf32>
    %214 = vector.extract_strided_slice %211 {offsets = [0, 128], sizes = [8, 64], strides = [1, 1]} : vector<8x192xf32> to vector<8x64xf32>
    %cst_49 = arith.constant dense<0.000000e+00> : vector<8x192xf32>
    %215 = tpu.matmul %37, %211, %cst_49 {dimension_numbers = #tpu.dot_dimension_numbers<[1], [0], [0], [1], [0, 0, 1, 1], [], []>} : vector<8x8xf32>, vector<8x192xf32>, vector<8x192xf32> -> vector<8x192xf32>
    %216 = vector.extract_strided_slice %215 {offsets = [0, 64], sizes = [8, 64], strides = [1, 1]} : vector<8x192xf32> to vector<8x64xf32>
    %217 = vector.extract_strided_slice %215 {offsets = [0, 128], sizes = [8, 64], strides = [1, 1]} : vector<8x192xf32> to vector<8x64xf32>
    %218 = arith.mulf %212, %213 : vector<8x64xf32>
    %219 = arith.mulf %212, %216 : vector<8x64xf32>
    %cst_50 = arith.constant 0.000000e+00 : f32
    %220 = vector.broadcast %cst_50 : f32 to vector<8x64xf32>
    %cst_51 = arith.constant 0.000000e+00 : f32
    %221 = vector.broadcast %cst_51 : f32 to vector<8x64xf32>
    %222 = vector.broadcast %7 : vector<1x64xf32> to vector<8x64xf32>
    %223 = arith.mulf %218, %222 : vector<8x64xf32>
    %cst_52 = arith.constant dense<0.000000e+00> : vector<8xf32>
    %224 = vector.multi_reduction <add>, %223, %cst_52 [1] : vector<8x64xf32> to vector<8xf32>
    %225 = vector.shape_cast %224 : vector<8xf32> to vector<8x1xf32>
    %226 = vector.broadcast %7 : vector<1x64xf32> to vector<8x64xf32>
    %227 = arith.mulf %219, %226 : vector<8x64xf32>
    %cst_53 = arith.constant dense<0.000000e+00> : vector<8xf32>
    %228 = vector.multi_reduction <add>, %227, %cst_53 [1] : vector<8x64xf32> to vector<8xf32>
    %229 = vector.shape_cast %228 : vector<8xf32> to vector<8x1xf32>
    %230 = arith.maximumf %225, %229 : vector<8x1xf32>
    %231 = arith.subf %225, %230 : vector<8x1xf32>
    %232 = math.exp %231 : vector<8x1xf32>
    %233 = arith.subf %229, %230 : vector<8x1xf32>
    %234 = math.exp %233 : vector<8x1xf32>
    %235 = arith.addf %232, %234 : vector<8x1xf32>
    %cst_54 = arith.constant 1.000000e+00 : f32
    %236 = vector.broadcast %cst_54 : f32 to vector<8x1xf32>
    %237 = arith.divf %236, %235 : vector<8x1xf32>
    %238 = arith.mulf %232, %237 : vector<8x1xf32>
    %239 = vector.broadcast %238 : vector<8x1xf32> to vector<8x64xf32>
    %240 = vector.broadcast %7 : vector<1x64xf32> to vector<8x64xf32>
    %241 = arith.mulf %239, %240 : vector<8x64xf32>
    %242 = arith.addf %220, %241 : vector<8x64xf32>
    %243 = arith.mulf %234, %237 : vector<8x1xf32>
    %244 = vector.broadcast %243 : vector<8x1xf32> to vector<8x64xf32>
    %245 = vector.broadcast %7 : vector<1x64xf32> to vector<8x64xf32>
    %246 = arith.mulf %244, %245 : vector<8x64xf32>
    %247 = arith.addf %221, %246 : vector<8x64xf32>
    %248 = vector.broadcast %14 : vector<1x64xf32> to vector<8x64xf32>
    %249 = arith.mulf %218, %248 : vector<8x64xf32>
    %cst_55 = arith.constant dense<0.000000e+00> : vector<8xf32>
    %250 = vector.multi_reduction <add>, %249, %cst_55 [1] : vector<8x64xf32> to vector<8xf32>
    %251 = vector.shape_cast %250 : vector<8xf32> to vector<8x1xf32>
    %252 = vector.broadcast %14 : vector<1x64xf32> to vector<8x64xf32>
    %253 = arith.mulf %219, %252 : vector<8x64xf32>
    %cst_56 = arith.constant dense<0.000000e+00> : vector<8xf32>
    %254 = vector.multi_reduction <add>, %253, %cst_56 [1] : vector<8x64xf32> to vector<8xf32>
    %255 = vector.shape_cast %254 : vector<8xf32> to vector<8x1xf32>
    %256 = arith.maximumf %251, %255 : vector<8x1xf32>
    %257 = arith.subf %251, %256 : vector<8x1xf32>
    %258 = math.exp %257 : vector<8x1xf32>
    %259 = arith.subf %255, %256 : vector<8x1xf32>
    %260 = math.exp %259 : vector<8x1xf32>
    %261 = arith.addf %258, %260 : vector<8x1xf32>
    %cst_57 = arith.constant 1.000000e+00 : f32
    %262 = vector.broadcast %cst_57 : f32 to vector<8x1xf32>
    %263 = arith.divf %262, %261 : vector<8x1xf32>
    %264 = arith.mulf %258, %263 : vector<8x1xf32>
    %265 = vector.broadcast %264 : vector<8x1xf32> to vector<8x64xf32>
    %266 = vector.broadcast %14 : vector<1x64xf32> to vector<8x64xf32>
    %267 = arith.mulf %265, %266 : vector<8x64xf32>
    %268 = arith.addf %242, %267 : vector<8x64xf32>
    %269 = arith.mulf %260, %263 : vector<8x1xf32>
    %270 = vector.broadcast %269 : vector<8x1xf32> to vector<8x64xf32>
    %271 = vector.broadcast %14 : vector<1x64xf32> to vector<8x64xf32>
    %272 = arith.mulf %270, %271 : vector<8x64xf32>
    %273 = arith.addf %247, %272 : vector<8x64xf32>
    %274 = arith.mulf %268, %214 : vector<8x64xf32>
    %275 = arith.mulf %273, %217 : vector<8x64xf32>
    %276 = arith.addf %274, %275 : vector<8x64xf32>
    %cst_58 = arith.constant dense<0.000000e+00> : vector<8x64xf32>
    %277 = tpu.matmul %276, %201, %cst_58 {dimension_numbers = #tpu.dot_dimension_numbers<[1], [0], [0], [1], [0, 0, 1, 1], [], []>} : vector<8x64xf32>, vector<64x64xf32>, vector<8x64xf32> -> vector<8x64xf32>
    %278 = vector.broadcast %203 : vector<1x64xf32> to vector<8x64xf32>
    %279 = arith.addf %277, %278 : vector<8x64xf32>
    %280 = arith.addf %197, %279 : vector<8x64xf32>
    %cst_59 = arith.constant dense<0.000000e+00> : vector<8xf32>
    %281 = vector.multi_reduction <add>, %280, %cst_59 [1] : vector<8x64xf32> to vector<8xf32>
    %282 = vector.shape_cast %281 : vector<8xf32> to vector<8x1xf32>
    %cst_60 = arith.constant 6.400000e+01 : f32
    %283 = vector.broadcast %cst_60 : f32 to vector<8x1xf32>
    %284 = arith.divf %282, %283 : vector<8x1xf32>
    %285 = vector.broadcast %284 : vector<8x1xf32> to vector<8x64xf32>
    %286 = arith.subf %280, %285 : vector<8x64xf32>
    %287 = arith.mulf %286, %286 : vector<8x64xf32>
    %cst_61 = arith.constant dense<0.000000e+00> : vector<8xf32>
    %288 = vector.multi_reduction <add>, %287, %cst_61 [1] : vector<8x64xf32> to vector<8xf32>
    %289 = vector.shape_cast %288 : vector<8xf32> to vector<8x1xf32>
    %cst_62 = arith.constant 6.400000e+01 : f32
    %290 = vector.broadcast %cst_62 : f32 to vector<8x1xf32>
    %291 = arith.divf %289, %290 : vector<8x1xf32>
    %292 = vector.broadcast %284 : vector<8x1xf32> to vector<8x64xf32>
    %293 = arith.subf %280, %292 : vector<8x64xf32>
    %cst_63 = arith.constant 9.99999974E-6 : f32
    %294 = vector.broadcast %cst_63 : f32 to vector<8x1xf32>
    %295 = arith.addf %291, %294 : vector<8x1xf32>
    %296 = math.rsqrt %295 : vector<8x1xf32>
    %297 = vector.broadcast %296 : vector<8x1xf32> to vector<8x64xf32>
    %298 = arith.mulf %293, %297 : vector<8x64xf32>
    %299 = vector.broadcast %204 : vector<1x64xf32> to vector<8x64xf32>
    %300 = arith.mulf %298, %299 : vector<8x64xf32>
    %301 = vector.broadcast %205 : vector<1x64xf32> to vector<8x64xf32>
    %302 = arith.addf %300, %301 : vector<8x64xf32>
    %c72_64 = arith.constant 72 : index
    %c0_65 = arith.constant 0 : index
    %303 = vector.load %arg3[%c72_64, %c0_65] : memref<144x2048xf32, #tpu.memory_space<vmem>>, vector<64x2048xf32>
    %c136_66 = arith.constant 136 : index
    %c0_67 = arith.constant 0 : index
    %304 = vector.load %arg3[%c136_66, %c0_67] : memref<144x2048xf32, #tpu.memory_space<vmem>>, vector<1x2048xf32>
    %c2048 = arith.constant 2048 : index
    %c0_68 = arith.constant 0 : index
    %305 = vector.load %arg4[%c2048, %c0_68] : memref<4096x64xf32, #tpu.memory_space<vmem>>, vector<2048x64xf32>
    %cst_69 = arith.constant dense<0.000000e+00> : vector<8x2048xf32>
    %306 = tpu.matmul %302, %303, %cst_69 {dimension_numbers = #tpu.dot_dimension_numbers<[1], [0], [0], [1], [0, 0, 1, 1], [], []>} : vector<8x64xf32>, vector<64x2048xf32>, vector<8x2048xf32> -> vector<8x2048xf32>
    %307 = vector.broadcast %304 : vector<1x2048xf32> to vector<8x2048xf32>
    %308 = arith.addf %306, %307 : vector<8x2048xf32>
    %cst_70 = arith.constant 0.000000e+00 : f32
    %309 = vector.broadcast %cst_70 : f32 to vector<8x2048xf32>
    %310 = arith.maximumf %308, %309 : vector<8x2048xf32>
    %cst_71 = arith.constant dense<0.000000e+00> : vector<8x64xf32>
    %311 = tpu.matmul %310, %305, %cst_71 {dimension_numbers = #tpu.dot_dimension_numbers<[1], [0], [0], [1], [0, 0, 1, 1], [], []>} : vector<8x2048xf32>, vector<2048x64xf32>, vector<8x64xf32> -> vector<8x64xf32>
    %312 = vector.broadcast %208 : vector<1x64xf32> to vector<8x64xf32>
    %313 = arith.addf %311, %312 : vector<8x64xf32>
    %314 = arith.addf %302, %313 : vector<8x64xf32>
    %cst_72 = arith.constant dense<0.000000e+00> : vector<8xf32>
    %315 = vector.multi_reduction <add>, %314, %cst_72 [1] : vector<8x64xf32> to vector<8xf32>
    %316 = vector.shape_cast %315 : vector<8xf32> to vector<8x1xf32>
    %cst_73 = arith.constant 6.400000e+01 : f32
    %317 = vector.broadcast %cst_73 : f32 to vector<8x1xf32>
    %318 = arith.divf %316, %317 : vector<8x1xf32>
    %319 = vector.broadcast %318 : vector<8x1xf32> to vector<8x64xf32>
    %320 = arith.subf %314, %319 : vector<8x64xf32>
    %321 = arith.mulf %320, %320 : vector<8x64xf32>
    %cst_74 = arith.constant dense<0.000000e+00> : vector<8xf32>
    %322 = vector.multi_reduction <add>, %321, %cst_74 [1] : vector<8x64xf32> to vector<8xf32>
    %323 = vector.shape_cast %322 : vector<8xf32> to vector<8x1xf32>
    %cst_75 = arith.constant 6.400000e+01 : f32
    %324 = vector.broadcast %cst_75 : f32 to vector<8x1xf32>
    %325 = arith.divf %323, %324 : vector<8x1xf32>
    %326 = vector.broadcast %318 : vector<8x1xf32> to vector<8x64xf32>
    %327 = arith.subf %314, %326 : vector<8x64xf32>
    %cst_76 = arith.constant 9.99999974E-6 : f32
    %328 = vector.broadcast %cst_76 : f32 to vector<8x1xf32>
    %329 = arith.addf %325, %328 : vector<8x1xf32>
    %330 = math.rsqrt %329 : vector<8x1xf32>
    %331 = vector.broadcast %330 : vector<8x1xf32> to vector<8x64xf32>
    %332 = arith.mulf %327, %331 : vector<8x64xf32>
    %333 = vector.broadcast %206 : vector<1x64xf32> to vector<8x64xf32>
    %334 = arith.mulf %332, %333 : vector<8x64xf32>
    %335 = vector.broadcast %207 : vector<1x64xf32> to vector<8x64xf32>
    %336 = arith.addf %334, %335 : vector<8x64xf32>
    %c72_77 = arith.constant 72 : index
    %c0_78 = arith.constant 0 : index
    %337 = vector.load %arg1[%c72_77, %c0_78] : memref<144x64xf32, #tpu.memory_space<vmem>>, vector<64x64xf32>
    %c136_79 = arith.constant 136 : index
    %c0_80 = arith.constant 0 : index
    %338 = vector.load %arg1[%c136_79, %c0_80] : memref<144x64xf32, #tpu.memory_space<vmem>>, vector<1x64xf32>
    %cst_81 = arith.constant dense<0.000000e+00> : vector<2x64xf32>
    %339 = tpu.matmul %52, %336, %cst_81 {dimension_numbers = #tpu.dot_dimension_numbers<[1], [0], [0], [1], [0, 0, 1, 1], [], []>} : vector<2x8xf32>, vector<8x64xf32>, vector<2x64xf32> -> vector<2x64xf32>
    %cst_82 = arith.constant dense<0.000000e+00> : vector<2x64xf32>
    %340 = tpu.matmul %339, %337, %cst_82 {dimension_numbers = #tpu.dot_dimension_numbers<[1], [0], [0], [1], [0, 0, 1, 1], [], []>} : vector<2x64xf32>, vector<64x64xf32>, vector<2x64xf32> -> vector<2x64xf32>
    %341 = vector.broadcast %338 : vector<1x64xf32> to vector<2x64xf32>
    %342 = arith.addf %340, %341 : vector<2x64xf32>
    %343 = vector.extract_strided_slice %342 {offsets = [0, 0], sizes = [2, 24], strides = [1, 1]} : vector<2x64xf32> to vector<2x24xf32>
    %c0_83 = arith.constant 0 : index
    %c0_84 = arith.constant 0 : index
    %344 = vector.load %arg5[%c0_83, %c0_84] : memref<2x24xf32, #tpu.memory_space<vmem>>, vector<2x24xf32>
    tpu.vector_store %arg5[%c0_83, %c0_84], %343 {strides = array<i32>} : memref<2x24xf32, #tpu.memory_space<vmem>>, vector<2x24xf32>,
    return
  }
}

</mosaic_0001>

<llo_original>
// kernel: patchtst_forward.1
$region0: #{patchtst_forward.1}
  #allocation0 [shape = 'u32[]', space=smem, size = 0x4, offset = 0x4, fixed_abs, tag = 'smem constant byte address 0x4 - core index']
  #allocation1 [shape = 'u32[72,128]{1,0:T(1,128)}', space=vmem, size = 0x9000, scoped, tag = 'internal scratch']
  %s0 = inlined_call_operand.vmem [shape: f32[8,64], index: 0, kind: input, shape index: {}]
  %s1 = inlined_call_operand.vmem [shape: f32[144,64], index: 1, kind: input, shape index: {}]
  %s2 = inlined_call_operand.vmem [shape: f32[144,320], index: 2, kind: input, shape index: {}]
  %s3 = inlined_call_operand.vmem [shape: f32[144,2048], index: 3, kind: input, shape index: {}]
  %s4 = inlined_call_operand.vmem [shape: f32[4096,64], index: 4, kind: input, shape index: {}]
  %s5 = inlined_call_operand.hbm [shape: f32[2,24], index: 5, kind: output, shape index: {}]
  %s6 = sld [smem:[#allocation0]]
  $region30: #{patchtst_forward.1} parent=0
    _
  %s8 = ssub.s32 1, %s6
  %s9 = scalar_select 0, %s8, %s6
  $region1: #{patchtst_forward.1} parent=0
    #allocation2 [shape = 'u8[1024]{0}', space=vmem, size = 0x400, scoped, tag = 'output window, operand 0, single buffered']
    #allocation3 [shape = 's32[1]{0}', space=sflag, size = 0x4, scoped, tag = 'scoped memory for patchtst_forward.1']
    %10 = vsyncpa [#allocation3], 0
    // Predicated region
    $region2: #{patchtst_forward.1} parent=1 // pred_check
      _
    $region3: #{patchtst_forward.1} parent=1 // pred_check_branch
      %12 = sbr.rel (0) target = $region5
    $region4: #{patchtst_forward.1} parent=1 // pred_region
      _
    $region5: #{patchtst_forward.1} parent=1 // pred_fallthru
      _
    // Predicated region
    $region6: #{patchtst_forward.1} parent=1 // pred_check
      _
    $region7: #{patchtst_forward.1} parent=1 // pred_check_branch
      %14 = sbr.rel (0) target = $region9
    $region8: #{patchtst_forward.1} parent=1 // pred_region
      _
    $region9: #{patchtst_forward.1} parent=1 // pred_fallthru
      _
    // Predicated region
    $region10: #{patchtst_forward.1} parent=1 // pred_check
      _
    $region11: #{patchtst_forward.1} parent=1 // pred_check_branch
      %16 = sbr.rel (0) target = $region13
    $region12: #{patchtst_forward.1} parent=1 // pred_region
      _
    $region13: #{patchtst_forward.1} parent=1 // pred_fallthru
      _
    // Predicated region
    $region14: #{patchtst_forward.1} parent=1 // pred_check
      _
    $region15: #{patchtst_forward.1} parent=1 // pred_check_branch
      %18 = sbr.rel (0) target = $region17
    $region16: #{patchtst_forward.1} parent=1 // pred_region
      _
    $region17: #{patchtst_forward.1} parent=1 // pred_fallthru
      _
    // Predicated region
    $region18: #{patchtst_forward.1} parent=1 // pred_check
      _
    $region19: #{patchtst_forward.1} parent=1 // pred_check_branch
      %20 = sbr.rel (0) target = $region21
    $region20: #{patchtst_forward.1} parent=1 // pred_region
      _
    $region21: #{patchtst_forward.1} parent=1 // pred_fallthru
      _
    %v21 = vlaneseq
    %v22 = vand.u32 %v21, 127
    %vm23 = vcmp.ge.s32.totalorder %v22, 0
    %vm24 = vcmp.lt.s32.totalorder %v22, 32
    %vm25 = vmand %vm23, %vm24
    %v26 = vsel %vm25, 1, 0
    %v27 = vcvt.s32.f32 %v26
    %vm28 = vcmp.ge.s32.totalorder %v22, 32
    %vm29 = vcmp.lt.s32.totalorder %v22, 64
    %vm30 = vmand %vm28, %vm29
    %v31 = vsel %vm30, 1, 0
    %v32 = vcvt.s32.f32 %v31
    %v33 = vlaneseq
    %v34 = vshrl.u32 %v33, 7
    %v35 = vadd.s32 %v34, 4
    %vm36 = vcmp.lt.s32.totalorder %v35, 0
    %v37 = vsub.s32 0, %v35
    %v38 = vsel %vm36, %v37, %v35
    %v39 = vshrl.u32 %v38, 3
    %v40 = vand.u32 %v38, 7
    %v41 = vsub.s32 0, %v40
    %v42 = vsel %vm36, %v41, %v40
    %vm43 = vcmp.ne.s32.totalorder %v42, 0
    %vm44 = vcmp.lt.s32.totalorder %v42, 0
    %vm45 = vmand %vm44, %vm43
    %v46 = vadd.s32 %v42, 8
    %v47 = vsel %vm45, %v46, %v42
    %vm48 = vcmp.eq.s32.totalorder %v22, %v47
    %v49 = vsel %vm48, 1, 0
    %v50 = vcvt.s32.f32 %v49
    %v51 = vmul.u32 %v34, 4
    %vm52 = vcmp.ge.s32.totalorder %v22, %v51
    %v53 = vadd.s32 %v51, 3
    %vm54 = vcmp.lt.s32.totalorder %v22, %v53
    %vm55 = vmand %vm52, %vm54
    %v56 = vsel %vm55, 1, 0
    %v57 = vcvt.s32.f32 %v56
    %v58 = vmul.f32 %v57, 0.33333334
    %v59 = vld [vmem:[%s1] sm:$0xff]
    %v60 = vld [vmem:[%s1 + $0x8] sm:$0xff]
    %v61 = vld [vmem:[%s1 + $0x10] sm:$0xff]
    %v62 = vld [vmem:[%s1 + $0x18] sm:$0xff]
    %v63 = vld [vmem:[%s1 + $0x20] sm:$0xff]
    %v64 = vld [vmem:[%s1 + $0x28] sm:$0xff]
    %v65 = vld [vmem:[%s1 + $0x30] sm:$0xff]
    %v66 = vld [vmem:[%s1 + $0x38] sm:$0xff]
    %v67 = vld [vmem:[%s1 + $0x40] sm:$0x1]
    %v68 = vld [vmem:[%s0] sm:$0xff]
    %v69 = vperm.slane %v67, 0
    %vm70 = vcmask 523264
    %v72 = vsel %vm70, %v68, 0
    %74 = vmatpush.msra.mxu0 0.0
    %75 = vmatpush.msra.mxu0 0.0
    %76 = vmatpush.msra.mxu0 0.0
    %77 = vmatpush.msra.mxu0 0.0
    %78 = vmatpush.msra.mxu0 0.0
    %79 = vmatpush.msra.mxu0 0.0
    %80 = vmatpush.msra.mxu0 0.0
    %81 = vmatpush.msra.mxu0 0.0
    %82 = vmatpush.msra.mxu0 %v66
    %83 = vmatpush.msra.mxu0 %v65
    %84 = vmatpush.msra.mxu0 %v64
    %85 = vmatpush.msra.mxu0 %v63
    %86 = vmatpush.msra.mxu0 %v62
    %87 = vmatpush.msra.mxu0 %v61
    %88 = vmatpush.msra.mxu0 %v60
    %89 = vmatpush.msra.mxu0 %v59
    %90 = vmatmul.f32.gmra.mxu0 %v72
    %v91 = vpop.f32.mrf.mxu0
    %v92 = vadd.f32 %v69, %v91
    %93 = vdwg.mxu0
    %v94 = vld [vmem:[%s2] sm:$0xff]
    %v95 = vld [vmem:[%s2 + $0x8] sm:$0xff]
    %v96 = vld [vmem:[%s2 + $0x10] sm:$0xff]
    %v97 = vld [vmem:[%s2 + $0x18] sm:$0xff]
    %v98 = vld [vmem:[%s2 + $0x20] sm:$0xff]
    %v99 = vld [vmem:[%s2 + $0x28] sm:$0xff]
    %v100 = vld [vmem:[%s2 + $0x30] sm:$0xff]
    %v101 = vld [vmem:[%s2 + $0x38] sm:$0xff]
    %v102 = vld [vmem:[%s2 + $0x40] sm:$0xff]
    %v103 = vld [vmem:[%s2 + $0x48] sm:$0xff]
    %v104 = vld [vmem:[%s2 + $0x50] sm:$0xff]
    %v105 = vld [vmem:[%s2 + $0x58] sm:$0xff]
    %v106 = vld [vmem:[%s2 + $0x60] sm:$0xff]
    %v107 = vld [vmem:[%s2 + $0x68] sm:$0xff]
    %v108 = vld [vmem:[%s2 + $0x70] sm:$0xff]
    %v109 = vld [vmem:[%s2 + $0x78] sm:$0xff]
    %v110 = vld [vmem:[%s2 + $0x80] sm:$0xff]
    %v111 = vld [vmem:[%s2 + $0x88] sm:$0xff]
    %v112 = vld [vmem:[%s2 + $0x90] sm:$0xff]
    %v113 = vld [vmem:[%s2 + $0x98] sm:$0xff]
    %v114 = vld [vmem:[%s2 + $0xa0] sm:$0xff]
    %v115 = vld [vmem:[%s2 + $0xa8] sm:$0xff]
    %v116 = vld [vmem:[%s2 + $0xb0] sm:$0xff]
    %v117 = vld [vmem:[%s2 + $0xb8] sm:$0xff]
    %v118 = vld [vmem:[%s2 + $0xc0] sm:$0xff]
    %v119 = vld [vmem:[%s2 + $0xc8] sm:$0xff]
    %v120 = vld [vmem:[%s2 + $0xd0] sm:$0xff]
    %v121 = vperm.slane %v118, 0
    %v122 = vperm.slane %v119, 0
    %v124 = vsel %vm70, %v92, 0
    %126 = vmatpush.msra.mxu0 0.0
    %127 = vmatpush.msra.mxu0 0.0
    %128 = vmatpush.msra.mxu0 0.0
    %129 = vmatpush.msra.mxu0 0.0
    %130 = vmatpush.msra.mxu0 0.0
    %131 = vmatpush.msra.mxu0 0.0
    %132 = vmatpush.msra.mxu0 0.0
    %133 = vmatpush.msra.mxu0 0.0
    %134 = vmatpush.msra.mxu0 %v115
    %135 = vmatpush.msra.mxu0 %v112
    %136 = vmatpush.msra.mxu0 %v109
    %137 = vmatpush.msra.mxu0 %v106
    %138 = vmatpush.msra.mxu0 %v103
    %139 = vmatpush.msra.mxu0 %v100
    %140 = vmatpush.msra.mxu0 %v97
    %141 = vmatpush.msra.mxu0 %v94
    %142 = vmatmul.f32.gmra.mxu0 %v124
    %v143 = vpop.f32.mrf.mxu0
    %v144 = vadd.f32 %v121, %v143
    %145 = vdwg.mxu0
    %146 = vmatpush.msra.mxu0 0.0
    %147 = vmatpush.msra.mxu0 0.0
    %148 = vmatpush.msra.mxu0 0.0
    %149 = vmatpush.msra.mxu0 0.0
    %150 = vmatpush.msra.mxu0 0.0
    %151 = vmatpush.msra.mxu0 0.0
    %152 = vmatpush.msra.mxu0 0.0
    %153 = vmatpush.msra.mxu0 0.0
    %154 = vmatpush.msra.mxu0 %v116
    %155 = vmatpush.msra.mxu0 %v113
    %156 = vmatpush.msra.mxu0 %v110
    %157 = vmatpush.msra.mxu0 %v107
    %158 = vmatpush.msra.mxu0 %v104
    %159 = vmatpush.msra.mxu0 %v101
    %160 = vmatpush.msra.mxu0 %v98
    %161 = vmatpush.msra.mxu0 %v95
    %162 = vmatmul.f32.gmra.mxu0 %v124
    %v163 = vpop.f32.mrf.mxu0
    %v164 = vadd.f32 %v122, %v163
    %165 = vdwg.mxu0
    %vm166 = vcmask 64512
    %v168 = vsel %vm166, %v50, 0
    %170 = vmatpush.msra.mxu0 0.0
    %171 = vmatpush.msra.mxu0 0.0
    %172 = vmatpush.msra.mxu0 0.0
    %173 = vmatpush.msra.mxu0 0.0
    %174 = vmatpush.msra.mxu0 0.0
    %175 = vmatpush.msra.mxu0 0.0
    %176 = vmatpush.msra.mxu0 0.0
    %177 = vmatpush.msra.mxu0 0.0
    %178 = vmatpush.msra.mxu0 0.0
    %179 = vmatpush.msra.mxu0 0.0
    %180 = vmatpush.msra.mxu0 0.0
    %181 = vmatpush.msra.mxu0 0.0
    %182 = vmatpush.msra.mxu0 0.0
    %183 = vmatpush.msra.mxu0 0.0
    %184 = vmatpush.msra.mxu0 0.0
    %185 = vmatpush.msra.mxu0 %v144
    %186 = vmatmul.f32.gmra.mxu0 %v168
    %v187 = vpop.f32.mrf.mxu0
    %v188 = vadd.f32 0.0, %v187
    %189 = vdwg.mxu0
    %190 = vmatpush.msra.mxu0 0.0
    %191 = vmatpush.msra.mxu0 0.0
    %192 = vmatpush.msra.mxu0 0.0
    %193 = vmatpush.msra.mxu0 0.0
    %194 = vmatpush.msra.mxu0 0.0
    %195 = vmatpush.msra.mxu0 0.0
    %196 = vmatpush.msra.mxu0 0.0
    %197 = vmatpush.msra.mxu0 0.0
    %198 = vmatpush.msra.mxu0 0.0
    %199 = vmatpush.msra.mxu0 0.0
    %200 = vmatpush.msra.mxu0 0.0
    %201 = vmatpush.msra.mxu0 0.0
    %202 = vmatpush.msra.mxu0 0.0
    %203 = vmatpush.msra.mxu0 0.0
    %204 = vmatpush.msra.mxu0 0.0
    %205 = vmatpush.msra.mxu0 %v164
    %206 = vmatmul.f32.gmra.mxu0 %v168
    %v207 = vpop.f32.mrf.mxu0
    %v208 = vadd.f32 0.0, %v207
    %209 = vdwg.mxu0
    %211 = vrot.lane.b32.xlu0 %v144, 64
    %v212 = vpop.permute.xlu0 %211
    %v214 = vmul.f32 %v144, %v212
    %216 = vrot.lane.b32.xlu0 %v188, 64
    %v217 = vpop.permute.xlu0 %216
    %v219 = vmul.f32 %v144, %v217
    %v220 = vmul.f32 %v214, %v27
    %v221 = vsel %vm70, %v220, 0.0
    %222 = vadd.xlane.f32.xlu0 %v221
    %v223 = vpop.xlane.xlu0 %222
    %v224 = vmul.f32 %v219, %v27
    %v225 = vsel %vm70, %v224, 0.0
    %226 = vadd.xlane.f32.xlu0 %v225
    %v227 = vpop.xlane.xlu0 %226
    %v228 = vmax.f32 %v223, %v227
    %v229 = vsub.f32 %v223, %v228
    %v230 = vmul.f32 %v229, 1.442695
    %v231 = vpow.pop %v230
    %v232 = vsub.f32 %v227, %v228
    %v233 = vmul.f32 %v232, 1.442695
    %v234 = vpow.pop %v233
    %v235 = vadd.f32 %v231, %v234
    %v236 = vrcp.pop %v235
    %v237 = vmul.f32 %v235, %v236
    %v238 = vsub.f32 1.0, %v237
    %v239 = vmul.f32 %v236, %v238
    %v240 = vadd.f32 %v236, %v239
    %vm241 = vweird.f32 %v235
    %vm242 = vweird.f32 %v236
    %vm243 = vmor %vm241, %vm242
    %v244 = vsel %vm243, %v236, %v240
    %v245 = vand.u32 2147483647, %v235
    %vm246 = vcmp.eq.f32.partialorder %v245, 8.507059e+37
    %v247 = vand.u32 %v235, 2147483648
    %v248 = vor.u32 1.1754944e-38, %v247
    %v249 = vsel %vm246, %v248, %v244
    %v250 = vmul.f32 1.0, %v249
    %v251 = vmul.f32 %v231, %v250
    %v252 = vmul.f32 %v251, %v27
    %v253 = vadd.f32 %v252, 0.0
    %v254 = vmul.f32 %v234, %v250
    %v255 = vmul.f32 %v254, %v27
    %v256 = vadd.f32 %v255, 0.0
    %v257 = vmul.f32 %v214, %v32
    %v258 = vsel %vm70, %v257, 0.0
    %259 = vadd.xlane.f32.xlu0 %v258
    %v260 = vpop.xlane.xlu0 %259
    %v261 = vmul.f32 %v219, %v32
    %v262 = vsel %vm70, %v261, 0.0
    %263 = vadd.xlane.f32.xlu0 %v262
    %v264 = vpop.xlane.xlu0 %263
    %v265 = vmax.f32 %v260, %v264
    %v266 = vsub.f32 %v260, %v265
    %v267 = vmul.f32 %v266, 1.442695
    %v268 = vpow.pop %v267
    %v269 = vsub.f32 %v264, %v265
    %v270 = vmul.f32 %v269, 1.442695
    %v271 = vpow.pop %v270
    %v272 = vadd.f32 %v268, %v271
    %v273 = vrcp.pop %v272
    %v274 = vmul.f32 %v272, %v273
    %v275 = vsub.f32 1.0, %v274
    %v276 = vmul.f32 %v273, %v275
    %v277 = vadd.f32 %v273, %v276
    %vm278 = vweird.f32 %v272
    %vm279 = vweird.f32 %v273
    %vm280 = vmor %vm278, %vm279
    %v281 = vsel %vm280, %v273, %v277
    %v282 = vand.u32 2147483647, %v272
    %vm283 = vcmp.eq.f32.partialorder %v282, 8.507059e+37
    %v284 = vand.u32 %v272, 2147483648
    %v285 = vor.u32 1.1754944e-38, %v284
    %v286 = vsel %vm283, %v285, %v281
    %v287 = vmul.f32 1.0, %v286
    %v288 = vmul.f32 %v268, %v287
    %v289 = vmul.f32 %v288, %v32
    %v290 = vadd.f32 %v253, %v289
    %v291 = vmul.f32 %v271, %v287
    %v292 = vmul.f32 %v291, %v32
    %v293 = vadd.f32 %v256, %v292
    %v294 = vmul.f32 %v290, %v164
    %v295 = vmul.f32 %v293, %v208
    %v296 = vadd.f32 %v294, %v295
    %v297 = vperm.slane %v120, 0
    %v299 = vsel %vm70, %v296, 0
    %301 = vmatpush.msra.mxu0 0.0
    %302 = vmatpush.msra.mxu0 0.0
    %303 = vmatpush.msra.mxu0 0.0
    %304 = vmatpush.msra.mxu0 0.0
    %305 = vmatpush.msra.mxu0 0.0
    %306 = vmatpush.msra.mxu0 0.0
    %307 = vmatpush.msra.mxu0 0.0
    %308 = vmatpush.msra.mxu0 0.0
    %309 = vmatpush.msra.mxu0 %v117
    %310 = vmatpush.msra.mxu0 %v114
    %311 = vmatpush.msra.mxu0 %v111
    %312 = vmatpush.msra.mxu0 %v108
    %313 = vmatpush.msra.mxu0 %v105
    %314 = vmatpush.msra.mxu0 %v102
    %315 = vmatpush.msra.mxu0 %v99
    %316 = vmatpush.msra.mxu0 %v96
    %317 = vmatmul.f32.gmra.mxu0 %v299
    %v318 = vpop.f32.mrf.mxu0
    %v319 = vadd.f32 %v297, %v318
    %320 = vdwg.mxu0
    %v321 = vadd.f32 %v92, %v319
    %v322 = vsel %vm70, %v321, 0.0
    %323 = vadd.xlane.f32.xlu0 %v322
    %v324 = vpop.xlane.xlu0 %323
    %v325 = vrcp.pop 64.0
    %v326 = vmul.f32 64.0, %v325
    %v327 = vsub.f32 1.0, %v326
    %v328 = vmul.f32 %v325, %v327
    %v329 = vadd.f32 %v325, %v328
    %vm330 = vweird.f32 %v325
    %v331 = vsel %vm330, %v325, %v329
    %v332 = vmul.f32 %v324, %v331
    %v333 = vsub.f32 %v321, %v332
    %v334 = vmul.f32 %v333, %v333
    %v335 = vsel %vm70, %v334, 0.0
    %336 = vadd.xlane.f32.xlu0 %v335
    %v337 = vpop.xlane.xlu0 %336
    %v338 = vmul.f32 %v337, %v331
    %v339 = vadd.f32 %v338, 1e-05
    %v340 = vrsqrt.pop %v339
    %v341 = vmul.f32 %v340, %v339
    %v342 = vmul.f32 %v341, %v340
    %v343 = vmul.f32 0.5, %v342
    %v344 = vsub.f32 1.5, %v343
    %v345 = vmul.f32 %v340, %v344
    %vm346 = vweird.f32 %v339
    %vm347 = vweird.f32 %v340
    %vm348 = vmor %vm346, %vm347
    %v349 = vsel %vm348, %v340, %v345
    %v350 = vmul.f32 %v333, %v349
    %v351 = vperm.slane %v118, 1
    %v352 = vmul.f32 %v350, %v351
    %v353 = vperm.slane %v118, 2
    %v354 = vadd.f32 %v352, %v353
    %v355 = vld [vmem:[%s3] sm:$0xff]
    %v356 = vld [vmem:[%s3 + $0x8] sm:$0xff]
    %v357 = vld [vmem:[%s3 + $0x10] sm:$0xff]
    %v358 = vld [vmem:[%s3 + $0x18] sm:$0xff]
    %v359 = vld [vmem:[%s3 + $0x20] sm:$0xff]
    %v360 = vld [vmem:[%s3 + $0x28] sm:$0xff]
    %v361 = vld [vmem:[%s3 + $0x30] sm:$0xff]
    %v362 = vld [vmem:[%s3 + $0x38] sm:$0xff]
    %v363 = vld [vmem:[%s3 + $0x40] sm:$0xff]
    %v364 = vld [vmem:[%s3 + $0x48] sm:$0xff]
    %v365 = vld [vmem:[%s3 + $0x50] sm:$0xff]
    %v366 = vld [vmem:[%s3 + $0x58] sm:$0xff]
    %v367 = vld [vmem:[%s3 + $0x60] sm:$0xff]
    %v368 = vld [vmem:[%s3 + $0x68] sm:$0xff]
    %v369 = vld [vmem:[%s3 + $0x70] sm:$0xff]
    %v370 = vld [vmem:[%s3 + $0x78] sm:$0xff]
    %v371 = vld [vmem:[%s3 + $0x80] sm:$0xff]
    %v372 = vld [vmem:[%s3 + $0x88] sm:$0xff]
    %v373 = vld [vmem:[%s3 + $0x90] sm:$0xff]
    %v374 = vld [vmem:[%s3 + $0x98] sm:$0xff]
    %v375 = vld [vmem:[%s3 + $0xa0] sm:$0xff]
    %v376 = vld [vmem:[%s3 + $0xa8] sm:$0xff]
    %v377 = vld [vmem:[%s3 + $0xb0] sm:$0xff]
    %v378 = vld [vmem:[%s3 + $0xb8] sm:$0xff]
    %v379 = vld [vmem:[%s3 + $0xc0] sm:$0xff]
    %v380 = vld [vmem:[%s3 + $0xc8] sm:$0xff]
    %v381 = vld [vmem:[%s3 + $0xd0] sm:$0xff]
    %v382 = vld [vmem:[%s3 + $0xd8] sm:$0xff]
    %v383 = vld [vmem:[%s3 + $0xe0] sm:$0xff]
    %v384 = vld [vmem:[%s3 + $0xe8] sm:$0xff]
    %v385 = vld [vmem:[%s3 + $0xf0] sm:$0xff]
    %v386 = vld [vmem:[%s3 + $0xf8] sm:$0xff]
    %v387 = vld [vmem:[%s3 + $0x100] sm:$0xff]
    %v388 = vld [vmem:[%s3 + $0x108] sm:$0xff]
    %v389 = vld [vmem:[%s3 + $0x110] sm:$0xff]
    %v390 = vld [vmem:[%s3 + $0x118] sm:$0xff]
    %v391 = vld [vmem:[%s3 + $0x120] sm:$0xff]
    %v392 = vld [vmem:[%s3 + $0x128] sm:$0xff]
    %v393 = vld [vmem:[%s3 + $0x130] sm:$0xff]
    %v394 = vld [vmem:[%s3 + $0x138] sm:$0xff]
    %v395 = vld [vmem:[%s3 + $0x140] sm:$0xff]
    %v396 = vld [vmem:[%s3 + $0x148] sm:$0xff]
    %v397 = vld [vmem:[%s3 + $0x150] sm:$0xff]
    %v398 = vld [vmem:[%s3 + $0x158] sm:$0xff]
    %v399 = vld [vmem:[%s3 + $0x160] sm:$0xff]
    %v400 = vld [vmem:[%s3 + $0x168] sm:$0xff]
    %v401 = vld [vmem:[%s3 + $0x170] sm:$0xff]
    %v402 = vld [vmem:[%s3 + $0x178] sm:$0xff]
    %v403 = vld [vmem:[%s3 + $0x180] sm:$0xff]
    %v404 = vld [vmem:[%s3 + $0x188] sm:$0xff]
    %v405 = vld [vmem:[%s3 + $0x190] sm:$0xff]
    %v406 = vld [vmem:[%s3 + $0x198] sm:$0xff]
    %v407 = vld [vmem:[%s3 + $0x1a0] sm:$0xff]
    %v408 = vld [vmem:[%s3 + $0x1a8] sm:$0xff]
    %v409 = vld [vmem:[%s3 + $0x1b0] sm:$0xff]
    %v410 = vld [vmem:[%s3 + $0x1b8] sm:$0xff]
    %v411 = vld [vmem:[%s3 + $0x1c0] sm:$0xff]
    %v412 = vld [vmem:[%s3 + $0x1c8] sm:$0xff]
    %v413 = vld [vmem:[%s3 + $0x1d0] sm:$0xff]
    %v414 = vld [vmem:[%s3 + $0x1d8] sm:$0xff]
    %v415 = vld [vmem:[%s3 + $0x1e0] sm:$0xff]
    %v416 = vld [vmem:[%s3 + $0x1e8] sm:$0xff]
    %v417 = vld [vmem:[%s3 + $0x1f0] sm:$0xff]
    %v418 = vld [vmem:[%s3 + $0x1f8] sm:$0xff]
    %v419 = vld [vmem:[%s3 + $0x200] sm:$0xff]
    %v420 = vld [vmem:[%s3 + $0x208] sm:$0xff]
    %v421 = vld [vmem:[%s3 + $0x210] sm:$0xff]
    %v422 = vld [vmem:[%s3 + $0x218] sm:$0xff]
    %v423 = vld [vmem:[%s3 + $0x220] sm:$0xff]
    %v424 = vld [vmem:[%s3 + $0x228] sm:$0xff]
    %v425 = vld [vmem:[%s3 + $0x230] sm:$0xff]
    %v426 = vld [vmem:[%s3 + $0x238] sm:$0xff]
    %v427 = vld [vmem:[%s3 + $0x240] sm:$0xff]
    %v428 = vld [vmem:[%s3 + $0x248] sm:$0xff]
    %v429 = vld [vmem:[%s3 + $0x250] sm:$0xff]
    %v430 = vld [vmem:[%s3 + $0x258] sm:$0xff]
    %v431 = vld [vmem:[%s3 + $0x260] sm:$0xff]
    %v432 = vld [vmem:[%s3 + $0x268] sm:$0xff]
    %v433 = vld [vmem:[%s3 + $0x270] sm:$0xff]
    %v434 = vld [vmem:[%s3 + $0x278] sm:$0xff]
    %v435 = vld [vmem:[%s3 + $0x280] sm:$0xff]
    %v436 = vld [vmem:[%s3 + $0x288] sm:$0xff]
    %v437 = vld [vmem:[%s3 + $0x290] sm:$0xff]
    %v438 = vld [vmem:[%s3 + $0x298] sm:$0xff]
    %v439 = vld [vmem:[%s3 + $0x2a0] sm:$0xff]
    %v440 = vld [vmem:[%s3 + $0x2a8] sm:$0xff]
    %v441 = vld [vmem:[%s3 + $0x2b0] sm:$0xff]
    %v442 = vld [vmem:[%s3 + $0x2b8] sm:$0xff]
    %v443 = vld [vmem:[%s3 + $0x2c0] sm:$0xff]
    %v444 = vld [vmem:[%s3 + $0x2c8] sm:$0xff]
    %v445 = vld [vmem:[%s3 + $0x2d0] sm:$0xff]
    %v446 = vld [vmem:[%s3 + $0x2d8] sm:$0xff]
    %v447 = vld [vmem:[%s3 + $0x2e0] sm:$0xff]
    %v448 = vld [vmem:[%s3 + $0x2e8] sm:$0xff]
    %v449 = vld [vmem:[%s3 + $0x2f0] sm:$0xff]
    %v450 = vld [vmem:[%s3 + $0x2f8] sm:$0xff]
    %v451 = vld [vmem:[%s3 + $0x300] sm:$0xff]
    %v452 = vld [vmem:[%s3 + $0x308] sm:$0xff]
    %v453 = vld [vmem:[%s3 + $0x310] sm:$0xff]
    %v454 = vld [vmem:[%s3 + $0x318] sm:$0xff]
    %v455 = vld [vmem:[%s3 + $0x320] sm:$0xff]
    %v456 = vld [vmem:[%s3 + $0x328] sm:$0xff]
    %v457 = vld [vmem:[%s3 + $0x330] sm:$0xff]
    %v458 = vld [vmem:[%s3 + $0x338] sm:$0xff]
    %v459 = vld [vmem:[%s3 + $0x340] sm:$0xff]
    %v460 = vld [vmem:[%s3 + $0x348] sm:$0xff]
    %v461 = vld [vmem:[%s3 + $0x350] sm:$0xff]
    %v462 = vld [vmem:[%s3 + $0x358] sm:$0xff]
    %v463 = vld [vmem:[%s3 + $0x360] sm:$0xff]
    %v464 = vld [vmem:[%s3 + $0x368] sm:$0xff]
    %v465 = vld [vmem:[%s3 + $0x370] sm:$0xff]
    %v466 = vld [vmem:[%s3 + $0x378] sm:$0xff]
    %v467 = vld [vmem:[%s3 + $0x380] sm:$0xff]
    %v468 = vld [vmem:[%s3 + $0x388] sm:$0xff]
    %v469 = vld [vmem:[%s3 + $0x390] sm:$0xff]
    %v470 = vld [vmem:[%s3 + $0x398] sm:$0xff]
    %v471 = vld [vmem:[%s3 + $0x3a0] sm:$0xff]
    %v472 = vld [vmem:[%s3 + $0x3a8] sm:$0xff]
    %v473 = vld [vmem:[%s3 + $0x3b0] sm:$0xff]
    %v474 = vld [vmem:[%s3 + $0x3b8] sm:$0xff]
    %v475 = vld [vmem:[%s3 + $0x3c0] sm:$0xff]
    %v476 = vld [vmem:[%s3 + $0x3c8] sm:$0xff]
    %v477 = vld [vmem:[%s3 + $0x3d0] sm:$0xff]
    %v478 = vld [vmem:[%s3 + $0x3d8] sm:$0xff]
    %v479 = vld [vmem:[%s3 + $0x3e0] sm:$0xff]
    %v480 = vld [vmem:[%s3 + $0x3e8] sm:$0xff]
    %v481 = vld [vmem:[%s3 + $0x3f0] sm:$0xff]
    %v482 = vld [vmem:[%s3 + $0x3f8] sm:$0xff]
    %s483 = scalar_lea.vmem %s3, 1024
    %v484 = vld [vmem:[%s483] ss:$8 sm:$0xf]
    %v485 = vld [vmem:[%s483] ss:$8 sm:$0xf0]
    %v486 = vor.u32 %v484, %v485
    %s487 = scalar_lea.vmem %s3, 1088
    %v488 = vld [vmem:[%s487] ss:$8 sm:$0xf]
    %v489 = vld [vmem:[%s487] ss:$8 sm:$0xf0]
    %v490 = vor.u32 %v488, %v489
    %v491 = vld [vmem:[%s4] sm:$0xff]
    %v492 = vld [vmem:[%s4 + $0x8] sm:$0xff]
    %v493 = vld [vmem:[%s4 + $0x10] sm:$0xff]
    %v494 = vld [vmem:[%s4 + $0x18] sm:$0xff]
    %v495 = vld [vmem:[%s4 + $0x20] sm:$0xff]
    %v496 = vld [vmem:[%s4 + $0x28] sm:$0xff]
    %v497 = vld [vmem:[%s4 + $0x30] sm:$0xff]
    %v498 = vld [vmem:[%s4 + $0x38] sm:$0xff]
    %v499 = vld [vmem:[%s4 + $0x40] sm:$0xff]
    %v500 = vld [vmem:[%s4 + $0x48] sm:$0xff]
    %v501 = vld [vmem:[%s4 + $0x50] sm:$0xff]
    %v502 = vld [vmem:[%s4 + $0x58] sm:$0xff]
    %v503 = vld [vmem:[%s4 + $0x60] sm:$0xff]
    %v504 = vld [vmem:[%s4 + $0x68] sm:$0xff]
    %v505 = vld [vmem:[%s4 + $0x70] sm:$0xff]
    %v506 = vld [vmem:[%s4 + $0x78] sm:$0xff]
    %v507 = vld [vmem:[%s4 + $0x80] sm:$0xff]
    %v508 = vld [vmem:[%s4 + $0x88] sm:$0xff]
    %v509 = vld [vmem:[%s4 + $0x90] sm:$0xff]
    %v510 = vld [vmem:[%s4 + $0x98] sm:$0xff]
    %v511 = vld [vmem:[%s4 + $0xa0] sm:$0xff]
    %v512 = vld [vmem:[%s4 + $0xa8] sm:$0xff]
    %v513 = vld [vmem:[%s4 + $0xb0] sm:$0xff]
    %v514 = vld [vmem:[%s4 + $0xb8] sm:$0xff]
    %v515 = vld [vmem:[%s4 + $0xc0] sm:$0xff]
    %v516 = vld [vmem:[%s4 + $0xc8] sm:$0xff]
    %v517 = vld [vmem:[%s4 + $0xd0] sm:$0xff]
    %v518 = vld [vmem:[%s4 + $0xd8] sm:$0xff]
    %v519 = vld [vmem:[%s4 + $0xe0] sm:$0xff]
    %v520 = vld [vmem:[%s4 + $0xe8] sm:$0xff]
    %v521 = vld [vmem:[%s4 + $0xf0] sm:$0xff]
    %v522 = vld [vmem:[%s4 + $0xf8] sm:$0xff]
    %v523 = vld [vmem:[%s4 + $0x100] sm:$0xff]
    %v524 = vld [vmem:[%s4 + $0x108] sm:$0xff]
    %v525 = vld [vmem:[%s4 + $0x110] sm:$0xff]
    %v526 = vld [vmem:[%s4 + $0x118] sm:$0xff]
    %v527 = vld [vmem:[%s4 + $0x120] sm:$0xff]
    %v528 = vld [vmem:[%s4 + $0x128] sm:$0xff]
    %v529 = vld [vmem:[%s4 + $0x130] sm:$0xff]
    %v530 = vld [vmem:[%s4 + $0x138] sm:$0xff]
    %v531 = vld [vmem:[%s4 + $0x140] sm:$0xff]
    %v532 = vld [vmem:[%s4 + $0x148] sm:$0xff]
    %v533 = vld [vmem:[%s4 + $0x150] sm:$0xff]
    %v534 = vld [vmem:[%s4 + $0x158] sm:$0xff]
    %v535 = vld [vmem:[%s4 + $0x160] sm:$0xff]
    %v536 = vld [vmem:[%s4 + $0x168] sm:$0xff]
    %v537 = vld [vmem:[%s4 + $0x170] sm:$0xff]
    %v538 = vld [vmem:[%s4 + $0x178] sm:$0xff]
    %v539 = vld [vmem:[%s4 + $0x180] sm:$0xff]
    %v540 = vld [vmem:[%s4 + $0x188] sm:$0xff]
    %v541 = vld [vmem:[%s4 + $0x190] sm:$0xff]
    %v542 = vld [vmem:[%s4 + $0x198] sm:$0xff]
    %v543 = vld [vmem:[%s4 + $0x1a0] sm:$0xff]
    %v544 = vld [vmem:[%s4 + $0x1a8] sm:$0xff]
    %v545 = vld [vmem:[%s4 + $0x1b0] sm:$0xff]
    %v546 = vld [vmem:[%s4 + $0x1b8] sm:$0xff]
    %v547 = vld [vmem:[%s4 + $0x1c0] sm:$0xff]
    %v548 = vld [vmem:[%s4 + $0x1c8] sm:$0xff]
    %v549 = vld [vmem:[%s4 + $0x1d0] sm:$0xff]
    %v550 = vld [vmem:[%s4 + $0x1d8] sm:$0xff]
    %v551 = vld [vmem:[%s4 + $0x1e0] sm:$0xff]
    %v552 = vld [vmem:[%s4 + $0x1e8] sm:$0xff]
    %v553 = vld [vmem:[%s4 + $0x1f0] sm:$0xff]
    %v554 = vld [vmem:[%s4 + $0x1f8] sm:$0xff]
    %v555 = vld [vmem:[%s4 + $0x200] sm:$0xff]
    %v556 = vld [vmem:[%s4 + $0x208] sm:$0xff]
    %v557 = vld [vmem:[%s4 + $0x210] sm:$0xff]
    %v558 = vld [vmem:[%s4 + $0x218] sm:$0xff]
    %v559 = vld [vmem:[%s4 + $0x220] sm:$0xff]
    %v560 = vld [vmem:[%s4 + $0x228] sm:$0xff]
    %v561 = vld [vmem:[%s4 + $0x230] sm:$0xff]
    %v562 = vld [vmem:[%s4 + $0x238] sm:$0xff]
    %v563 = vld [vmem:[%s4 + $0x240] sm:$0xff]
    %v564 = vld [vmem:[%s4 + $0x248] sm:$0xff]
    %v565 = vld [vmem:[%s4 + $0x250] sm:$0xff]
    %v566 = vld [vmem:[%s4 + $0x258] sm:$0xff]
    %v567 = vld [vmem:[%s4 + $0x260] sm:$0xff]
    %v568 = vld [vmem:[%s4 + $0x268] sm:$0xff]
    %v569 = vld [vmem:[%s4 + $0x270] sm:$0xff]
    %v570 = vld [vmem:[%s4 + $0x278] sm:$0xff]
    %v571 = vld [vmem:[%s4 + $0x280] sm:$0xff]
    %v572 = vld [vmem:[%s4 + $0x288] sm:$0xff]
    %v573 = vld [vmem:[%s4 + $0x290] sm:$0xff]
    %v574 = vld [vmem:[%s4 + $0x298] sm:$0xff]
    %v575 = vld [vmem:[%s4 + $0x2a0] sm:$0xff]
    %v576 = vld [vmem:[%s4 + $0x2a8] sm:$0xff]
    %v577 = vld [vmem:[%s4 + $0x2b0] sm:$0xff]
    %v578 = vld [vmem:[%s4 + $0x2b8] sm:$0xff]
    %v579 = vld [vmem:[%s4 + $0x2c0] sm:$0xff]
    %v580 = vld [vmem:[%s4 + $0x2c8] sm:$0xff]
    %v581 = vld [vmem:[%s4 + $0x2d0] sm:$0xff]
    %v582 = vld [vmem:[%s4 + $0x2d8] sm:$0xff]
    %v583 = vld [vmem:[%s4 + $0x2e0] sm:$0xff]
    %v584 = vld [vmem:[%s4 + $0x2e8] sm:$0xff]
    %v585 = vld [vmem:[%s4 + $0x2f0] sm:$0xff]
    %v586 = vld [vmem:[%s4 + $0x2f8] sm:$0xff]
    %v587 = vld [vmem:[%s4 + $0x300] sm:$0xff]
    %v588 = vld [vmem:[%s4 + $0x308] sm:$0xff]
    %v589 = vld [vmem:[%s4 + $0x310] sm:$0xff]
    %v590 = vld [vmem:[%s4 + $0x318] sm:$0xff]
    %v591 = vld [vmem:[%s4 + $0x320] sm:$0xff]
    %v592 = vld [vmem:[%s4 + $0x328] sm:$0xff]
    %v593 = vld [vmem:[%s4 + $0x330] sm:$0xff]
    %v594 = vld [vmem:[%s4 + $0x338] sm:$0xff]
    %v595 = vld [vmem:[%s4 + $0x340] sm:$0xff]
    %v596 = vld [vmem:[%s4 + $0x348] sm:$0xff]
    %v597 = vld [vmem:[%s4 + $0x350] sm:$0xff]
    %v598 = vld [vmem:[%s4 + $0x358] sm:$0xff]
    %v599 = vld [vmem:[%s4 + $0x360] sm:$0xff]
    %v600 = vld [vmem:[%s4 + $0x368] sm:$0xff]
    %v601 = vld [vmem:[%s4 + $0x370] sm:$0xff]
    %v602 = vld [vmem:[%s4 + $0x378] sm:$0xff]
    %v603 = vld [vmem:[%s4 + $0x380] sm:$0xff]
    %v604 = vld [vmem:[%s4 + $0x388] sm:$0xff]
    %v605 = vld [vmem:[%s4 + $0x390] sm:$0xff]
    %v606 = vld [vmem:[%s4 + $0x398] sm:$0xff]
    %v607 = vld [vmem:[%s4 + $0x3a0] sm:$0xff]
    %v608 = vld [vmem:[%s4 + $0x3a8] sm:$0xff]
    %v609 = vld [vmem:[%s4 + $0x3b0] sm:$0xff]
    %v610 = vld [vmem:[%s4 + $0x3b8] sm:$0xff]
    %v611 = vld [vmem:[%s4 + $0x3c0] sm:$0xff]
    %v612 = vld [vmem:[%s4 + $0x3c8] sm:$0xff]
    %v613 = vld [vmem:[%s4 + $0x3d0] sm:$0xff]
    %v614 = vld [vmem:[%s4 + $0x3d8] sm:$0xff]
    %v615 = vld [vmem:[%s4 + $0x3e0] sm:$0xff]
    %v616 = vld [vmem:[%s4 + $0x3e8] sm:$0xff]
    %v617 = vld [vmem:[%s4 + $0x3f0] sm:$0xff]
    %v618 = vld [vmem:[%s4 + $0x3f8] sm:$0xff]
    %v619 = vld [vmem:[%s4 + $0x400] sm:$0xff]
    %v620 = vld [vmem:[%s4 + $0x408] sm:$0xff]
    %v621 = vld [vmem:[%s4 + $0x410] sm:$0xff]
    %v622 = vld [vmem:[%s4 + $0x418] sm:$0xff]
    %v623 = vld [vmem:[%s4 + $0x420] sm:$0xff]
    %v624 = vld [vmem:[%s4 + $0x428] sm:$0xff]
    %v625 = vld [vmem:[%s4 + $0x430] sm:$0xff]
    %v626 = vld [vmem:[%s4 + $0x438] sm:$0xff]
    %v627 = vld [vmem:[%s4 + $0x440] sm:$0xff]
    %v628 = vld [vmem:[%s4 + $0x448] sm:$0xff]
    %v629 = vld [vmem:[%s4 + $0x450] sm:$0xff]
    %v630 = vld [vmem:[%s4 + $0x458] sm:$0xff]
    %v631 = vld [vmem:[%s4 + $0x460] sm:$0xff]
    %v632 = vld [vmem:[%s4 + $0x468] sm:$0xff]
    %v633 = vld [vmem:[%s4 + $0x470] sm:$0xff]
    %v634 = vld [vmem:[%s4 + $0x478] sm:$0xff]
    %v635 = vld [vmem:[%s4 + $0x480] sm:$0xff]
    %v636 = vld [vmem:[%s4 + $0x488] sm:$0xff]
    %v637 = vld [vmem:[%s4 + $0x490] sm:$0xff]
    %v638 = vld [vmem:[%s4 + $0x498] sm:$0xff]
    %v639 = vld [vmem:[%s4 + $0x4a0] sm:$0xff]
    %v640 = vld [vmem:[%s4 + $0x4a8] sm:$0xff]
    %v641 = vld [vmem:[%s4 + $0x4b0] sm:$0xff]
    %v642 = vld [vmem:[%s4 + $0x4b8] sm:$0xff]
    %v643 = vld [vmem:[%s4 + $0x4c0] sm:$0xff]
    %v644 = vld [vmem:[%s4 + $0x4c8] sm:$0xff]
    %v645 = vld [vmem:[%s4 + $0x4d0] sm:$0xff]
    %v646 = vld [vmem:[%s4 + $0x4d8] sm:$0xff]
    %v647 = vld [vmem:[%s4 + $0x4e0] sm:$0xff]
    %v648 = vld [vmem:[%s4 + $0x4e8] sm:$0xff]
    %v649 = vld [vmem:[%s4 + $0x4f0] sm:$0xff]
    %v650 = vld [vmem:[%s4 + $0x4f8] sm:$0xff]
    %v651 = vld [vmem:[%s4 + $0x500] sm:$0xff]
    %v652 = vld [vmem:[%s4 + $0x508] sm:$0xff]
    %v653 = vld [vmem:[%s4 + $0x510] sm:$0xff]
    %v654 = vld [vmem:[%s4 + $0x518] sm:$0xff]
    %v655 = vld [vmem:[%s4 + $0x520] sm:$0xff]
    %v656 = vld [vmem:[%s4 + $0x528] sm:$0xff]
    %v657 = vld [vmem:[%s4 + $0x530] sm:$0xff]
    %v658 = vld [vmem:[%s4 + $0x538] sm:$0xff]
    %v659 = vld [vmem:[%s4 + $0x540] sm:$0xff]
    %v660 = vld [vmem:[%s4 + $0x548] sm:$0xff]
    %v661 = vld [vmem:[%s4 + $0x550] sm:$0xff]
    %v662 = vld [vmem:[%s4 + $0x558] sm:$0xff]
    %v663 = vld [vmem:[%s4 + $0x560] sm:$0xff]
    %v664 = vld [vmem:[%s4 + $0x568] sm:$0xff]
    %v665 = vld [vmem:[%s4 + $0x570] sm:$0xff]
    %v666 = vld [vmem:[%s4 + $0x578] sm:$0xff]
    %v667 = vld [vmem:[%s4 + $0x580] sm:$0xff]
    %v668 = vld [vmem:[%s4 + $0x588] sm:$0xff]
    %v669 = vld [vmem:[%s4 + $0x590] sm:$0xff]
    %v670 = vld [vmem:[%s4 + $0x598] sm:$0xff]
    %v671 = vld [vmem:[%s4 + $0x5a0] sm:$0xff]
    %v672 = vld [vmem:[%s4 + $0x5a8] sm:$0xff]
    %v673 = vld [vmem:[%s4 + $0x5b0] sm:$0xff]
    %v674 = vld [vmem:[%s4 + $0x5b8] sm:$0xff]
    %v675 = vld [vmem:[%s4 + $0x5c0] sm:$0xff]
    %v676 = vld [vmem:[%s4 + $0x5c8] sm:$0xff]
    %v677 = vld [vmem:[%s4 + $0x5d0] sm:$0xff]
    %v678 = vld [vmem:[%s4 + $0x5d8] sm:$0xff]
    %v679 = vld [vmem:[%s4 + $0x5e0] sm:$0xff]
    %v680 = vld [vmem:[%s4 + $0x5e8] sm:$0xff]
    %v681 = vld [vmem:[%s4 + $0x5f0] sm:$0xff]
    %v682 = vld [vmem:[%s4 + $0x5f8] sm:$0xff]
    %v683 = vld [vmem:[%s4 + $0x600] sm:$0xff]
    %v684 = vld [vmem:[%s4 + $0x608] sm:$0xff]
    %v685 = vld [vmem:[%s4 + $0x610] sm:$0xff]
    %v686 = vld [vmem:[%s4 + $0x618] sm:$0xff]
    %v687 = vld [vmem:[%s4 + $0x620] sm:$0xff]
    %v688 = vld [vmem:[%s4 + $0x628] sm:$0xff]
    %v689 = vld [vmem:[%s4 + $0x630] sm:$0xff]
    %v690 = vld [vmem:[%s4 + $0x638] sm:$0xff]
    %v691 = vld [vmem:[%s4 + $0x640] sm:$0xff]
    %v692 = vld [vmem:[%s4 + $0x648] sm:$0xff]
    %v693 = vld [vmem:[%s4 + $0x650] sm:$0xff]
    %v694 = vld [vmem:[%s4 + $0x658] sm:$0xff]
    %v695 = vld [vmem:[%s4 + $0x660] sm:$0xff]
    %v696 = vld [vmem:[%s4 + $0x668] sm:$0xff]
    %v697 = vld [vmem:[%s4 + $0x670] sm:$0xff]
    %v698 = vld [vmem:[%s4 + $0x678] sm:$0xff]
    %v699 = vld [vmem:[%s4 + $0x680] sm:$0xff]
    %v700 = vld [vmem:[%s4 + $0x688] sm:$0xff]
    %v701 = vld [vmem:[%s4 + $0x690] sm:$0xff]
    %v702 = vld [vmem:[%s4 + $0x698] sm:$0xff]
    %v703 = vld [vmem:[%s4 + $0x6a0] sm:$0xff]
    %v704 = vld [vmem:[%s4 + $0x6a8] sm:$0xff]
    %v705 = vld [vmem:[%s4 + $0x6b0] sm:$0xff]
    %v706 = vld [vmem:[%s4 + $0x6b8] sm:$0xff]
    %v707 = vld [vmem:[%s4 + $0x6c0] sm:$0xff]
    %v708 = vld [vmem:[%s4 + $0x6c8] sm:$0xff]
    %v709 = vld [vmem:[%s4 + $0x6d0] sm:$0xff]
    %v710 = vld [vmem:[%s4 + $0x6d8] sm:$0xff]
    %v711 = vld [vmem:[%s4 + $0x6e0] sm:$0xff]
    %v712 = vld [vmem:[%s4 + $0x6e8] sm:$0xff]
    %v713 = vld [vmem:[%s4 + $0x6f0] sm:$0xff]
    %v714 = vld [vmem:[%s4 + $0x6f8] sm:$0xff]
    %v715 = vld [vmem:[%s4 + $0x700] sm:$0xff]
    %v716 = vld [vmem:[%s4 + $0x708] sm:$0xff]
    %v717 = vld [vmem:[%s4 + $0x710] sm:$0xff]
    %v718 = vld [vmem:[%s4 + $0x718] sm:$0xff]
    %v719 = vld [vmem:[%s4 + $0x720] sm:$0xff]
    %v720 = vld [vmem:[%s4 + $0x728] sm:$0xff]
    %v721 = vld [vmem:[%s4 + $0x730] sm:$0xff]
    %v722 = vld [vmem:[%s4 + $0x738] sm:$0xff]
    %v723 = vld [vmem:[%s4 + $0x740] sm:$0xff]
    %v724 = vld [vmem:[%s4 + $0x748] sm:$0xff]
    %v725 = vld [vmem:[%s4 + $0x750] sm:$0xff]
    %v726 = vld [vmem:[%s4 + $0x758] sm:$0xff]
    %v727 = vld [vmem:[%s4 + $0x760] sm:$0xff]
    %v728 = vld [vmem:[%s4 + $0x768] sm:$0xff]
    %v729 = vld [vmem:[%s4 + $0x770] sm:$0xff]
    %v730 = vld [vmem:[%s4 + $0x778] sm:$0xff]
    %v731 = vld [vmem:[%s4 + $0x780] sm:$0xff]
    %v732 = vld [vmem:[%s4 + $0x788] sm:$0xff]
    %v733 = vld [vmem:[%s4 + $0x790] sm:$0xff]
    %v734 = vld [vmem:[%s4 + $0x798] sm:$0xff]
    %v735 = vld [vmem:[%s4 + $0x7a0] sm:$0xff]
    %v736 = vld [vmem:[%s4 + $0x7a8] sm:$0xff]
    %v737 = vld [vmem:[%s4 + $0x7b0] sm:$0xff]
    %v738 = vld [vmem:[%s4 + $0x7b8] sm:$0xff]
    %v739 = vld [vmem:[%s4 + $0x7c0] sm:$0xff]
    %v740 = vld [vmem:[%s4 + $0x7c8] sm:$0xff]
    %v741 = vld [vmem:[%s4 + $0x7d0] sm:$0xff]
    %v742 = vld [vmem:[%s4 + $0x7d8] sm:$0xff]
    %v743 = vld [vmem:[%s4 + $0x7e0] sm:$0xff]
    %v744 = vld [vmem:[%s4 + $0x7e8] sm:$0xff]
    %v745 = vld [vmem:[%s4 + $0x7f0] sm:$0xff]
    %v746 = vld [vmem:[%s4 + $0x7f8] sm:$0xff]
    %v749 = vperm.slane %v486, 0
    %v750 = vperm.slane %v486, 1
    %v751 = vperm.slane %v486, 2
    %v752 = vperm.slane %v486, 3
    %v753 = vperm.slane %v486, 4
    %v754 = vperm.slane %v486, 5
    %v755 = vperm.slane %v486, 6
    %v756 = vperm.slane %v486, 7
    %v757 = vperm.slane %v490, 0
    %v758 = vperm.slane %v490, 1
    %v759 = vperm.slane %v490, 2
    %v760 = vperm.slane %v490, 3
    %v761 = vperm.slane %v490, 4
    %v762 = vperm.slane %v490, 5
    %v763 = vperm.slane %v490, 6
    %v764 = vperm.slane %v490, 7
    %v782 = vsel %vm70, %v354, 0
    %784 = vmatpush.msra.mxu0 0.0
    %785 = vmatpush.msra.mxu0 0.0
    %786 = vmatpush.msra.mxu0 0.0
    %787 = vmatpush.msra.mxu0 0.0
    %788 = vmatpush.msra.mxu0 0.0
    %789 = vmatpush.msra.mxu0 0.0
    %790 = vmatpush.msra.mxu0 0.0
    %791 = vmatpush.msra.mxu0 0.0
    %792 = vmatpush.msra.mxu0 %v467
    %793 = vmatpush.msra.mxu0 %v451
    %794 = vmatpush.msra.mxu0 %v435
    %795 = vmatpush.msra.mxu0 %v419
    %796 = vmatpush.msra.mxu0 %v403
    %797 = vmatpush.msra.mxu0 %v387
    %798 = vmatpush.msra.mxu0 %v371
    %799 = vmatpush.msra.mxu0 %v355
    %800 = vmatmul.f32.gmra.mxu0 %v782
    %v801 = vpop.f32.mrf.mxu0
    %v802 = vadd.f32 %v749, %v801
    %803 = vdwg.mxu0
    %804 = vmatpush.msra.mxu0 0.0
    %805 = vmatpush.msra.mxu0 0.0
    %806 = vmatpush.msra.mxu0 0.0
    %807 = vmatpush.msra.mxu0 0.0
    %808 = vmatpush.msra.mxu0 0.0
    %809 = vmatpush.msra.mxu0 0.0
    %810 = vmatpush.msra.mxu0 0.0
    %811 = vmatpush.msra.mxu0 0.0
    %812 = vmatpush.msra.mxu0 %v468
    %813 = vmatpush.msra.mxu0 %v452
    %814 = vmatpush.msra.mxu0 %v436
    %815 = vmatpush.msra.mxu0 %v420
    %816 = vmatpush.msra.mxu0 %v404
    %817 = vmatpush.msra.mxu0 %v388
    %818 = vmatpush.msra.mxu0 %v372
    %819 = vmatpush.msra.mxu0 %v356
    %820 = vmatmul.f32.gmra.mxu0 %v782
    %v821 = vpop.f32.mrf.mxu0
    %v822 = vadd.f32 %v750, %v821
    %823 = vdwg.mxu0
    %824 = vmatpush.msra.mxu0 0.0
    %825 = vmatpush.msra.mxu0 0.0
    %826 = vmatpush.msra.mxu0 0.0
    %827 = vmatpush.msra.mxu0 0.0
    %828 = vmatpush.msra.mxu0 0.0
    %829 = vmatpush.msra.mxu0 0.0
    %830 = vmatpush.msra.mxu0 0.0
    %831 = vmatpush.msra.mxu0 0.0
    %832 = vmatpush.msra.mxu0 %v469
    %833 = vmatpush.msra.mxu0 %v453
    %834 = vmatpush.msra.mxu0 %v437
    %835 = vmatpush.msra.mxu0 %v421
    %836 = vmatpush.msra.mxu0 %v405
    %837 = vmatpush.msra.mxu0 %v389
    %838 = vmatpush.msra.mxu0 %v373
    %839 = vmatpush.msra.mxu0 %v357
    %840 = vmatmul.f32.gmra.mxu0 %v782
    %v841 = vpop.f32.mrf.mxu0
    %v842 = vadd.f32 %v751, %v841
    %843 = vdwg.mxu0
    %844 = vmatpush.msra.mxu0 0.0
    %845 = vmatpush.msra.mxu0 0.0
    %846 = vmatpush.msra.mxu0 0.0
    %847 = vmatpush.msra.mxu0 0.0
    %848 = vmatpush.msra.mxu0 0.0
    %849 = vmatpush.msra.mxu0 0.0
    %850 = vmatpush.msra.mxu0 0.0
    %851 = vmatpush.msra.mxu0 0.0
    %852 = vmatpush.msra.mxu0 %v470
    %853 = vmatpush.msra.mxu0 %v454
    %854 = vmatpush.msra.mxu0 %v438
    %855 = vmatpush.msra.mxu0 %v422
    %856 = vmatpush.msra.mxu0 %v406
    %857 = vmatpush.msra.mxu0 %v390
    %858 = vmatpush.msra.mxu0 %v374
    %859 = vmatpush.msra.mxu0 %v358
    %860 = vmatmul.f32.gmra.mxu0 %v782
    %v861 = vpop.f32.mrf.mxu0
    %v862 = vadd.f32 %v752, %v861
    %863 = vdwg.mxu0
    %864 = vmatpush.msra.mxu0 0.0
    %865 = vmatpush.msra.mxu0 0.0
    %866 = vmatpush.msra.mxu0 0.0
    %867 = vmatpush.msra.mxu0 0.0
    %868 = vmatpush.msra.mxu0 0.0
    %869 = vmatpush.msra.mxu0 0.0
    %870 = vmatpush.msra.mxu0 0.0
    %871 = vmatpush.msra.mxu0 0.0
    %872 = vmatpush.msra.mxu0 %v471
    %873 = vmatpush.msra.mxu0 %v455
    %874 = vmatpush.msra.mxu0 %v439
    %875 = vmatpush.msra.mxu0 %v423
    %876 = vmatpush.msra.mxu0 %v407
    %877 = vmatpush.msra.mxu0 %v391
    %878 = vmatpush.msra.mxu0 %v375
    %879 = vmatpush.msra.mxu0 %v359
    %880 = vmatmul.f32.gmra.mxu0 %v782
    %v881 = vpop.f32.mrf.mxu0
    %v882 = vadd.f32 %v753, %v881
    %883 = vdwg.mxu0
    %884 = vmatpush.msra.mxu0 0.0
    %885 = vmatpush.msra.mxu0 0.0
    %886 = vmatpush.msra.mxu0 0.0
    %887 = vmatpush.msra.mxu0 0.0
    %888 = vmatpush.msra.mxu0 0.0
    %889 = vmatpush.msra.mxu0 0.0
    %890 = vmatpush.msra.mxu0 0.0
    %891 = vmatpush.msra.mxu0 0.0
    %892 = vmatpush.msra.mxu0 %v472
    %893 = vmatpush.msra.mxu0 %v456
    %894 = vmatpush.msra.mxu0 %v440
    %895 = vmatpush.msra.mxu0 %v424
    %896 = vmatpush.msra.mxu0 %v408
    %897 = vmatpush.msra.mxu0 %v392
    %898 = vmatpush.msra.mxu0 %v376
    %899 = vmatpush.msra.mxu0 %v360
    %900 = vmatmul.f32.gmra.mxu0 %v782
    %v901 = vpop.f32.mrf.mxu0
    %v902 = vadd.f32 %v754, %v901
    %903 = vdwg.mxu0
    %904 = vmatpush.msra.mxu0 0.0
    %905 = vmatpush.msra.mxu0 0.0
    %906 = vmatpush.msra.mxu0 0.0
    %907 = vmatpush.msra.mxu0 0.0
    %908 = vmatpush.msra.mxu0 0.0
    %909 = vmatpush.msra.mxu0 0.0
    %910 = vmatpush.msra.mxu0 0.0
    %911 = vmatpush.msra.mxu0 0.0
    %912 = vmatpush.msra.mxu0 %v473
    %913 = vmatpush.msra.mxu0 %v457
    %914 = vmatpush.msra.mxu0 %v441
    %915 = vmatpush.msra.mxu0 %v425
    %916 = vmatpush.msra.mxu0 %v409
    %917 = vmatpush.msra.mxu0 %v393
    %918 = vmatpush.msra.mxu0 %v377
    %919 = vmatpush.msra.mxu0 %v361
    %920 = vmatmul.f32.gmra.mxu0 %v782
    %v921 = vpop.f32.mrf.mxu0
    %v922 = vadd.f32 %v755, %v921
    %923 = vdwg.mxu0
    %924 = vmatpush.msra.mxu0 0.0
    %925 = vmatpush.msra.mxu0 0.0
    %926 = vmatpush.msra.mxu0 0.0
    %927 = vmatpush.msra.mxu0 0.0
    %928 = vmatpush.msra.mxu0 0.0
    %929 = vmatpush.msra.mxu0 0.0
    %930 = vmatpush.msra.mxu0 0.0
    %931 = vmatpush.msra.mxu0 0.0
    %932 = vmatpush.msra.mxu0 %v474
    %933 = vmatpush.msra.mxu0 %v458
    %934 = vmatpush.msra.mxu0 %v442
    %935 = vmatpush.msra.mxu0 %v426
    %936 = vmatpush.msra.mxu0 %v410
    %937 = vmatpush.msra.mxu0 %v394
    %938 = vmatpush.msra.mxu0 %v378
    %939 = vmatpush.msra.mxu0 %v362
    %940 = vmatmul.f32.gmra.mxu0 %v782
    %v941 = vpop.f32.mrf.mxu0
    %v942 = vadd.f32 %v756, %v941
    %943 = vdwg.mxu0
    %944 = vmatpush.msra.mxu0 0.0
    %945 = vmatpush.msra.mxu0 0.0
    %946 = vmatpush.msra.mxu0 0.0
    %947 = vmatpush.msra.mxu0 0.0
    %948 = vmatpush.msra.mxu0 0.0
    %949 = vmatpush.msra.mxu0 0.0
    %950 = vmatpush.msra.mxu0 0.0
    %951 = vmatpush.msra.mxu0 0.0
    %952 = vmatpush.msra.mxu0 %v475
    %953 = vmatpush.msra.mxu0 %v459
    %954 = vmatpush.msra.mxu0 %v443
    %955 = vmatpush.msra.mxu0 %v427
    %956 = vmatpush.msra.mxu0 %v411
    %957 = vmatpush.msra.mxu0 %v395
    %958 = vmatpush.msra.mxu0 %v379
    %959 = vmatpush.msra.mxu0 %v363
    %960 = vmatmul.f32.gmra.mxu0 %v782
    %v961 = vpop.f32.mrf.mxu0
    %v962 = vadd.f32 %v757, %v961
    %963 = vdwg.mxu0
    %964 = vmatpush.msra.mxu0 0.0
    %965 = vmatpush.msra.mxu0 0.0
    %966 = vmatpush.msra.mxu0 0.0
    %967 = vmatpush.msra.mxu0 0.0
    %968 = vmatpush.msra.mxu0 0.0
    %969 = vmatpush.msra.mxu0 0.0
    %970 = vmatpush.msra.mxu0 0.0
    %971 = vmatpush.msra.mxu0 0.0
    %972 = vmatpush.msra.mxu0 %v476
    %973 = vmatpush.msra.mxu0 %v460
    %974 = vmatpush.msra.mxu0 %v444
    %975 = vmatpush.msra.mxu0 %v428
    %976 = vmatpush.msra.mxu0 %v412
    %977 = vmatpush.msra.mxu0 %v396
    %978 = vmatpush.msra.mxu0 %v380
    %979 = vmatpush.msra.mxu0 %v364
    %980 = vmatmul.f32.gmra.mxu0 %v782
    %v981 = vpop.f32.mrf.mxu0
    %v982 = vadd.f32 %v758, %v981
    %983 = vdwg.mxu0
    %984 = vmatpush.msra.mxu0 0.0
    %985 = vmatpush.msra.mxu0 0.0
    %986 = vmatpush.msra.mxu0 0.0
    %987 = vmatpush.msra.mxu0 0.0
    %988 = vmatpush.msra.mxu0 0.0
    %989 = vmatpush.msra.mxu0 0.0
    %990 = vmatpush.msra.mxu0 0.0
    %991 = vmatpush.msra.mxu0 0.0
    %992 = vmatpush.msra.mxu0 %v477
    %993 = vmatpush.msra.mxu0 %v461
    %994 = vmatpush.msra.mxu0 %v445
    %995 = vmatpush.msra.mxu0 %v429
    %996 = vmatpush.msra.mxu0 %v413
    %997 = vmatpush.msra.mxu0 %v397
    %998 = vmatpush.msra.mxu0 %v381
    %999 = vmatpush.msra.mxu0 %v365
    %1000 = vmatmul.f32.gmra.mxu0 %v782
    %v1001 = vpop.f32.mrf.mxu0
    %v1002 = vadd.f32 %v759, %v1001
    %1003 = vdwg.mxu0
    %1004 = vmatpush.msra.mxu0 0.0
    %1005 = vmatpush.msra.mxu0 0.0
    %1006 = vmatpush.msra.mxu0 0.0
    %1007 = vmatpush.msra.mxu0 0.0
    %1008 = vmatpush.msra.mxu0 0.0
    %1009 = vmatpush.msra.mxu0 0.0
    %1010 = vmatpush.msra.mxu0 0.0
    %1011 = vmatpush.msra.mxu0 0.0
    %1012 = vmatpush.msra.mxu0 %v478
    %1013 = vmatpush.msra.mxu0 %v462
    %1014 = vmatpush.msra.mxu0 %v446
    %1015 = vmatpush.msra.mxu0 %v430
    %1016 = vmatpush.msra.mxu0 %v414
    %1017 = vmatpush.msra.mxu0 %v398
    %1018 = vmatpush.msra.mxu0 %v382
    %1019 = vmatpush.msra.mxu0 %v366
    %1020 = vmatmul.f32.gmra.mxu0 %v782
    %v1021 = vpop.f32.mrf.mxu0
    %v1022 = vadd.f32 %v760, %v1021
    %1023 = vdwg.mxu0
    %1024 = vmatpush.msra.mxu0 0.0
    %1025 = vmatpush.msra.mxu0 0.0
    %1026 = vmatpush.msra.mxu0 0.0
    %1027 = vmatpush.msra.mxu0 0.0
    %1028 = vmatpush.msra.mxu0 0.0
    %1029 = vmatpush.msra.mxu0 0.0
    %1030 = vmatpush.msra.mxu0 0.0
    %1031 = vmatpush.msra.mxu0 0.0
    %1032 = vmatpush.msra.mxu0 %v479
    %1033 = vmatpush.msra.mxu0 %v463
    %1034 = vmatpush.msra.mxu0 %v447
    %1035 = vmatpush.msra.mxu0 %v431
    %1036 = vmatpush.msra.mxu0 %v415
    %1037 = vmatpush.msra.mxu0 %v399
    %1038 = vmatpush.msra.mxu0 %v383
    %1039 = vmatpush.msra.mxu0 %v367
    %1040 = vmatmul.f32.gmra.mxu0 %v782
    %v1041 = vpop.f32.mrf.mxu0
    %v1042 = vadd.f32 %v761, %v1041
    %1043 = vdwg.mxu0
    %1044 = vmatpush.msra.mxu0 0.0
    %1045 = vmatpush.msra.mxu0 0.0
    %1046 = vmatpush.msra.mxu0 0.0
    %1047 = vmatpush.msra.mxu0 0.0
    %1048 = vmatpush.msra.mxu0 0.0
    %1049 = vmatpush.msra.mxu0 0.0
    %1050 = vmatpush.msra.mxu0 0.0
    %1051 = vmatpush.msra.mxu0 0.0
    %1052 = vmatpush.msra.mxu0 %v480
    %1053 = vmatpush.msra.mxu0 %v464
    %1054 = vmatpush.msra.mxu0 %v448
    %1055 = vmatpush.msra.mxu0 %v432
    %1056 = vmatpush.msra.mxu0 %v416
    %1057 = vmatpush.msra.mxu0 %v400
    %1058 = vmatpush.msra.mxu0 %v384
    %1059 = vmatpush.msra.mxu0 %v368
    %1060 = vmatmul.f32.gmra.mxu0 %v782
    %v1061 = vpop.f32.mrf.mxu0
    %v1062 = vadd.f32 %v762, %v1061
    %1063 = vdwg.mxu0
    %1064 = vmatpush.msra.mxu0 0.0
    %1065 = vmatpush.msra.mxu0 0.0
    %1066 = vmatpush.msra.mxu0 0.0
    %1067 = vmatpush.msra.mxu0 0.0
    %1068 = vmatpush.msra.mxu0 0.0
    %1069 = vmatpush.msra.mxu0 0.0
    %1070 = vmatpush.msra.mxu0 0.0
    %1071 = vmatpush.msra.mxu0 0.0
    %1072 = vmatpush.msra.mxu0 %v481
    %1073 = vmatpush.msra.mxu0 %v465
    %1074 = vmatpush.msra.mxu0 %v449
    %1075 = vmatpush.msra.mxu0 %v433
    %1076 = vmatpush.msra.mxu0 %v417
    %1077 = vmatpush.msra.mxu0 %v401
    %1078 = vmatpush.msra.mxu0 %v385
    %1079 = vmatpush.msra.mxu0 %v369
    %1080 = vmatmul.f32.gmra.mxu0 %v782
    %v1081 = vpop.f32.mrf.mxu0
    %v1082 = vadd.f32 %v763, %v1081
    %1083 = vdwg.mxu0
    %1084 = vmatpush.msra.mxu0 0.0
    %1085 = vmatpush.msra.mxu0 0.0
    %1086 = vmatpush.msra.mxu0 0.0
    %1087 = vmatpush.msra.mxu0 0.0
    %1088 = vmatpush.msra.mxu0 0.0
    %1089 = vmatpush.msra.mxu0 0.0
    %1090 = vmatpush.msra.mxu0 0.0
    %1091 = vmatpush.msra.mxu0 0.0
    %1092 = vmatpush.msra.mxu0 %v482
    %1093 = vmatpush.msra.mxu0 %v466
    %1094 = vmatpush.msra.mxu0 %v450
    %1095 = vmatpush.msra.mxu0 %v434
    %1096 = vmatpush.msra.mxu0 %v418
    %1097 = vmatpush.msra.mxu0 %v402
    %1098 = vmatpush.msra.mxu0 %v386
    %1099 = vmatpush.msra.mxu0 %v370
    %1100 = vmatmul.f32.gmra.mxu0 %v782
    %v1101 = vpop.f32.mrf.mxu0
    %v1102 = vadd.f32 %v764, %v1101
    %1103 = vdwg.mxu0
    %v1104 = vmax.f32 %v802, 0.0
    %v1105 = vmax.f32 %v822, 0.0
    %v1106 = vmax.f32 %v842, 0.0
    %v1107 = vmax.f32 %v862, 0.0
    %v1108 = vmax.f32 %v882, 0.0
    %v1109 = vmax.f32 %v902, 0.0
    %v1110 = vmax.f32 %v922, 0.0
    %v1111 = vmax.f32 %v942, 0.0
    %v1112 = vmax.f32 %v962, 0.0
    %v1113 = vmax.f32 %v982, 0.0
    %v1114 = vmax.f32 %v1002, 0.0
    %v1115 = vmax.f32 %v1022, 0.0
    %v1116 = vmax.f32 %v1042, 0.0
    %v1117 = vmax.f32 %v1062, 0.0
    %v1118 = vmax.f32 %v1082, 0.0
    %v1119 = vmax.f32 %v1102, 0.0
    %v1120 = vperm.slane %v118, 5
    %1121 = vmatpush.msra.mxu0 %v506
    %1122 = vmatpush.msra.mxu0 %v505
    %1123 = vmatpush.msra.mxu0 %v504
    %1124 = vmatpush.msra.mxu0 %v503
    %1125 = vmatpush.msra.mxu0 %v502
    %1126 = vmatpush.msra.mxu0 %v501
    %1127 = vmatpush.msra.mxu0 %v500
    %1128 = vmatpush.msra.mxu0 %v499
    %1129 = vmatpush.msra.mxu0 %v498
    %1130 = vmatpush.msra.mxu0 %v497
    %1131 = vmatpush.msra.mxu0 %v496
    %1132 = vmatpush.msra.mxu0 %v495
    %1133 = vmatpush.msra.mxu0 %v494
    %1134 = vmatpush.msra.mxu0 %v493
    %1135 = vmatpush.msra.mxu0 %v492
    %1136 = vmatpush.msra.mxu0 %v491
    %1137 = vmatmul.f32.gmra.mxu0 %v1104
    %v1138 = vpop.f32.mrf.mxu0
    %v1139 = vadd.f32 %v1120, %v1138
    %1140 = vdwg.mxu0
    %1141 = vmatpush.msra.mxu0 %v522
    %1142 = vmatpush.msra.mxu0 %v521
    %1143 = vmatpush.msra.mxu0 %v520
    %1144 = vmatpush.msra.mxu0 %v519
    %1145 = vmatpush.msra.mxu0 %v518
    %1146 = vmatpush.msra.mxu0 %v517
    %1147 = vmatpush.msra.mxu0 %v516
    %1148 = vmatpush.msra.mxu0 %v515
    %1149 = vmatpush.msra.mxu0 %v514
    %1150 = vmatpush.msra.mxu0 %v513
    %1151 = vmatpush.msra.mxu0 %v512
    %1152 = vmatpush.msra.mxu0 %v511
    %1153 = vmatpush.msra.mxu0 %v510
    %1154 = vmatpush.msra.mxu0 %v509
    %1155 = vmatpush.msra.mxu0 %v508
    %1156 = vmatpush.msra.mxu0 %v507
    %1157 = vmatmul.f32.gmra.mxu0 %v1105
    %v1158 = vpop.f32.mrf.mxu0
    %v1159 = vadd.f32 %v1139, %v1158
    %1160 = vdwg.mxu0
    %1161 = vmatpush.msra.mxu0 %v538
    %1162 = vmatpush.msra.mxu0 %v537
    %1163 = vmatpush.msra.mxu0 %v536
    %1164 = vmatpush.msra.mxu0 %v535
    %1165 = vmatpush.msra.mxu0 %v534
    %1166 = vmatpush.msra.mxu0 %v533
    %1167 = vmatpush.msra.mxu0 %v532
    %1168 = vmatpush.msra.mxu0 %v531
    %1169 = vmatpush.msra.mxu0 %v530
    %1170 = vmatpush.msra.mxu0 %v529
    %1171 = vmatpush.msra.mxu0 %v528
    %1172 = vmatpush.msra.mxu0 %v527
    %1173 = vmatpush.msra.mxu0 %v526
    %1174 = vmatpush.msra.mxu0 %v525
    %1175 = vmatpush.msra.mxu0 %v524
    %1176 = vmatpush.msra.mxu0 %v523
    %1177 = vmatmul.f32.gmra.mxu0 %v1106
    %v1178 = vpop.f32.mrf.mxu0
    %v1179 = vadd.f32 %v1159, %v1178
    %1180 = vdwg.mxu0
    %1181 = vmatpush.msra.mxu0 %v554
    %1182 = vmatpush.msra.mxu0 %v553
    %1183 = vmatpush.msra.mxu0 %v552
    %1184 = vmatpush.msra.mxu0 %v551
    %1185 = vmatpush.msra.mxu0 %v550
    %1186 = vmatpush.msra.mxu0 %v549
    %1187 = vmatpush.msra.mxu0 %v548
    %1188 = vmatpush.msra.mxu0 %v547
    %1189 = vmatpush.msra.mxu0 %v546
    %1190 = vmatpush.msra.mxu0 %v545
    %1191 = vmatpush.msra.mxu0 %v544
    %1192 = vmatpush.msra.mxu0 %v543
    %1193 = vmatpush.msra.mxu0 %v542
    %1194 = vmatpush.msra.mxu0 %v541
    %1195 = vmatpush.msra.mxu0 %v540
    %1196 = vmatpush.msra.mxu0 %v539
    %1197 = vmatmul.f32.gmra.mxu0 %v1107
    %v1198 = vpop.f32.mrf.mxu0
    %v1199 = vadd.f32 %v1179, %v1198
    %1200 = vdwg.mxu0
    %1201 = vmatpush.msra.mxu0 %v570
    %1202 = vmatpush.msra.mxu0 %v569
    %1203 = vmatpush.msra.mxu0 %v568
    %1204 = vmatpush.msra.mxu0 %v567
    %1205 = vmatpush.msra.mxu0 %v566
    %1206 = vmatpush.msra.mxu0 %v565
    %1207 = vmatpush.msra.mxu0 %v564
    %1208 = vmatpush.msra.mxu0 %v563
    %1209 = vmatpush.msra.mxu0 %v562
    %1210 = vmatpush.msra.mxu0 %v561
    %1211 = vmatpush.msra.mxu0 %v560
    %1212 = vmatpush.msra.mxu0 %v559
    %1213 = vmatpush.msra.mxu0 %v558
    %1214 = vmatpush.msra.mxu0 %v557
    %1215 = vmatpush.msra.mxu0 %v556
    %1216 = vmatpush.msra.mxu0 %v555
    %1217 = vmatmul.f32.gmra.mxu0 %v1108
    %v1218 = vpop.f32.mrf.mxu0
    %v1219 = vadd.f32 %v1199, %v1218
    %1220 = vdwg.mxu0
    %1221 = vmatpush.msra.mxu0 %v586
    %1222 = vmatpush.msra.mxu0 %v585
    %1223 = vmatpush.msra.mxu0 %v584
    %1224 = vmatpush.msra.mxu0 %v583
    %1225 = vmatpush.msra.mxu0 %v582
    %1226 = vmatpush.msra.mxu0 %v581
    %1227 = vmatpush.msra.mxu0 %v580
    %1228 = vmatpush.msra.mxu0 %v579
    %1229 = vmatpush.msra.mxu0 %v578
    %1230 = vmatpush.msra.mxu0 %v577
    %1231 = vmatpush.msra.mxu0 %v576
    %1232 = vmatpush.msra.mxu0 %v575
    %1233 = vmatpush.msra.mxu0 %v574
    %1234 = vmatpush.msra.mxu0 %v573
    %1235 = vmatpush.msra.mxu0 %v572
    %1236 = vmatpush.msra.mxu0 %v571
    %1237 = vmatmul.f32.gmra.mxu0 %v1109
    %v1238 = vpop.f32.mrf.mxu0
    %v1239 = vadd.f32 %v1219, %v1238
    %1240 = vdwg.mxu0
    %1241 = vmatpush.msra.mxu0 %v602
    %1242 = vmatpush.msra.mxu0 %v601
    %1243 = vmatpush.msra.mxu0 %v600
    %1244 = vmatpush.msra.mxu0 %v599
    %1245 = vmatpush.msra.mxu0 %v598
    %1246 = vmatpush.msra.mxu0 %v597
    %1247 = vmatpush.msra.mxu0 %v596
    %1248 = vmatpush.msra.mxu0 %v595
    %1249 = vmatpush.msra.mxu0 %v594
    %1250 = vmatpush.msra.mxu0 %v593
    %1251 = vmatpush.msra.mxu0 %v592
    %1252 = vmatpush.msra.mxu0 %v591
    %1253 = vmatpush.msra.mxu0 %v590
    %1254 = vmatpush.msra.mxu0 %v589
    %1255 = vmatpush.msra.mxu0 %v588
    %1256 = vmatpush.msra.mxu0 %v587
    %1257 = vmatmul.f32.gmra.mxu0 %v1110
    %v1258 = vpop.f32.mrf.mxu0
    %v1259 = vadd.f32 %v1239, %v1258
    %1260 = vdwg.mxu0
    %1261 = vmatpush.msra.mxu0 %v618
    %1262 = vmatpush.msra.mxu0 %v617
    %1263 = vmatpush.msra.mxu0 %v616
    %1264 = vmatpush.msra.mxu0 %v615
    %1265 = vmatpush.msra.mxu0 %v614
    %1266 = vmatpush.msra.mxu0 %v613
    %1267 = vmatpush.msra.mxu0 %v612
    %1268 = vmatpush.msra.mxu0 %v611
    %1269 = vmatpush.msra.mxu0 %v610
    %1270 = vmatpush.msra.mxu0 %v609
    %1271 = vmatpush.msra.mxu0 %v608
    %1272 = vmatpush.msra.mxu0 %v607
    %1273 = vmatpush.msra.mxu0 %v606
    %1274 = vmatpush.msra.mxu0 %v605
    %1275 = vmatpush.msra.mxu0 %v604
    %1276 = vmatpush.msra.mxu0 %v603
    %1277 = vmatmul.f32.gmra.mxu0 %v1111
    %v1278 = vpop.f32.mrf.mxu0
    %v1279 = vadd.f32 %v1259, %v1278
    %1280 = vdwg.mxu0
    %1281 = vmatpush.msra.mxu0 %v634
    %1282 = vmatpush.msra.mxu0 %v633
    %1283 = vmatpush.msra.mxu0 %v632
    %1284 = vmatpush.msra.mxu0 %v631
    %1285 = vmatpush.msra.mxu0 %v630
    %1286 = vmatpush.msra.mxu0 %v629
    %1287 = vmatpush.msra.mxu0 %v628
    %1288 = vmatpush.msra.mxu0 %v627
    %1289 = vmatpush.msra.mxu0 %v626
    %1290 = vmatpush.msra.mxu0 %v625
    %1291 = vmatpush.msra.mxu0 %v624
    %1292 = vmatpush.msra.mxu0 %v623
    %1293 = vmatpush.msra.mxu0 %v622
    %1294 = vmatpush.msra.mxu0 %v621
    %1295 = vmatpush.msra.mxu0 %v620
    %1296 = vmatpush.msra.mxu0 %v619
    %1297 = vmatmul.f32.gmra.mxu0 %v1112
    %v1298 = vpop.f32.mrf.mxu0
    %v1299 = vadd.f32 %v1279, %v1298
    %1300 = vdwg.mxu0
    %1301 = vmatpush.msra.mxu0 %v650
    %1302 = vmatpush.msra.mxu0 %v649
    %1303 = vmatpush.msra.mxu0 %v648
    %1304 = vmatpush.msra.mxu0 %v647
    %1305 = vmatpush.msra.mxu0 %v646
    %1306 = vmatpush.msra.mxu0 %v645
    %1307 = vmatpush.msra.mxu0 %v644
    %1308 = vmatpush.msra.mxu0 %v643
    %1309 = vmatpush.msra.mxu0 %v642
    %1310 = vmatpush.msra.mxu0 %v641
    %1311 = vmatpush.msra.mxu0 %v640
    %1312 = vmatpush.msra.mxu0 %v639
    %1313 = vmatpush.msra.mxu0 %v638
    %1314 = vmatpush.msra.mxu0 %v637
    %1315 = vmatpush.msra.mxu0 %v636
    %1316 = vmatpush.msra.mxu0 %v635
    %1317 = vmatmul.f32.gmra.mxu0 %v1113
    %v1318 = vpop.f32.mrf.mxu0
    %v1319 = vadd.f32 %v1299, %v1318
    %1320 = vdwg.mxu0
    %1321 = vmatpush.msra.mxu0 %v666
    %1322 = vmatpush.msra.mxu0 %v665
    %1323 = vmatpush.msra.mxu0 %v664
    %1324 = vmatpush.msra.mxu0 %v663
    %1325 = vmatpush.msra.mxu0 %v662
    %1326 = vmatpush.msra.mxu0 %v661
    %1327 = vmatpush.msra.mxu0 %v660
    %1328 = vmatpush.msra.mxu0 %v659
    %1329 = vmatpush.msra.mxu0 %v658
    %1330 = vmatpush.msra.mxu0 %v657
    %1331 = vmatpush.msra.mxu0 %v656
    %1332 = vmatpush.msra.mxu0 %v655
    %1333 = vmatpush.msra.mxu0 %v654
    %1334 = vmatpush.msra.mxu0 %v653
    %1335 = vmatpush.msra.mxu0 %v652
    %1336 = vmatpush.msra.mxu0 %v651
    %1337 = vmatmul.f32.gmra.mxu0 %v1114
    %v1338 = vpop.f32.mrf.mxu0
    %v1339 = vadd.f32 %v1319, %v1338
    %1340 = vdwg.mxu0
    %1341 = vmatpush.msra.mxu0 %v682
    %1342 = vmatpush.msra.mxu0 %v681
    %1343 = vmatpush.msra.mxu0 %v680
    %1344 = vmatpush.msra.mxu0 %v679
    %1345 = vmatpush.msra.mxu0 %v678
    %1346 = vmatpush.msra.mxu0 %v677
    %1347 = vmatpush.msra.mxu0 %v676
    %1348 = vmatpush.msra.mxu0 %v675
    %1349 = vmatpush.msra.mxu0 %v674
    %1350 = vmatpush.msra.mxu0 %v673
    %1351 = vmatpush.msra.mxu0 %v672
    %1352 = vmatpush.msra.mxu0 %v671
    %1353 = vmatpush.msra.mxu0 %v670
    %1354 = vmatpush.msra.mxu0 %v669
    %1355 = vmatpush.msra.mxu0 %v668
    %1356 = vmatpush.msra.mxu0 %v667
    %1357 = vmatmul.f32.gmra.mxu0 %v1115
    %v1358 = vpop.f32.mrf.mxu0
    %v1359 = vadd.f32 %v1339, %v1358
    %1360 = vdwg.mxu0
    %1361 = vmatpush.msra.mxu0 %v698
    %1362 = vmatpush.msra.mxu0 %v697
    %1363 = vmatpush.msra.mxu0 %v696
    %1364 = vmatpush.msra.mxu0 %v695
    %1365 = vmatpush.msra.mxu0 %v694
    %1366 = vmatpush.msra.mxu0 %v693
    %1367 = vmatpush.msra.mxu0 %v692
    %1368 = vmatpush.msra.mxu0 %v691
    %1369 = vmatpush.msra.mxu0 %v690
    %1370 = vmatpush.msra.mxu0 %v689
    %1371 = vmatpush.msra.mxu0 %v688
    %1372 = vmatpush.msra.mxu0 %v687
    %1373 = vmatpush.msra.mxu0 %v686
    %1374 = vmatpush.msra.mxu0 %v685
    %1375 = vmatpush.msra.mxu0 %v684
    %1376 = vmatpush.msra.mxu0 %v683
    %1377 = vmatmul.f32.gmra.mxu0 %v1116
    %v1378 = vpop.f32.mrf.mxu0
    %v1379 = vadd.f32 %v1359, %v1378
    %1380 = vdwg.mxu0
    %1381 = vmatpush.msra.mxu0 %v714
    %1382 = vmatpush.msra.mxu0 %v713
    %1383 = vmatpush.msra.mxu0 %v712
    %1384 = vmatpush.msra.mxu0 %v711
    %1385 = vmatpush.msra.mxu0 %v710
    %1386 = vmatpush.msra.mxu0 %v709
    %1387 = vmatpush.msra.mxu0 %v708
    %1388 = vmatpush.msra.mxu0 %v707
    %1389 = vmatpush.msra.mxu0 %v706
    %1390 = vmatpush.msra.mxu0 %v705
    %1391 = vmatpush.msra.mxu0 %v704
    %1392 = vmatpush.msra.mxu0 %v703
    %1393 = vmatpush.msra.mxu0 %v702
    %1394 = vmatpush.msra.mxu0 %v701
    %1395 = vmatpush.msra.mxu0 %v700
    %1396 = vmatpush.msra.mxu0 %v699
    %1397 = vmatmul.f32.gmra.mxu0 %v1117
    %v1398 = vpop.f32.mrf.mxu0
    %v1399 = vadd.f32 %v1379, %v1398
    %1400 = vdwg.mxu0
    %1401 = vmatpush.msra.mxu0 %v730
    %1402 = vmatpush.msra.mxu0 %v729
    %1403 = vmatpush.msra.mxu0 %v728
    %1404 = vmatpush.msra.mxu0 %v727
    %1405 = vmatpush.msra.mxu0 %v726
    %1406 = vmatpush.msra.mxu0 %v725
    %1407 = vmatpush.msra.mxu0 %v724
    %1408 = vmatpush.msra.mxu0 %v723
    %1409 = vmatpush.msra.mxu0 %v722
    %1410 = vmatpush.msra.mxu0 %v721
    %1411 = vmatpush.msra.mxu0 %v720
    %1412 = vmatpush.msra.mxu0 %v719
    %1413 = vmatpush.msra.mxu0 %v718
    %1414 = vmatpush.msra.mxu0 %v717
    %1415 = vmatpush.msra.mxu0 %v716
    %1416 = vmatpush.msra.mxu0 %v715
    %1417 = vmatmul.f32.gmra.mxu0 %v1118
    %v1418 = vpop.f32.mrf.mxu0
    %v1419 = vadd.f32 %v1399, %v1418
    %1420 = vdwg.mxu0
    %1421 = vmatpush.msra.mxu0 %v746
    %1422 = vmatpush.msra.mxu0 %v745
    %1423 = vmatpush.msra.mxu0 %v744
    %1424 = vmatpush.msra.mxu0 %v743
    %1425 = vmatpush.msra.mxu0 %v742
    %1426 = vmatpush.msra.mxu0 %v741
    %1427 = vmatpush.msra.mxu0 %v740
    %1428 = vmatpush.msra.mxu0 %v739
    %1429 = vmatpush.msra.mxu0 %v738
    %1430 = vmatpush.msra.mxu0 %v737
    %1431 = vmatpush.msra.mxu0 %v736
    %1432 = vmatpush.msra.mxu0 %v735
    %1433 = vmatpush.msra.mxu0 %v734
    %1434 = vmatpush.msra.mxu0 %v733
    %1435 = vmatpush.msra.mxu0 %v732
    %1436 = vmatpush.msra.mxu0 %v731
    %1437 = vmatmul.f32.gmra.mxu0 %v1119
    %v1438 = vpop.f32.mrf.mxu0
    %v1439 = vadd.f32 %v1419, %v1438
    %1440 = vdwg.mxu0
    %v1441 = vadd.f32 %v354, %v1439
    %v1442 = vsel %vm70, %v1441, 0.0
    %1443 = vadd.xlane.f32.xlu0 %v1442
    %v1444 = vpop.xlane.xlu0 %1443
    %v1445 = vmul.f32 %v1444, %v331
    %v1446 = vsub.f32 %v1441, %v1445
    %v1447 = vmul.f32 %v1446, %v1446
    %v1448 = vsel %vm70, %v1447, 0.0
    %1449 = vadd.xlane.f32.xlu0 %v1448
    %v1450 = vpop.xlane.xlu0 %1449
    %v1451 = vmul.f32 %v1450, %v331
    %v1452 = vadd.f32 %v1451, 1e-05
    %v1453 = vrsqrt.pop %v1452
    %v1454 = vmul.f32 %v1453, %v1452
    %v1455 = vmul.f32 %v1454, %v1453
    %v1456 = vmul.f32 0.5, %v1455
    %v1457 = vsub.f32 1.5, %v1456
    %v1458 = vmul.f32 %v1453, %v1457
    %vm1459 = vweird.f32 %v1452
    %vm1460 = vweird.f32 %v1453
    %vm1461 = vmor %vm1459, %vm1460
    %v1462 = vsel %vm1461, %v1453, %v1458
    %v1463 = vmul.f32 %v1446, %v1462
    %v1464 = vperm.slane %v118, 3
    %v1465 = vmul.f32 %v1463, %v1464
    %v1466 = vperm.slane %v118, 4
    %v1467 = vadd.f32 %v1465, %v1466
    %v1468 = vld [vmem:[%s2 + $0xd8] sm:$0xff]
    %v1469 = vld [vmem:[%s2 + $0xe0] sm:$0xff]
    %v1470 = vld [vmem:[%s2 + $0xe8] sm:$0xff]
    %v1471 = vld [vmem:[%s2 + $0xf0] sm:$0xff]
    %v1472 = vld [vmem:[%s2 + $0xf8] sm:$0xff]
    %v1473 = vld [vmem:[%s2 + $0x100] sm:$0xff]
    %v1474 = vld [vmem:[%s2 + $0x108] sm:$0xff]
    %v1475 = vld [vmem:[%s2 + $0x110] sm:$0xff]
    %v1476 = vld [vmem:[%s2 + $0x118] sm:$0xff]
    %v1477 = vld [vmem:[%s2 + $0x120] sm:$0xff]
    %v1478 = vld [vmem:[%s2 + $0x128] sm:$0xff]
    %v1479 = vld [vmem:[%s2 + $0x130] sm:$0xff]
    %v1480 = vld [vmem:[%s2 + $0x138] sm:$0xff]
    %v1481 = vld [vmem:[%s2 + $0x140] sm:$0xff]
    %v1482 = vld [vmem:[%s2 + $0x148] sm:$0xff]
    %v1483 = vld [vmem:[%s2 + $0x150] sm:$0xff]
    %v1484 = vld [vmem:[%s2 + $0x158] sm:$0xff]
    %v1485 = vld [vmem:[%s2 + $0x160] sm:$0xff]
    %v1486 = vld [vmem:[%s2 + $0x168] sm:$0xff]
    %v1487 = vld [vmem:[%s2 + $0x170] sm:$0xff]
    %v1488 = vld [vmem:[%s2 + $0x178] sm:$0xff]
    %v1489 = vld [vmem:[%s2 + $0x180] sm:$0xff]
    %v1490 = vld [vmem:[%s2 + $0x188] sm:$0xff]
    %v1491 = vld [vmem:[%s2 + $0x190] sm:$0xff]
    %v1492 = vld [vmem:[%s2 + $0x198] sm:$0xff]
    %v1493 = vld [vmem:[%s2 + $0x1a0] sm:$0xff]
    %v1494 = vld [vmem:[%s2 + $0x1a8] sm:$0xff]
    %v1495 = vperm.slane %v1492, 0
    %v1496 = vperm.slane %v1493, 0
    %v1498 = vsel %vm70, %v1467, 0
    %1500 = vmatpush.msra.mxu0 0.0
    %1501 = vmatpush.msra.mxu0 0.0
    %1502 = vmatpush.msra.mxu0 0.0
    %1503 = vmatpush.msra.mxu0 0.0
    %1504 = vmatpush.msra.mxu0 0.0
    %1505 = vmatpush.msra.mxu0 0.0
    %1506 = vmatpush.msra.mxu0 0.0
    %1507 = vmatpush.msra.mxu0 0.0
    %1508 = vmatpush.msra.mxu0 %v1489
    %1509 = vmatpush.msra.mxu0 %v1486
    %1510 = vmatpush.msra.mxu0 %v1483
    %1511 = vmatpush.msra.mxu0 %v1480
    %1512 = vmatpush.msra.mxu0 %v1477
    %1513 = vmatpush.msra.mxu0 %v1474
    %1514 = vmatpush.msra.mxu0 %v1471
    %1515 = vmatpush.msra.mxu0 %v1468
    %1516 = vmatmul.f32.gmra.mxu0 %v1498
    %v1517 = vpop.f32.mrf.mxu0
    %v1518 = vadd.f32 %v1495, %v1517
    %1519 = vdwg.mxu0
    %1520 = vmatpush.msra.mxu0 0.0
    %1521 = vmatpush.msra.mxu0 0.0
    %1522 = vmatpush.msra.mxu0 0.0
    %1523 = vmatpush.msra.mxu0 0.0
    %1524 = vmatpush.msra.mxu0 0.0
    %1525 = vmatpush.msra.mxu0 0.0
    %1526 = vmatpush.msra.mxu0 0.0
    %1527 = vmatpush.msra.mxu0 0.0
    %1528 = vmatpush.msra.mxu0 %v1490
    %1529 = vmatpush.msra.mxu0 %v1487
    %1530 = vmatpush.msra.mxu0 %v1484
    %1531 = vmatpush.msra.mxu0 %v1481
    %1532 = vmatpush.msra.mxu0 %v1478
    %1533 = vmatpush.msra.mxu0 %v1475
    %1534 = vmatpush.msra.mxu0 %v1472
    %1535 = vmatpush.msra.mxu0 %v1469
    %1536 = vmatmul.f32.gmra.mxu0 %v1498
    %v1537 = vpop.f32.mrf.mxu0
    %v1538 = vadd.f32 %v1496, %v1537
    %1539 = vdwg.mxu0
    %1540 = vmatpush.msra.mxu0 0.0
    %1541 = vmatpush.msra.mxu0 0.0
    %1542 = vmatpush.msra.mxu0 0.0
    %1543 = vmatpush.msra.mxu0 0.0
    %1544 = vmatpush.msra.mxu0 0.0
    %1545 = vmatpush.msra.mxu0 0.0
    %1546 = vmatpush.msra.mxu0 0.0
    %1547 = vmatpush.msra.mxu0 0.0
    %1548 = vmatpush.msra.mxu0 0.0
    %1549 = vmatpush.msra.mxu0 0.0
    %1550 = vmatpush.msra.mxu0 0.0
    %1551 = vmatpush.msra.mxu0 0.0
    %1552 = vmatpush.msra.mxu0 0.0
    %1553 = vmatpush.msra.mxu0 0.0
    %1554 = vmatpush.msra.mxu0 0.0
    %1555 = vmatpush.msra.mxu0 %v1518
    %1556 = vmatmul.f32.gmra.mxu0 %v168
    %v1557 = vpop.f32.mrf.mxu0
    %v1558 = vadd.f32 0.0, %v1557
    %1559 = vdwg.mxu0
    %1560 = vmatpush.msra.mxu0 0.0
    %1561 = vmatpush.msra.mxu0 0.0
    %1562 = vmatpush.msra.mxu0 0.0
    %1563 = vmatpush.msra.mxu0 0.0
    %1564 = vmatpush.msra.mxu0 0.0
    %1565 = vmatpush.msra.mxu0 0.0
    %1566 = vmatpush.msra.mxu0 0.0
    %1567 = vmatpush.msra.mxu0 0.0
    %1568 = vmatpush.msra.mxu0 0.0
    %1569 = vmatpush.msra.mxu0 0.0
    %1570 = vmatpush.msra.mxu0 0.0
    %1571 = vmatpush.msra.mxu0 0.0
    %1572 = vmatpush.msra.mxu0 0.0
    %1573 = vmatpush.msra.mxu0 0.0
    %1574 = vmatpush.msra.mxu0 0.0
    %1575 = vmatpush.msra.mxu0 %v1538
    %1576 = vmatmul.f32.gmra.mxu0 %v168
    %v1577 = vpop.f32.mrf.mxu0
    %v1578 = vadd.f32 0.0, %v1577
    %1579 = vdwg.mxu0
    %1581 = vrot.lane.b32.xlu0 %v1518, 64
    %v1582 = vpop.permute.xlu0 %1581
    %v1584 = vmul.f32 %v1518, %v1582
    %1586 = vrot.lane.b32.xlu0 %v1558, 64
    %v1587 = vpop.permute.xlu0 %1586
    %v1589 = vmul.f32 %v1518, %v1587
    %v1590 = vmul.f32 %v1584, %v27
    %v1591 = vsel %vm70, %v1590, 0.0
    %1592 = vadd.xlane.f32.xlu0 %v1591
    %v1593 = vpop.xlane.xlu0 %1592
    %v1594 = vmul.f32 %v1589, %v27
    %v1595 = vsel %vm70, %v1594, 0.0
    %1596 = vadd.xlane.f32.xlu0 %v1595
    %v1597 = vpop.xlane.xlu0 %1596
    %v1598 = vmax.f32 %v1593, %v1597
    %v1599 = vsub.f32 %v1593, %v1598
    %v1600 = vmul.f32 %v1599, 1.442695
    %v1601 = vpow.pop %v1600
    %v1602 = vsub.f32 %v1597, %v1598
    %v1603 = vmul.f32 %v1602, 1.442695
    %v1604 = vpow.pop %v1603
    %v1605 = vadd.f32 %v1601, %v1604
    %v1606 = vrcp.pop %v1605
    %v1607 = vmul.f32 %v1605, %v1606
    %v1608 = vsub.f32 1.0, %v1607
    %v1609 = vmul.f32 %v1606, %v1608
    %v1610 = vadd.f32 %v1606, %v1609
    %vm1611 = vweird.f32 %v1605
    %vm1612 = vweird.f32 %v1606
    %vm1613 = vmor %vm1611, %vm1612
    %v1614 = vsel %vm1613, %v1606, %v1610
    %v1615 = vand.u32 2147483647, %v1605
    %vm1616 = vcmp.eq.f32.partialorder %v1615, 8.507059e+37
    %v1617 = vand.u32 %v1605, 2147483648
    %v1618 = vor.u32 1.1754944e-38, %v1617
    %v1619 = vsel %vm1616, %v1618, %v1614
    %v1620 = vmul.f32 1.0, %v1619
    %v1621 = vmul.f32 %v1601, %v1620
    %v1622 = vmul.f32 %v1621, %v27
    %v1623 = vadd.f32 %v1622, 0.0
    %v1624 = vmul.f32 %v1604, %v1620
    %v1625 = vmul.f32 %v1624, %v27
    %v1626 = vadd.f32 %v1625, 0.0
    %v1627 = vmul.f32 %v1584, %v32
    %v1628 = vsel %vm70, %v1627, 0.0
    %1629 = vadd.xlane.f32.xlu0 %v1628
    %v1630 = vpop.xlane.xlu0 %1629
    %v1631 = vmul.f32 %v1589, %v32
    %v1632 = vsel %vm70, %v1631, 0.0
    %1633 = vadd.xlane.f32.xlu0 %v1632
    %v1634 = vpop.xlane.xlu0 %1633
    %v1635 = vmax.f32 %v1630, %v1634
    %v1636 = vsub.f32 %v1630, %v1635
    %v1637 = vmul.f32 %v1636, 1.442695
    %v1638 = vpow.pop %v1637
    %v1639 = vsub.f32 %v1634, %v1635
    %v1640 = vmul.f32 %v1639, 1.442695
    %v1641 = vpow.pop %v1640
    %v1642 = vadd.f32 %v1638, %v1641
    %v1643 = vrcp.pop %v1642
    %v1644 = vmul.f32 %v1642, %v1643
    %v1645 = vsub.f32 1.0, %v1644
    %v1646 = vmul.f32 %v1643, %v1645
    %v1647 = vadd.f32 %v1643, %v1646
    %vm1648 = vweird.f32 %v1642
    %vm1649 = vweird.f32 %v1643
    %vm1650 = vmor %vm1648, %vm1649
    %v1651 = vsel %vm1650, %v1643, %v1647
    %v1652 = vand.u32 2147483647, %v1642
    %vm1653 = vcmp.eq.f32.partialorder %v1652, 8.507059e+37
    %v1654 = vand.u32 %v1642, 2147483648
    %v1655 = vor.u32 1.1754944e-38, %v1654
    %v1656 = vsel %vm1653, %v1655, %v1651
    %v1657 = vmul.f32 1.0, %v1656
    %v1658 = vmul.f32 %v1638, %v1657
    %v1659 = vmul.f32 %v1658, %v32
    %v1660 = vadd.f32 %v1623, %v1659
    %v1661 = vmul.f32 %v1641, %v1657
    %v1662 = vmul.f32 %v1661, %v32
    %v1663 = vadd.f32 %v1626, %v1662
    %v1664 = vmul.f32 %v1660, %v1538
    %v1665 = vmul.f32 %v1663, %v1578
    %v1666 = vadd.f32 %v1664, %v1665
    %v1667 = vperm.slane %v1494, 0
    %v1669 = vsel %vm70, %v1666, 0
    %1671 = vmatpush.msra.mxu0 0.0
    %1672 = vmatpush.msra.mxu0 0.0
    %1673 = vmatpush.msra.mxu0 0.0
    %1674 = vmatpush.msra.mxu0 0.0
    %1675 = vmatpush.msra.mxu0 0.0
    %1676 = vmatpush.msra.mxu0 0.0
    %1677 = vmatpush.msra.mxu0 0.0
    %1678 = vmatpush.msra.mxu0 0.0
    %1679 = vmatpush.msra.mxu0 %v1491
    %1680 = vmatpush.msra.mxu0 %v1488
    %1681 = vmatpush.msra.mxu0 %v1485
    %1682 = vmatpush.msra.mxu0 %v1482
    %1683 = vmatpush.msra.mxu0 %v1479
    %1684 = vmatpush.msra.mxu0 %v1476
    %1685 = vmatpush.msra.mxu0 %v1473
    %1686 = vmatpush.msra.mxu0 %v1470
    %1687 = vmatmul.f32.gmra.mxu0 %v1669
    %v1688 = vpop.f32.mrf.mxu0
    %v1689 = vadd.f32 %v1667, %v1688
    %1690 = vdwg.mxu0
    %v1691 = vadd.f32 %v1467, %v1689
    %v1692 = vsel %vm70, %v1691, 0.0
    %1693 = vadd.xlane.f32.xlu0 %v1692
    %v1694 = vpop.xlane.xlu0 %1693
    %v1695 = vmul.f32 %v1694, %v331
    %v1696 = vsub.f32 %v1691, %v1695
    %v1697 = vmul.f32 %v1696, %v1696
    %v1698 = vsel %vm70, %v1697, 0.0
    %1699 = vadd.xlane.f32.xlu0 %v1698
    %v1700 = vpop.xlane.xlu0 %1699
    %v1701 = vmul.f32 %v1700, %v331
    %v1702 = vadd.f32 %v1701, 1e-05
    %v1703 = vrsqrt.pop %v1702
    %v1704 = vmul.f32 %v1703, %v1702
    %v1705 = vmul.f32 %v1704, %v1703
    %v1706 = vmul.f32 0.5, %v1705
    %v1707 = vsub.f32 1.5, %v1706
    %v1708 = vmul.f32 %v1703, %v1707
    %vm1709 = vweird.f32 %v1702
    %vm1710 = vweird.f32 %v1703
    %vm1711 = vmor %vm1709, %vm1710
    %v1712 = vsel %vm1711, %v1703, %v1708
    %v1713 = vmul.f32 %v1696, %v1712
    %v1714 = vperm.slane %v1492, 1
    %v1715 = vmul.f32 %v1713, %v1714
    %v1716 = vperm.slane %v1492, 2
    %v1717 = vadd.f32 %v1715, %v1716
    %v1718 = vld [vmem:[%s3 + $0x480] sm:$0xff]
    %v1719 = vld [vmem:[%s3 + $0x488] sm:$0xff]
    %v1720 = vld [vmem:[%s3 + $0x490] sm:$0xff]
    %v1721 = vld [vmem:[%s3 + $0x498] sm:$0xff]
    %v1722 = vld [vmem:[%s3 + $0x4a0] sm:$0xff]
    %v1723 = vld [vmem:[%s3 + $0x4a8] sm:$0xff]
    %v1724 = vld [vmem:[%s3 + $0x4b0] sm:$0xff]
    %v1725 = vld [vmem:[%s3 + $0x4b8] sm:$0xff]
    %v1726 = vld [vmem:[%s3 + $0x4c0] sm:$0xff]
    %v1727 = vld [vmem:[%s3 + $0x4c8] sm:$0xff]
    %v1728 = vld [vmem:[%s3 + $0x4d0] sm:$0xff]
    %v1729 = vld [vmem:[%s3 + $0x4d8] sm:$0xff]
    %v1730 = vld [vmem:[%s3 + $0x4e0] sm:$0xff]
    %v1731 = vld [vmem:[%s3 + $0x4e8] sm:$0xff]
    %v1732 = vld [vmem:[%s3 + $0x4f0] sm:$0xff]
    %v1733 = vld [vmem:[%s3 + $0x4f8] sm:$0xff]
    %v1734 = vld [vmem:[%s3 + $0x500] sm:$0xff]
    %v1735 = vld [vmem:[%s3 + $0x508] sm:$0xff]
    %v1736 = vld [vmem:[%s3 + $0x510] sm:$0xff]
    %v1737 = vld [vmem:[%s3 + $0x518] sm:$0xff]
    %v1738 = vld [vmem:[%s3 + $0x520] sm:$0xff]
    %v1739 = vld [vmem:[%s3 + $0x528] sm:$0xff]
    %v1740 = vld [vmem:[%s3 + $0x530] sm:$0xff]
    %v1741 = vld [vmem:[%s3 + $0x538] sm:$0xff]
    %v1742 = vld [vmem:[%s3 + $0x540] sm:$0xff]
    %v1743 = vld [vmem:[%s3 + $0x548] sm:$0xff]
    %v1744 = vld [vmem:[%s3 + $0x550] sm:$0xff]
    %v1745 = vld [vmem:[%s3 + $0x558] sm:$0xff]
    %v1746 = vld [vmem:[%s3 + $0x560] sm:$0xff]
    %v1747 = vld [vmem:[%s3 + $0x568] sm:$0xff]
    %v1748 = vld [vmem:[%s3 + $0x570] sm:$0xff]
    %v1749 = vld [vmem:[%s3 + $0x578] sm:$0xff]
    %v1750 = vld [vmem:[%s3 + $0x580] sm:$0xff]
    %v1751 = vld [vmem:[%s3 + $0x588] sm:$0xff]
    %v1752 = vld [vmem:[%s3 + $0x590] sm:$0xff]
    %v1753 = vld [vmem:[%s3 + $0x598] sm:$0xff]
    %v1754 = vld [vmem:[%s3 + $0x5a0] sm:$0xff]
    %v1755 = vld [vmem:[%s3 + $0x5a8] sm:$0xff]
    %v1756 = vld [vmem:[%s3 + $0x5b0] sm:$0xff]
    %v1757 = vld [vmem:[%s3 + $0x5b8] sm:$0xff]
    %v1758 = vld [vmem:[%s3 + $0x5c0] sm:$0xff]
    %v1759 = vld [vmem:[%s3 + $0x5c8] sm:$0xff]
    %v1760 = vld [vmem:[%s3 + $0x5d0] sm:$0xff]
    %v1761 = vld [vmem:[%s3 + $0x5d8] sm:$0xff]
    %v1762 = vld [vmem:[%s3 + $0x5e0] sm:$0xff]
    %v1763 = vld [vmem:[%s3 + $0x5e8] sm:$0xff]
    %v1764 = vld [vmem:[%s3 + $0x5f0] sm:$0xff]
    %v1765 = vld [vmem:[%s3 + $0x5f8] sm:$0xff]
    %v1766 = vld [vmem:[%s3 + $0x600] sm:$0xff]
    %v1767 = vld [vmem:[%s3 + $0x608] sm:$0xff]
    %v1768 = vld [vmem:[%s3 + $0x610] sm:$0xff]
    %v1769 = vld [vmem:[%s3 + $0x618] sm:$0xff]
    %v1770 = vld [vmem:[%s3 + $0x620] sm:$0xff]
    %v1771 = vld [vmem:[%s3 + $0x628] sm:$0xff]
    %v1772 = vld [vmem:[%s3 + $0x630] sm:$0xff]
    %v1773 = vld [vmem:[%s3 + $0x638] sm:$0xff]
    %v1774 = vld [vmem:[%s3 + $0x640] sm:$0xff]
    %v1775 = vld [vmem:[%s3 + $0x648] sm:$0xff]
    %v1776 = vld [vmem:[%s3 + $0x650] sm:$0xff]
    %v1777 = vld [vmem:[%s3 + $0x658] sm:$0xff]
    %v1778 = vld [vmem:[%s3 + $0x660] sm:$0xff]
    %v1779 = vld [vmem:[%s3 + $0x668] sm:$0xff]
    %v1780 = vld [vmem:[%s3 + $0x670] sm:$0xff]
    %v1781 = vld [vmem:[%s3 + $0x678] sm:$0xff]
    %v1782 = vld [vmem:[%s3 + $0x680] sm:$0xff]
    %v1783 = vld [vmem:[%s3 + $0x688] sm:$0xff]
    %v1784 = vld [vmem:[%s3 + $0x690] sm:$0xff]
    %v1785 = vld [vmem:[%s3 + $0x698] sm:$0xff]
    %v1786 = vld [vmem:[%s3 + $0x6a0] sm:$0xff]
    %v1787 = vld [vmem:[%s3 + $0x6a8] sm:$0xff]
    %v1788 = vld [vmem:[%s3 + $0x6b0] sm:$0xff]
    %v1789 = vld [vmem:[%s3 + $0x6b8] sm:$0xff]
    %v1790 = vld [vmem:[%s3 + $0x6c0] sm:$0xff]
    %v1791 = vld [vmem:[%s3 + $0x6c8] sm:$0xff]
    %v1792 = vld [vmem:[%s3 + $0x6d0] sm:$0xff]
    %v1793 = vld [vmem:[%s3 + $0x6d8] sm:$0xff]
    %v1794 = vld [vmem:[%s3 + $0x6e0] sm:$0xff]
    %v1795 = vld [vmem:[%s3 + $0x6e8] sm:$0xff]
    %v1796 = vld [vmem:[%s3 + $0x6f0] sm:$0xff]
    %v1797 = vld [vmem:[%s3 + $0x6f8] sm:$0xff]
    %v1798 = vld [vmem:[%s3 + $0x700] sm:$0xff]
    %v1799 = vld [vmem:[%s3 + $0x708] sm:$0xff]
    %v1800 = vld [vmem:[%s3 + $0x710] sm:$0xff]
    %v1801 = vld [vmem:[%s3 + $0x718] sm:$0xff]
    %v1802 = vld [vmem:[%s3 + $0x720] sm:$0xff]
    %v1803 = vld [vmem:[%s3 + $0x728] sm:$0xff]
    %v1804 = vld [vmem:[%s3 + $0x730] sm:$0xff]
    %v1805 = vld [vmem:[%s3 + $0x738] sm:$0xff]
    %v1806 = vld [vmem:[%s3 + $0x740] sm:$0xff]
    %v1807 = vld [vmem:[%s3 + $0x748] sm:$0xff]
    %v1808 = vld [vmem:[%s3 + $0x750] sm:$0xff]
    %v1809 = vld [vmem:[%s3 + $0x758] sm:$0xff]
    %v1810 = vld [vmem:[%s3 + $0x760] sm:$0xff]
    %v1811 = vld [vmem:[%s3 + $0x768] sm:$0xff]
    %v1812 = vld [vmem:[%s3 + $0x770] sm:$0xff]
    %v1813 = vld [vmem:[%s3 + $0x778] sm:$0xff]
    %v1814 = vld [vmem:[%s3 + $0x780] sm:$0xff]
    %v1815 = vld [vmem:[%s3 + $0x788] sm:$0xff]
    %v1816 = vld [vmem:[%s3 + $0x790] sm:$0xff]
    %v1817 = vld [vmem:[%s3 + $0x798] sm:$0xff]
    %v1818 = vld [vmem:[%s3 + $0x7a0] sm:$0xff]
    %v1819 = vld [vmem:[%s3 + $0x7a8] sm:$0xff]
    %v1820 = vld [vmem:[%s3 + $0x7b0] sm:$0xff]
    %v1821 = vld [vmem:[%s3 + $0x7b8] sm:$0xff]
    %v1822 = vld [vmem:[%s3 + $0x7c0] sm:$0xff]
    %v1823 = vld [vmem:[%s3 + $0x7c8] sm:$0xff]
    %v1824 = vld [vmem:[%s3 + $0x7d0] sm:$0xff]
    %v1825 = vld [vmem:[%s3 + $0x7d8] sm:$0xff]
    %v1826 = vld [vmem:[%s3 + $0x7e0] sm:$0xff]
    %v1827 = vld [vmem:[%s3 + $0x7e8] sm:$0xff]
    %v1828 = vld [vmem:[%s3 + $0x7f0] sm:$0xff]
    %v1829 = vld [vmem:[%s3 + $0x7f8] sm:$0xff]
    %v1830 = vld [vmem:[%s3 + $0x800] sm:$0xff]
    %v1831 = vld [vmem:[%s3 + $0x808] sm:$0xff]
    %v1832 = vld [vmem:[%s3 + $0x810] sm:$0xff]
    %v1833 = vld [vmem:[%s3 + $0x818] sm:$0xff]
    %v1834 = vld [vmem:[%s3 + $0x820] sm:$0xff]
    %v1835 = vld [vmem:[%s3 + $0x828] sm:$0xff]
    %v1836 = vld [vmem:[%s3 + $0x830] sm:$0xff]
    %v1837 = vld [vmem:[%s3 + $0x838] sm:$0xff]
    %v1838 = vld [vmem:[%s3 + $0x840] sm:$0xff]
    %v1839 = vld [vmem:[%s3 + $0x848] sm:$0xff]
    %v1840 = vld [vmem:[%s3 + $0x850] sm:$0xff]
    %v1841 = vld [vmem:[%s3 + $0x858] sm:$0xff]
    %v1842 = vld [vmem:[%s3 + $0x860] sm:$0xff]
    %v1843 = vld [vmem:[%s3 + $0x868] sm:$0xff]
    %v1844 = vld [vmem:[%s3 + $0x870] sm:$0xff]
    %v1845 = vld [vmem:[%s3 + $0x878] sm:$0xff]
    %s1846 = scalar_lea.vmem %s3, 2176
    %v1847 = vld [vmem:[%s1846] ss:$8 sm:$0xf]
    %v1848 = vld [vmem:[%s1846] ss:$8 sm:$0xf0]
    %v1849 = vor.u32 %v1847, %v1848
    %s1850 = scalar_lea.vmem %s3, 2240
    %v1851 = vld [vmem:[%s1850] ss:$8 sm:$0xf]
    %v1852 = vld [vmem:[%s1850] ss:$8 sm:$0xf0]
    %v1853 = vor.u32 %v1851, %v1852
    %v1854 = vld [vmem:[%s4 + $0x800] sm:$0xff]
    %v1855 = vld [vmem:[%s4 + $0x808] sm:$0xff]
    %v1856 = vld [vmem:[%s4 + $0x810] sm:$0xff]
    %v1857 = vld [vmem:[%s4 + $0x818] sm:$0xff]
    %v1858 = vld [vmem:[%s4 + $0x820] sm:$0xff]
    %v1859 = vld [vmem:[%s4 + $0x828] sm:$0xff]
    %v1860 = vld [vmem:[%s4 + $0x830] sm:$0xff]
    %v1861 = vld [vmem:[%s4 + $0x838] sm:$0xff]
    %v1862 = vld [vmem:[%s4 + $0x840] sm:$0xff]
    %v1863 = vld [vmem:[%s4 + $0x848] sm:$0xff]
    %v1864 = vld [vmem:[%s4 + $0x850] sm:$0xff]
    %v1865 = vld [vmem:[%s4 + $0x858] sm:$0xff]
    %v1866 = vld [vmem:[%s4 + $0x860] sm:$0xff]
    %v1867 = vld [vmem:[%s4 + $0x868] sm:$0xff]
    %v1868 = vld [vmem:[%s4 + $0x870] sm:$0xff]
    %v1869 = vld [vmem:[%s4 + $0x878] sm:$0xff]
    %v1870 = vld [vmem:[%s4 + $0x880] sm:$0xff]
    %v1871 = vld [vmem:[%s4 + $0x888] sm:$0xff]
    %v1872 = vld [vmem:[%s4 + $0x890] sm:$0xff]
    %v1873 = vld [vmem:[%s4 + $0x898] sm:$0xff]
    %v1874 = vld [vmem:[%s4 + $0x8a0] sm:$0xff]
    %v1875 = vld [vmem:[%s4 + $0x8a8] sm:$0xff]
    %v1876 = vld [vmem:[%s4 + $0x8b0] sm:$0xff]
    %v1877 = vld [vmem:[%s4 + $0x8b8] sm:$0xff]
    %v1878 = vld [vmem:[%s4 + $0x8c0] sm:$0xff]
    %v1879 = vld [vmem:[%s4 + $0x8c8] sm:$0xff]
    %v1880 = vld [vmem:[%s4 + $0x8d0] sm:$0xff]
    %v1881 = vld [vmem:[%s4 + $0x8d8] sm:$0xff]
    %v1882 = vld [vmem:[%s4 + $0x8e0] sm:$0xff]
    %v1883 = vld [vmem:[%s4 + $0x8e8] sm:$0xff]
    %v1884 = vld [vmem:[%s4 + $0x8f0] sm:$0xff]
    %v1885 = vld [vmem:[%s4 + $0x8f8] sm:$0xff]
    %v1886 = vld [vmem:[%s4 + $0x900] sm:$0xff]
    %v1887 = vld [vmem:[%s4 + $0x908] sm:$0xff]
    %v1888 = vld [vmem:[%s4 + $0x910] sm:$0xff]
    %v1889 = vld [vmem:[%s4 + $0x918] sm:$0xff]
    %v1890 = vld [vmem:[%s4 + $0x920] sm:$0xff]
    %v1891 = vld [vmem:[%s4 + $0x928] sm:$0xff]
    %v1892 = vld [vmem:[%s4 + $0x930] sm:$0xff]
    %v1893 = vld [vmem:[%s4 + $0x938] sm:$0xff]
    %v1894 = vld [vmem:[%s4 + $0x940] sm:$0xff]
    %v1895 = vld [vmem:[%s4 + $0x948] sm:$0xff]
    %v1896 = vld [vmem:[%s4 + $0x950] sm:$0xff]
    %v1897 = vld [vmem:[%s4 + $0x958] sm:$0xff]
    %v1898 = vld [vmem:[%s4 + $0x960] sm:$0xff]
    %v1899 = vld [vmem:[%s4 + $0x968] sm:$0xff]
    %v1900 = vld [vmem:[%s4 + $0x970] sm:$0xff]
    %v1901 = vld [vmem:[%s4 + $0x978] sm:$0xff]
    %v1902 = vld [vmem:[%s4 + $0x980] sm:$0xff]
    %v1903 = vld [vmem:[%s4 + $0x988] sm:$0xff]
    %v1904 = vld [vmem:[%s4 + $0x990] sm:$0xff]
    %v1905 = vld [vmem:[%s4 + $0x998] sm:$0xff]
    %v1906 = vld [vmem:[%s4 + $0x9a0] sm:$0xff]
    %v1907 = vld [vmem:[%s4 + $0x9a8] sm:$0xff]
    %v1908 = vld [vmem:[%s4 + $0x9b0] sm:$0xff]
    %v1909 = vld [vmem:[%s4 + $0x9b8] sm:$0xff]
    %v1910 = vld [vmem:[%s4 + $0x9c0] sm:$0xff]
    %v1911 = vld [vmem:[%s4 + $0x9c8] sm:$0xff]
    %v1912 = vld [vmem:[%s4 + $0x9d0] sm:$0xff]
    %v1913 = vld [vmem:[%s4 + $0x9d8] sm:$0xff]
    %v1914 = vld [vmem:[%s4 + $0x9e0] sm:$0xff]
    %v1915 = vld [vmem:[%s4 + $0x9e8] sm:$0xff]
    %v1916 = vld [vmem:[%s4 + $0x9f0] sm:$0xff]
    %v1917 = vld [vmem:[%s4 + $0x9f8] sm:$0xff]
    %v1918 = vld [vmem:[%s4 + $0xa00] sm:$0xff]
    %v1919 = vld [vmem:[%s4 + $0xa08] sm:$0xff]
    %v1920 = vld [vmem:[%s4 + $0xa10] sm:$0xff]
    %v1921 = vld [vmem:[%s4 + $0xa18] sm:$0xff]
    %v1922 = vld [vmem:[%s4 + $0xa20] sm:$0xff]
    %v1923 = vld [vmem:[%s4 + $0xa28] sm:$0xff]
    %v1924 = vld [vmem:[%s4 + $0xa30] sm:$0xff]
    %v1925 = vld [vmem:[%s4 + $0xa38] sm:$0xff]
    %v1926 = vld [vmem:[%s4 + $0xa40] sm:$0xff]
    %v1927 = vld [vmem:[%s4 + $0xa48] sm:$0xff]
    %v1928 = vld [vmem:[%s4 + $0xa50] sm:$0xff]
    %v1929 = vld [vmem:[%s4 + $0xa58] sm:$0xff]
    %v1930 = vld [vmem:[%s4 + $0xa60] sm:$0xff]
    %v1931 = vld [vmem:[%s4 + $0xa68] sm:$0xff]
    %v1932 = vld [vmem:[%s4 + $0xa70] sm:$0xff]
    %v1933 = vld [vmem:[%s4 + $0xa78] sm:$0xff]
    %v1934 = vld [vmem:[%s4 + $0xa80] sm:$0xff]
    %v1935 = vld [vmem:[%s4 + $0xa88] sm:$0xff]
    %v1936 = vld [vmem:[%s4 + $0xa90] sm:$0xff]
    %v1937 = vld [vmem:[%s4 + $0xa98] sm:$0xff]
    %v1938 = vld [vmem:[%s4 + $0xaa0] sm:$0xff]
    %v1939 = vld [vmem:[%s4 + $0xaa8] sm:$0xff]
    %v1940 = vld [vmem:[%s4 + $0xab0] sm:$0xff]
    %v1941 = vld [vmem:[%s4 + $0xab8] sm:$0xff]
    %v1942 = vld [vmem:[%s4 + $0xac0] sm:$0xff]
    %v1943 = vld [vmem:[%s4 + $0xac8] sm:$0xff]
    %v1944 = vld [vmem:[%s4 + $0xad0] sm:$0xff]
    %v1945 = vld [vmem:[%s4 + $0xad8] sm:$0xff]
    %v1946 = vld [vmem:[%s4 + $0xae0] sm:$0xff]
    %v1947 = vld [vmem:[%s4 + $0xae8] sm:$0xff]
    %v1948 = vld [vmem:[%s4 + $0xaf0] sm:$0xff]
    %v1949 = vld [vmem:[%s4 + $0xaf8] sm:$0xff]
    %v1950 = vld [vmem:[%s4 + $0xb00] sm:$0xff]
    %v1951 = vld [vmem:[%s4 + $0xb08] sm:$0xff]
    %v1952 = vld [vmem:[%s4 + $0xb10] sm:$0xff]
    %v1953 = vld [vmem:[%s4 + $0xb18] sm:$0xff]
    %v1954 = vld [vmem:[%s4 + $0xb20] sm:$0xff]
    %v1955 = vld [vmem:[%s4 + $0xb28] sm:$0xff]
    %v1956 = vld [vmem:[%s4 + $0xb30] sm:$0xff]
    %v1957 = vld [vmem:[%s4 + $0xb38] sm:$0xff]
    %v1958 = vld [vmem:[%s4 + $0xb40] sm:$0xff]
    %v1959 = vld [vmem:[%s4 + $0xb48] sm:$0xff]
    %v1960 = vld [vmem:[%s4 + $0xb50] sm:$0xff]
    %v1961 = vld [vmem:[%s4 + $0xb58] sm:$0xff]
    %v1962 = vld [vmem:[%s4 + $0xb60] sm:$0xff]
    %v1963 = vld [vmem:[%s4 + $0xb68] sm:$0xff]
    %v1964 = vld [vmem:[%s4 + $0xb70] sm:$0xff]
    %v1965 = vld [vmem:[%s4 + $0xb78] sm:$0xff]
    %v1966 = vld [vmem:[%s4 + $0xb80] sm:$0xff]
    %v1967 = vld [vmem:[%s4 + $0xb88] sm:$0xff]
    %v1968 = vld [vmem:[%s4 + $0xb90] sm:$0xff]
    %v1969 = vld [vmem:[%s4 + $0xb98] sm:$0xff]
    %v1970 = vld [vmem:[%s4 + $0xba0] sm:$0xff]
    %v1971 = vld [vmem:[%s4 + $0xba8] sm:$0xff]
    %v1972 = vld [vmem:[%s4 + $0xbb0] sm:$0xff]
    %v1973 = vld [vmem:[%s4 + $0xbb8] sm:$0xff]
    %v1974 = vld [vmem:[%s4 + $0xbc0] sm:$0xff]
    %v1975 = vld [vmem:[%s4 + $0xbc8] sm:$0xff]
    %v1976 = vld [vmem:[%s4 + $0xbd0] sm:$0xff]
    %v1977 = vld [vmem:[%s4 + $0xbd8] sm:$0xff]
    %v1978 = vld [vmem:[%s4 + $0xbe0] sm:$0xff]
    %v1979 = vld [vmem:[%s4 + $0xbe8] sm:$0xff]
    %v1980 = vld [vmem:[%s4 + $0xbf0] sm:$0xff]
    %v1981 = vld [vmem:[%s4 + $0xbf8] sm:$0xff]
    %v1982 = vld [vmem:[%s4 + $0xc00] sm:$0xff]
    %v1983 = vld [vmem:[%s4 + $0xc08] sm:$0xff]
    %v1984 = vld [vmem:[%s4 + $0xc10] sm:$0xff]
    %v1985 = vld [vmem:[%s4 + $0xc18] sm:$0xff]
    %v1986 = vld [vmem:[%s4 + $0xc20] sm:$0xff]
    %v1987 = vld [vmem:[%s4 + $0xc28] sm:$0xff]
    %v1988 = vld [vmem:[%s4 + $0xc30] sm:$0xff]
    %v1989 = vld [vmem:[%s4 + $0xc38] sm:$0xff]
    %v1990 = vld [vmem:[%s4 + $0xc40] sm:$0xff]
    %v1991 = vld [vmem:[%s4 + $0xc48] sm:$0xff]
    %v1992 = vld [vmem:[%s4 + $0xc50] sm:$0xff]
    %v1993 = vld [vmem:[%s4 + $0xc58] sm:$0xff]
    %v1994 = vld [vmem:[%s4 + $0xc60] sm:$0xff]
    %v1995 = vld [vmem:[%s4 + $0xc68] sm:$0xff]
    %v1996 = vld [vmem:[%s4 + $0xc70] sm:$0xff]
    %v1997 = vld [vmem:[%s4 + $0xc78] sm:$0xff]
    %v1998 = vld [vmem:[%s4 + $0xc80] sm:$0xff]
    %v1999 = vld [vmem:[%s4 + $0xc88] sm:$0xff]
    %v2000 = vld [vmem:[%s4 + $0xc90] sm:$0xff]
    %v2001 = vld [vmem:[%s4 + $0xc98] sm:$0xff]
    %v2002 = vld [vmem:[%s4 + $0xca0] sm:$0xff]
    %v2003 = vld [vmem:[%s4 + $0xca8] sm:$0xff]
    %v2004 = vld [vmem:[%s4 + $0xcb0] sm:$0xff]
    %v2005 = vld [vmem:[%s4 + $0xcb8] sm:$0xff]
    %v2006 = vld [vmem:[%s4 + $0xcc0] sm:$0xff]
    %v2007 = vld [vmem:[%s4 + $0xcc8] sm:$0xff]
    %v2008 = vld [vmem:[%s4 + $0xcd0] sm:$0xff]
    %v2009 = vld [vmem:[%s4 + $0xcd8] sm:$0xff]
    %v2010 = vld [vmem:[%s4 + $0xce0] sm:$0xff]
    %v2011 = vld [vmem:[%s4 + $0xce8] sm:$0xff]
    %v2012 = vld [vmem:[%s4 + $0xcf0] sm:$0xff]
    %v2013 = vld [vmem:[%s4 + $0xcf8] sm:$0xff]
    %v2014 = vld [vmem:[%s4 + $0xd00] sm:$0xff]
    %v2015 = vld [vmem:[%s4 + $0xd08] sm:$0xff]
    %v2016 = vld [vmem:[%s4 + $0xd10] sm:$0xff]
    %v2017 = vld [vmem:[%s4 + $0xd18] sm:$0xff]
    %v2018 = vld [vmem:[%s4 + $0xd20] sm:$0xff]
    %v2019 = vld [vmem:[%s4 + $0xd28] sm:$0xff]
    %v2020 = vld [vmem:[%s4 + $0xd30] sm:$0xff]
    %v2021 = vld [vmem:[%s4 + $0xd38] sm:$0xff]
    %v2022 = vld [vmem:[%s4 + $0xd40] sm:$0xff]
    %v2023 = vld [vmem:[%s4 + $0xd48] sm:$0xff]
    %v2024 = vld [vmem:[%s4 + $0xd50] sm:$0xff]
    %v2025 = vld [vmem:[%s4 + $0xd58] sm:$0xff]
    %v2026 = vld [vmem:[%s4 + $0xd60] sm:$0xff]
    %v2027 = vld [vmem:[%s4 + $0xd68] sm:$0xff]
    %v2028 = vld [vmem:[%s4 + $0xd70] sm:$0xff]
    %v2029 = vld [vmem:[%s4 + $0xd78] sm:$0xff]
    %v2030 = vld [vmem:[%s4 + $0xd80] sm:$0xff]
    %v2031 = vld [vmem:[%s4 + $0xd88] sm:$0xff]
    %v2032 = vld [vmem:[%s4 + $0xd90] sm:$0xff]
    %v2033 = vld [vmem:[%s4 + $0xd98] sm:$0xff]
    %v2034 = vld [vmem:[%s4 + $0xda0] sm:$0xff]
    %v2035 = vld [vmem:[%s4 + $0xda8] sm:$0xff]
    %v2036 = vld [vmem:[%s4 + $0xdb0] sm:$0xff]
    %v2037 = vld [vmem:[%s4 + $0xdb8] sm:$0xff]
    %v2038 = vld [vmem:[%s4 + $0xdc0] sm:$0xff]
    %v2039 = vld [vmem:[%s4 + $0xdc8] sm:$0xff]
    %v2040 = vld [vmem:[%s4 + $0xdd0] sm:$0xff]
    %v2041 = vld [vmem:[%s4 + $0xdd8] sm:$0xff]
    %v2042 = vld [vmem:[%s4 + $0xde0] sm:$0xff]
    %v2043 = vld [vmem:[%s4 + $0xde8] sm:$0xff]
    %v2044 = vld [vmem:[%s4 + $0xdf0] sm:$0xff]
    %v2045 = vld [vmem:[%s4 + $0xdf8] sm:$0xff]
    %v2046 = vld [vmem:[%s4 + $0xe00] sm:$0xff]
    %v2047 = vld [vmem:[%s4 + $0xe08] sm:$0xff]
    %v2048 = vld [vmem:[%s4 + $0xe10] sm:$0xff]
    %v2049 = vld [vmem:[%s4 + $0xe18] sm:$0xff]
    %v2050 = vld [vmem:[%s4 + $0xe20] sm:$0xff]
    %v2051 = vld [vmem:[%s4 + $0xe28] sm:$0xff]
    %v2052 = vld [vmem:[%s4 + $0xe30] sm:$0xff]
    %v2053 = vld [vmem:[%s4 + $0xe38] sm:$0xff]
    %v2054 = vld [vmem:[%s4 + $0xe40] sm:$0xff]
    %v2055 = vld [vmem:[%s4 + $0xe48] sm:$0xff]
    %v2056 = vld [vmem:[%s4 + $0xe50] sm:$0xff]
    %v2057 = vld [vmem:[%s4 + $0xe58] sm:$0xff]
    %v2058 = vld [vmem:[%s4 + $0xe60] sm:$0xff]
    %v2059 = vld [vmem:[%s4 + $0xe68] sm:$0xff]
    %v2060 = vld [vmem:[%s4 + $0xe70] sm:$0xff]
    %v2061 = vld [vmem:[%s4 + $0xe78] sm:$0xff]
    %v2062 = vld [vmem:[%s4 + $0xe80] sm:$0xff]
    %v2063 = vld [vmem:[%s4 + $0xe88] sm:$0xff]
    %v2064 = vld [vmem:[%s4 + $0xe90] sm:$0xff]
    %v2065 = vld [vmem:[%s4 + $0xe98] sm:$0xff]
    %v2066 = vld [vmem:[%s4 + $0xea0] sm:$0xff]
    %v2067 = vld [vmem:[%s4 + $0xea8] sm:$0xff]
    %v2068 = vld [vmem:[%s4 + $0xeb0] sm:$0xff]
    %v2069 = vld [vmem:[%s4 + $0xeb8] sm:$0xff]
    %v2070 = vld [vmem:[%s4 + $0xec0] sm:$0xff]
    %v2071 = vld [vmem:[%s4 + $0xec8] sm:$0xff]
    %v2072 = vld [vmem:[%s4 + $0xed0] sm:$0xff]
    %v2073 = vld [vmem:[%s4 + $0xed8] sm:$0xff]
    %v2074 = vld [vmem:[%s4 + $0xee0] sm:$0xff]
    %v2075 = vld [vmem:[%s4 + $0xee8] sm:$0xff]
    %v2076 = vld [vmem:[%s4 + $0xef0] sm:$0xff]
    %v2077 = vld [vmem:[%s4 + $0xef8] sm:$0xff]
    %v2078 = vld [vmem:[%s4 + $0xf00] sm:$0xff]
    %v2079 = vld [vmem:[%s4 + $0xf08] sm:$0xff]
    %v2080 = vld [vmem:[%s4 + $0xf10] sm:$0xff]
    %v2081 = vld [vmem:[%s4 + $0xf18] sm:$0xff]
    %v2082 = vld [vmem:[%s4 + $0xf20] sm:$0xff]
    %v2083 = vld [vmem:[%s4 + $0xf28] sm:$0xff]
    %v2084 = vld [vmem:[%s4 + $0xf30] sm:$0xff]
    %v2085 = vld [vmem:[%s4 + $0xf38] sm:$0xff]
    %v2086 = vld [vmem:[%s4 + $0xf40] sm:$0xff]
    %v2087 = vld [vmem:[%s4 + $0xf48] sm:$0xff]
    %v2088 = vld [vmem:[%s4 + $0xf50] sm:$0xff]
    %v2089 = vld [vmem:[%s4 + $0xf58] sm:$0xff]
    %v2090 = vld [vmem:[%s4 + $0xf60] sm:$0xff]
    %v2091 = vld [vmem:[%s4 + $0xf68] sm:$0xff]
    %v2092 = vld [vmem:[%s4 + $0xf70] sm:$0xff]
    %v2093 = vld [vmem:[%s4 + $0xf78] sm:$0xff]
    %v2094 = vld [vmem:[%s4 + $0xf80] sm:$0xff]
    %v2095 = vld [vmem:[%s4 + $0xf88] sm:$0xff]
    %v2096 = vld [vmem:[%s4 + $0xf90] sm:$0xff]
    %v2097 = vld [vmem:[%s4 + $0xf98] sm:$0xff]
    %v2098 = vld [vmem:[%s4 + $0xfa0] sm:$0xff]
    %v2099 = vld [vmem:[%s4 + $0xfa8] sm:$0xff]
    %v2100 = vld [vmem:[%s4 + $0xfb0] sm:$0xff]
    %v2101 = vld [vmem:[%s4 + $0xfb8] sm:$0xff]
    %v2102 = vld [vmem:[%s4 + $0xfc0] sm:$0xff]
    %v2103 = vld [vmem:[%s4 + $0xfc8] sm:$0xff]
    %v2104 = vld [vmem:[%s4 + $0xfd0] sm:$0xff]
    %v2105 = vld [vmem:[%s4 + $0xfd8] sm:$0xff]
    %v2106 = vld [vmem:[%s4 + $0xfe0] sm:$0xff]
    %v2107 = vld [vmem:[%s4 + $0xfe8] sm:$0xff]
    %v2108 = vld [vmem:[%s4 + $0xff0] sm:$0xff]
    %v2109 = vld [vmem:[%s4 + $0xff8] sm:$0xff]
    %v2112 = vperm.slane %v1849, 0
    %v2113 = vperm.slane %v1849, 1
    %v2114 = vperm.slane %v1849, 2
    %v2115 = vperm.slane %v1849, 3
    %v2116 = vperm.slane %v1849, 4
    %v2117 = vperm.slane %v1849, 5
    %v2118 = vperm.slane %v1849, 6
    %v2119 = vperm.slane %v1849, 7
    %v2120 = vperm.slane %v1853, 0
    %v2121 = vperm.slane %v1853, 1
    %v2122 = vperm.slane %v1853, 2
    %v2123 = vperm.slane %v1853, 3
    %v2124 = vperm.slane %v1853, 4
    %v2125 = vperm.slane %v1853, 5
    %v2126 = vperm.slane %v1853, 6
    %v2127 = vperm.slane %v1853, 7
    %v2145 = vsel %vm70, %v1717, 0
    %2147 = vmatpush.msra.mxu0 0.0
    %2148 = vmatpush.msra.mxu0 0.0
    %2149 = vmatpush.msra.mxu0 0.0
    %2150 = vmatpush.msra.mxu0 0.0
    %2151 = vmatpush.msra.mxu0 0.0
    %2152 = vmatpush.msra.mxu0 0.0
    %2153 = vmatpush.msra.mxu0 0.0
    %2154 = vmatpush.msra.mxu0 0.0
    %2155 = vmatpush.msra.mxu0 %v1830
    %2156 = vmatpush.msra.mxu0 %v1814
    %2157 = vmatpush.msra.mxu0 %v1798
    %2158 = vmatpush.msra.mxu0 %v1782
    %2159 = vmatpush.msra.mxu0 %v1766
    %2160 = vmatpush.msra.mxu0 %v1750
    %2161 = vmatpush.msra.mxu0 %v1734
    %2162 = vmatpush.msra.mxu0 %v1718
    %2163 = vmatmul.f32.gmra.mxu0 %v2145
    %v2164 = vpop.f32.mrf.mxu0
    %v2165 = vadd.f32 %v2112, %v2164
    %2166 = vdwg.mxu0
    %2167 = vmatpush.msra.mxu0 0.0
    %2168 = vmatpush.msra.mxu0 0.0
    %2169 = vmatpush.msra.mxu0 0.0
    %2170 = vmatpush.msra.mxu0 0.0
    %2171 = vmatpush.msra.mxu0 0.0
    %2172 = vmatpush.msra.mxu0 0.0
    %2173 = vmatpush.msra.mxu0 0.0
    %2174 = vmatpush.msra.mxu0 0.0
    %2175 = vmatpush.msra.mxu0 %v1831
    %2176 = vmatpush.msra.mxu0 %v1815
    %2177 = vmatpush.msra.mxu0 %v1799
    %2178 = vmatpush.msra.mxu0 %v1783
    %2179 = vmatpush.msra.mxu0 %v1767
    %2180 = vmatpush.msra.mxu0 %v1751
    %2181 = vmatpush.msra.mxu0 %v1735
    %2182 = vmatpush.msra.mxu0 %v1719
    %2183 = vmatmul.f32.gmra.mxu0 %v2145
    %v2184 = vpop.f32.mrf.mxu0
    %v2185 = vadd.f32 %v2113, %v2184
    %2186 = vdwg.mxu0
    %2187 = vmatpush.msra.mxu0 0.0
    %2188 = vmatpush.msra.mxu0 0.0
    %2189 = vmatpush.msra.mxu0 0.0
    %2190 = vmatpush.msra.mxu0 0.0
    %2191 = vmatpush.msra.mxu0 0.0
    %2192 = vmatpush.msra.mxu0 0.0
    %2193 = vmatpush.msra.mxu0 0.0
    %2194 = vmatpush.msra.mxu0 0.0
    %2195 = vmatpush.msra.mxu0 %v1832
    %2196 = vmatpush.msra.mxu0 %v1816
    %2197 = vmatpush.msra.mxu0 %v1800
    %2198 = vmatpush.msra.mxu0 %v1784
    %2199 = vmatpush.msra.mxu0 %v1768
    %2200 = vmatpush.msra.mxu0 %v1752
    %2201 = vmatpush.msra.mxu0 %v1736
    %2202 = vmatpush.msra.mxu0 %v1720
    %2203 = vmatmul.f32.gmra.mxu0 %v2145
    %v2204 = vpop.f32.mrf.mxu0
    %v2205 = vadd.f32 %v2114, %v2204
    %2206 = vdwg.mxu0
    %2207 = vmatpush.msra.mxu0 0.0
    %2208 = vmatpush.msra.mxu0 0.0
    %2209 = vmatpush.msra.mxu0 0.0
    %2210 = vmatpush.msra.mxu0 0.0
    %2211 = vmatpush.msra.mxu0 0.0
    %2212 = vmatpush.msra.mxu0 0.0
    %2213 = vmatpush.msra.mxu0 0.0
    %2214 = vmatpush.msra.mxu0 0.0
    %2215 = vmatpush.msra.mxu0 %v1833
    %2216 = vmatpush.msra.mxu0 %v1817
    %2217 = vmatpush.msra.mxu0 %v1801
    %2218 = vmatpush.msra.mxu0 %v1785
    %2219 = vmatpush.msra.mxu0 %v1769
    %2220 = vmatpush.msra.mxu0 %v1753
    %2221 = vmatpush.msra.mxu0 %v1737
    %2222 = vmatpush.msra.mxu0 %v1721
    %2223 = vmatmul.f32.gmra.mxu0 %v2145
    %v2224 = vpop.f32.mrf.mxu0
    %v2225 = vadd.f32 %v2115, %v2224
    %2226 = vdwg.mxu0
    %2227 = vmatpush.msra.mxu0 0.0
    %2228 = vmatpush.msra.mxu0 0.0
    %2229 = vmatpush.msra.mxu0 0.0
    %2230 = vmatpush.msra.mxu0 0.0
    %2231 = vmatpush.msra.mxu0 0.0
    %2232 = vmatpush.msra.mxu0 0.0
    %2233 = vmatpush.msra.mxu0 0.0
    %2234 = vmatpush.msra.mxu0 0.0
    %2235 = vmatpush.msra.mxu0 %v1834
    %2236 = vmatpush.msra.mxu0 %v1818
    %2237 = vmatpush.msra.mxu0 %v1802
    %2238 = vmatpush.msra.mxu0 %v1786
    %2239 = vmatpush.msra.mxu0 %v1770
    %2240 = vmatpush.msra.mxu0 %v1754
    %2241 = vmatpush.msra.mxu0 %v1738
    %2242 = vmatpush.msra.mxu0 %v1722
    %2243 = vmatmul.f32.gmra.mxu0 %v2145
    %v2244 = vpop.f32.mrf.mxu0
    %v2245 = vadd.f32 %v2116, %v2244
    %2246 = vdwg.mxu0
    %2247 = vmatpush.msra.mxu0 0.0
    %2248 = vmatpush.msra.mxu0 0.0
    %2249 = vmatpush.msra.mxu0 0.0
    %2250 = vmatpush.msra.mxu0 0.0
    %2251 = vmatpush.msra.mxu0 0.0
    %2252 = vmatpush.msra.mxu0 0.0
    %2253 = vmatpush.msra.mxu0 0.0
    %2254 = vmatpush.msra.mxu0 0.0
    %2255 = vmatpush.msra.mxu0 %v1835
    %2256 = vmatpush.msra.mxu0 %v1819
    %2257 = vmatpush.msra.mxu0 %v1803
    %2258 = vmatpush.msra.mxu0 %v1787
    %2259 = vmatpush.msra.mxu0 %v1771
    %2260 = vmatpush.msra.mxu0 %v1755
    %2261 = vmatpush.msra.mxu0 %v1739
    %2262 = vmatpush.msra.mxu0 %v1723
    %2263 = vmatmul.f32.gmra.mxu0 %v2145
    %v2264 = vpop.f32.mrf.mxu0
    %v2265 = vadd.f32 %v2117, %v2264
    %2266 = vdwg.mxu0
    %2267 = vmatpush.msra.mxu0 0.0
    %2268 = vmatpush.msra.mxu0 0.0
    %2269 = vmatpush.msra.mxu0 0.0
    %2270 = vmatpush.msra.mxu0 0.0
    %2271 = vmatpush.msra.mxu0 0.0
    %2272 = vmatpush.msra.mxu0 0.0
    %2273 = vmatpush.msra.mxu0 0.0
    %2274 = vmatpush.msra.mxu0 0.0
    %2275 = vmatpush.msra.mxu0 %v1836
    %2276 = vmatpush.msra.mxu0 %v1820
    %2277 = vmatpush.msra.mxu0 %v1804
    %2278 = vmatpush.msra.mxu0 %v1788
    %2279 = vmatpush.msra.mxu0 %v1772
    %2280 = vmatpush.msra.mxu0 %v1756
    %2281 = vmatpush.msra.mxu0 %v1740
    %2282 = vmatpush.msra.mxu0 %v1724
    %2283 = vmatmul.f32.gmra.mxu0 %v2145
    %v2284 = vpop.f32.mrf.mxu0
    %v2285 = vadd.f32 %v2118, %v2284
    %2286 = vdwg.mxu0
    %2287 = vmatpush.msra.mxu0 0.0
    %2288 = vmatpush.msra.mxu0 0.0
    %2289 = vmatpush.msra.mxu0 0.0
    %2290 = vmatpush.msra.mxu0 0.0
    %2291 = vmatpush.msra.mxu0 0.0
    %2292 = vmatpush.msra.mxu0 0.0
    %2293 = vmatpush.msra.mxu0 0.0
    %2294 = vmatpush.msra.mxu0 0.0
    %2295 = vmatpush.msra.mxu0 %v1837
    %2296 = vmatpush.msra.mxu0 %v1821
    %2297 = vmatpush.msra.mxu0 %v1805
    %2298 = vmatpush.msra.mxu0 %v1789
    %2299 = vmatpush.msra.mxu0 %v1773
    %2300 = vmatpush.msra.mxu0 %v1757
    %2301 = vmatpush.msra.mxu0 %v1741
    %2302 = vmatpush.msra.mxu0 %v1725
    %2303 = vmatmul.f32.gmra.mxu0 %v2145
    %v2304 = vpop.f32.mrf.mxu0
    %v2305 = vadd.f32 %v2119, %v2304
    %2306 = vdwg.mxu0
    %2307 = vmatpush.msra.mxu0 0.0
    %2308 = vmatpush.msra.mxu0 0.0
    %2309 = vmatpush.msra.mxu0 0.0
    %2310 = vmatpush.msra.mxu0 0.0
    %2311 = vmatpush.msra.mxu0 0.0
    %2312 = vmatpush.msra.mxu0 0.0
    %2313 = vmatpush.msra.mxu0 0.0
    %2314 = vmatpush.msra.mxu0 0.0
    %2315 = vmatpush.msra.mxu0 %v1838
    %2316 = vmatpush.msra.mxu0 %v1822
    %2317 = vmatpush.msra.mxu0 %v1806
    %2318 = vmatpush.msra.mxu0 %v1790
    %2319 = vmatpush.msra.mxu0 %v1774
    %2320 = vmatpush.msra.mxu0 %v1758
    %2321 = vmatpush.msra.mxu0 %v1742
    %2322 = vmatpush.msra.mxu0 %v1726
    %2323 = vmatmul.f32.gmra.mxu0 %v2145
    %v2324 = vpop.f32.mrf.mxu0
    %v2325 = vadd.f32 %v2120, %v2324
    %2326 = vdwg.mxu0
    %2327 = vmatpush.msra.mxu0 0.0
    %2328 = vmatpush.msra.mxu0 0.0
    %2329 = vmatpush.msra.mxu0 0.0
    %2330 = vmatpush.msra.mxu0 0.0
    %2331 = vmatpush.msra.mxu0 0.0
    %2332 = vmatpush.msra.mxu0 0.0
    %2333 = vmatpush.msra.mxu0 0.0
    %2334 = vmatpush.msra.mxu0 0.0
    %2335 = vmatpush.msra.mxu0 %v1839
    %2336 = vmatpush.msra.mxu0 %v1823
    %2337 = vmatpush.msra.mxu0 %v1807
    %2338 = vmatpush.msra.mxu0 %v1791
    %2339 = vmatpush.msra.mxu0 %v1775
    %2340 = vmatpush.msra.mxu0 %v1759
    %2341 = vmatpush.msra.mxu0 %v1743
    %2342 = vmatpush.msra.mxu0 %v1727
    %2343 = vmatmul.f32.gmra.mxu0 %v2145
    %v2344 = vpop.f32.mrf.mxu0
    %v2345 = vadd.f32 %v2121, %v2344
    %2346 = vdwg.mxu0
    %2347 = vmatpush.msra.mxu0 0.0
    %2348 = vmatpush.msra.mxu0 0.0
    %2349 = vmatpush.msra.mxu0 0.0
    %2350 = vmatpush.msra.mxu0 0.0
    %2351 = vmatpush.msra.mxu0 0.0
    %2352 = vmatpush.msra.mxu0 0.0
    %2353 = vmatpush.msra.mxu0 0.0
    %2354 = vmatpush.msra.mxu0 0.0
    %2355 = vmatpush.msra.mxu0 %v1840
    %2356 = vmatpush.msra.mxu0 %v1824
    %2357 = vmatpush.msra.mxu0 %v1808
    %2358 = vmatpush.msra.mxu0 %v1792
    %2359 = vmatpush.msra.mxu0 %v1776
    %2360 = vmatpush.msra.mxu0 %v1760
    %2361 = vmatpush.msra.mxu0 %v1744
    %2362 = vmatpush.msra.mxu0 %v1728
    %2363 = vmatmul.f32.gmra.mxu0 %v2145
    %v2364 = vpop.f32.mrf.mxu0
    %v2365 = vadd.f32 %v2122, %v2364
    %2366 = vdwg.mxu0
    %2367 = vmatpush.msra.mxu0 0.0
    %2368 = vmatpush.msra.mxu0 0.0
    %2369 = vmatpush.msra.mxu0 0.0
    %2370 = vmatpush.msra.mxu0 0.0
    %2371 = vmatpush.msra.mxu0 0.0
    %2372 = vmatpush.msra.mxu0 0.0
    %2373 = vmatpush.msra.mxu0 0.0
    %2374 = vmatpush.msra.mxu0 0.0
    %2375 = vmatpush.msra.mxu0 %v1841
    %2376 = vmatpush.msra.mxu0 %v1825
    %2377 = vmatpush.msra.mxu0 %v1809
    %2378 = vmatpush.msra.mxu0 %v1793
    %2379 = vmatpush.msra.mxu0 %v1777
    %2380 = vmatpush.msra.mxu0 %v1761
    %2381 = vmatpush.msra.mxu0 %v1745
    %2382 = vmatpush.msra.mxu0 %v1729
    %2383 = vmatmul.f32.gmra.mxu0 %v2145
    %v2384 = vpop.f32.mrf.mxu0
    %v2385 = vadd.f32 %v2123, %v2384
    %2386 = vdwg.mxu0
    %2387 = vmatpush.msra.mxu0 0.0
    %2388 = vmatpush.msra.mxu0 0.0
    %2389 = vmatpush.msra.mxu0 0.0
    %2390 = vmatpush.msra.mxu0 0.0
    %2391 = vmatpush.msra.mxu0 0.0
    %2392 = vmatpush.msra.mxu0 0.0
    %2393 = vmatpush.msra.mxu0 0.0
    %2394 = vmatpush.msra.mxu0 0.0
    %2395 = vmatpush.msra.mxu0 %v1842
    %2396 = vmatpush.msra.mxu0 %v1826
    %2397 = vmatpush.msra.mxu0 %v1810
    %2398 = vmatpush.msra.mxu0 %v1794
    %2399 = vmatpush.msra.mxu0 %v1778
    %2400 = vmatpush.msra.mxu0 %v1762
    %2401 = vmatpush.msra.mxu0 %v1746
    %2402 = vmatpush.msra.mxu0 %v1730
    %2403 = vmatmul.f32.gmra.mxu0 %v2145
    %v2404 = vpop.f32.mrf.mxu0
    %v2405 = vadd.f32 %v2124, %v2404
    %2406 = vdwg.mxu0
    %2407 = vmatpush.msra.mxu0 0.0
    %2408 = vmatpush.msra.mxu0 0.0
    %2409 = vmatpush.msra.mxu0 0.0
    %2410 = vmatpush.msra.mxu0 0.0
    %2411 = vmatpush.msra.mxu0 0.0
    %2412 = vmatpush.msra.mxu0 0.0
    %2413 = vmatpush.msra.mxu0 0.0
    %2414 = vmatpush.msra.mxu0 0.0
    %2415 = vmatpush.msra.mxu0 %v1843
    %2416 = vmatpush.msra.mxu0 %v1827
    %2417 = vmatpush.msra.mxu0 %v1811
    %2418 = vmatpush.msra.mxu0 %v1795
    %2419 = vmatpush.msra.mxu0 %v1779
    %2420 = vmatpush.msra.mxu0 %v1763
    %2421 = vmatpush.msra.mxu0 %v1747
    %2422 = vmatpush.msra.mxu0 %v1731
    %2423 = vmatmul.f32.gmra.mxu0 %v2145
    %v2424 = vpop.f32.mrf.mxu0
    %v2425 = vadd.f32 %v2125, %v2424
    %2426 = vdwg.mxu0
    %2427 = vmatpush.msra.mxu0 0.0
    %2428 = vmatpush.msra.mxu0 0.0
    %2429 = vmatpush.msra.mxu0 0.0
    %2430 = vmatpush.msra.mxu0 0.0
    %2431 = vmatpush.msra.mxu0 0.0
    %2432 = vmatpush.msra.mxu0 0.0
    %2433 = vmatpush.msra.mxu0 0.0
    %2434 = vmatpush.msra.mxu0 0.0
    %2435 = vmatpush.msra.mxu0 %v1844
    %2436 = vmatpush.msra.mxu0 %v1828
    %2437 = vmatpush.msra.mxu0 %v1812
    %2438 = vmatpush.msra.mxu0 %v1796
    %2439 = vmatpush.msra.mxu0 %v1780
    %2440 = vmatpush.msra.mxu0 %v1764
    %2441 = vmatpush.msra.mxu0 %v1748
    %2442 = vmatpush.msra.mxu0 %v1732
    %2443 = vmatmul.f32.gmra.mxu0 %v2145
    %v2444 = vpop.f32.mrf.mxu0
    %v2445 = vadd.f32 %v2126, %v2444
    %2446 = vdwg.mxu0
    %2447 = vmatpush.msra.mxu0 0.0
    %2448 = vmatpush.msra.mxu0 0.0
    %2449 = vmatpush.msra.mxu0 0.0
    %2450 = vmatpush.msra.mxu0 0.0
    %2451 = vmatpush.msra.mxu0 0.0
    %2452 = vmatpush.msra.mxu0 0.0
    %2453 = vmatpush.msra.mxu0 0.0
    %2454 = vmatpush.msra.mxu0 0.0
    %2455 = vmatpush.msra.mxu0 %v1845
    %2456 = vmatpush.msra.mxu0 %v1829
    %2457 = vmatpush.msra.mxu0 %v1813
    %2458 = vmatpush.msra.mxu0 %v1797
    %2459 = vmatpush.msra.mxu0 %v1781
    %2460 = vmatpush.msra.mxu0 %v1765
    %2461 = vmatpush.msra.mxu0 %v1749
    %2462 = vmatpush.msra.mxu0 %v1733
    %2463 = vmatmul.f32.gmra.mxu0 %v2145
    %v2464 = vpop.f32.mrf.mxu0
    %v2465 = vadd.f32 %v2127, %v2464
    %2466 = vdwg.mxu0
    %v2467 = vmax.f32 %v2165, 0.0
    %v2468 = vmax.f32 %v2185, 0.0
    %v2469 = vmax.f32 %v2205, 0.0
    %v2470 = vmax.f32 %v2225, 0.0
    %v2471 = vmax.f32 %v2245, 0.0
    %v2472 = vmax.f32 %v2265, 0.0
    %v2473 = vmax.f32 %v2285, 0.0
    %v2474 = vmax.f32 %v2305, 0.0
    %v2475 = vmax.f32 %v2325, 0.0
    %v2476 = vmax.f32 %v2345, 0.0
    %v2477 = vmax.f32 %v2365, 0.0
    %v2478 = vmax.f32 %v2385, 0.0
    %v2479 = vmax.f32 %v2405, 0.0
    %v2480 = vmax.f32 %v2425, 0.0
    %v2481 = vmax.f32 %v2445, 0.0
    %v2482 = vmax.f32 %v2465, 0.0
    %v2483 = vperm.slane %v1492, 5
    %2484 = vmatpush.msra.mxu0 %v1869
    %2485 = vmatpush.msra.mxu0 %v1868
    %2486 = vmatpush.msra.mxu0 %v1867
    %2487 = vmatpush.msra.mxu0 %v1866
    %2488 = vmatpush.msra.mxu0 %v1865
    %2489 = vmatpush.msra.mxu0 %v1864
    %2490 = vmatpush.msra.mxu0 %v1863
    %2491 = vmatpush.msra.mxu0 %v1862
    %2492 = vmatpush.msra.mxu0 %v1861
    %2493 = vmatpush.msra.mxu0 %v1860
    %2494 = vmatpush.msra.mxu0 %v1859
    %2495 = vmatpush.msra.mxu0 %v1858
    %2496 = vmatpush.msra.mxu0 %v1857
    %2497 = vmatpush.msra.mxu0 %v1856
    %2498 = vmatpush.msra.mxu0 %v1855
    %2499 = vmatpush.msra.mxu0 %v1854
    %2500 = vmatmul.f32.gmra.mxu0 %v2467
    %v2501 = vpop.f32.mrf.mxu0
    %v2502 = vadd.f32 %v2483, %v2501
    %2503 = vdwg.mxu0
    %2504 = vmatpush.msra.mxu0 %v1885
    %2505 = vmatpush.msra.mxu0 %v1884
    %2506 = vmatpush.msra.mxu0 %v1883
    %2507 = vmatpush.msra.mxu0 %v1882
    %2508 = vmatpush.msra.mxu0 %v1881
    %2509 = vmatpush.msra.mxu0 %v1880
    %2510 = vmatpush.msra.mxu0 %v1879
    %2511 = vmatpush.msra.mxu0 %v1878
    %2512 = vmatpush.msra.mxu0 %v1877
    %2513 = vmatpush.msra.mxu0 %v1876
    %2514 = vmatpush.msra.mxu0 %v1875
    %2515 = vmatpush.msra.mxu0 %v1874
    %2516 = vmatpush.msra.mxu0 %v1873
    %2517 = vmatpush.msra.mxu0 %v1872
    %2518 = vmatpush.msra.mxu0 %v1871
    %2519 = vmatpush.msra.mxu0 %v1870
    %2520 = vmatmul.f32.gmra.mxu0 %v2468
    %v2521 = vpop.f32.mrf.mxu0
    %v2522 = vadd.f32 %v2502, %v2521
    %2523 = vdwg.mxu0
    %2524 = vmatpush.msra.mxu0 %v1901
    %2525 = vmatpush.msra.mxu0 %v1900
    %2526 = vmatpush.msra.mxu0 %v1899
    %2527 = vmatpush.msra.mxu0 %v1898
    %2528 = vmatpush.msra.mxu0 %v1897
    %2529 = vmatpush.msra.mxu0 %v1896
    %2530 = vmatpush.msra.mxu0 %v1895
    %2531 = vmatpush.msra.mxu0 %v1894
    %2532 = vmatpush.msra.mxu0 %v1893
    %2533 = vmatpush.msra.mxu0 %v1892
    %2534 = vmatpush.msra.mxu0 %v1891
    %2535 = vmatpush.msra.mxu0 %v1890
    %2536 = vmatpush.msra.mxu0 %v1889
    %2537 = vmatpush.msra.mxu0 %v1888
    %2538 = vmatpush.msra.mxu0 %v1887
    %2539 = vmatpush.msra.mxu0 %v1886
    %2540 = vmatmul.f32.gmra.mxu0 %v2469
    %v2541 = vpop.f32.mrf.mxu0
    %v2542 = vadd.f32 %v2522, %v2541
    %2543 = vdwg.mxu0
    %2544 = vmatpush.msra.mxu0 %v1917
    %2545 = vmatpush.msra.mxu0 %v1916
    %2546 = vmatpush.msra.mxu0 %v1915
    %2547 = vmatpush.msra.mxu0 %v1914
    %2548 = vmatpush.msra.mxu0 %v1913
    %2549 = vmatpush.msra.mxu0 %v1912
    %2550 = vmatpush.msra.mxu0 %v1911
    %2551 = vmatpush.msra.mxu0 %v1910
    %2552 = vmatpush.msra.mxu0 %v1909
    %2553 = vmatpush.msra.mxu0 %v1908
    %2554 = vmatpush.msra.mxu0 %v1907
    %2555 = vmatpush.msra.mxu0 %v1906
    %2556 = vmatpush.msra.mxu0 %v1905
    %2557 = vmatpush.msra.mxu0 %v1904
    %2558 = vmatpush.msra.mxu0 %v1903
    %2559 = vmatpush.msra.mxu0 %v1902
    %2560 = vmatmul.f32.gmra.mxu0 %v2470
    %v2561 = vpop.f32.mrf.mxu0
    %v2562 = vadd.f32 %v2542, %v2561
    %2563 = vdwg.mxu0
    %2564 = vmatpush.msra.mxu0 %v1933
    %2565 = vmatpush.msra.mxu0 %v1932
    %2566 = vmatpush.msra.mxu0 %v1931
    %2567 = vmatpush.msra.mxu0 %v1930
    %2568 = vmatpush.msra.mxu0 %v1929
    %2569 = vmatpush.msra.mxu0 %v1928
    %2570 = vmatpush.msra.mxu0 %v1927
    %2571 = vmatpush.msra.mxu0 %v1926
    %2572 = vmatpush.msra.mxu0 %v1925
    %2573 = vmatpush.msra.mxu0 %v1924
    %2574 = vmatpush.msra.mxu0 %v1923
    %2575 = vmatpush.msra.mxu0 %v1922
    %2576 = vmatpush.msra.mxu0 %v1921
    %2577 = vmatpush.msra.mxu0 %v1920
    %2578 = vmatpush.msra.mxu0 %v1919
    %2579 = vmatpush.msra.mxu0 %v1918
    %2580 = vmatmul.f32.gmra.mxu0 %v2471
    %v2581 = vpop.f32.mrf.mxu0
    %v2582 = vadd.f32 %v2562, %v2581
    %2583 = vdwg.mxu0
    %2584 = vmatpush.msra.mxu0 %v1949
    %2585 = vmatpush.msra.mxu0 %v1948
    %2586 = vmatpush.msra.mxu0 %v1947
    %2587 = vmatpush.msra.mxu0 %v1946
    %2588 = vmatpush.msra.mxu0 %v1945
    %2589 = vmatpush.msra.mxu0 %v1944
    %2590 = vmatpush.msra.mxu0 %v1943
    %2591 = vmatpush.msra.mxu0 %v1942
    %2592 = vmatpush.msra.mxu0 %v1941
    %2593 = vmatpush.msra.mxu0 %v1940
    %2594 = vmatpush.msra.mxu0 %v1939
    %2595 = vmatpush.msra.mxu0 %v1938
    %2596 = vmatpush.msra.mxu0 %v1937
    %2597 = vmatpush.msra.mxu0 %v1936
    %2598 = vmatpush.msra.mxu0 %v1935
    %2599 = vmatpush.msra.mxu0 %v1934
    %2600 = vmatmul.f32.gmra.mxu0 %v2472
    %v2601 = vpop.f32.mrf.mxu0
    %v2602 = vadd.f32 %v2582, %v2601
    %2603 = vdwg.mxu0
    %2604 = vmatpush.msra.mxu0 %v1965
    %2605 = vmatpush.msra.mxu0 %v1964
    %2606 = vmatpush.msra.mxu0 %v1963
    %2607 = vmatpush.msra.mxu0 %v1962
    %2608 = vmatpush.msra.mxu0 %v1961
    %2609 = vmatpush.msra.mxu0 %v1960
    %2610 = vmatpush.msra.mxu0 %v1959
    %2611 = vmatpush.msra.mxu0 %v1958
    %2612 = vmatpush.msra.mxu0 %v1957
    %2613 = vmatpush.msra.mxu0 %v1956
    %2614 = vmatpush.msra.mxu0 %v1955
    %2615 = vmatpush.msra.mxu0 %v1954
    %2616 = vmatpush.msra.mxu0 %v1953
    %2617 = vmatpush.msra.mxu0 %v1952
    %2618 = vmatpush.msra.mxu0 %v1951
    %2619 = vmatpush.msra.mxu0 %v1950
    %2620 = vmatmul.f32.gmra.mxu0 %v2473
    %v2621 = vpop.f32.mrf.mxu0
    %v2622 = vadd.f32 %v2602, %v2621
    %2623 = vdwg.mxu0
    %2624 = vmatpush.msra.mxu0 %v1981
    %2625 = vmatpush.msra.mxu0 %v1980
    %2626 = vmatpush.msra.mxu0 %v1979
    %2627 = vmatpush.msra.mxu0 %v1978
    %2628 = vmatpush.msra.mxu0 %v1977
    %2629 = vmatpush.msra.mxu0 %v1976
    %2630 = vmatpush.msra.mxu0 %v1975
    %2631 = vmatpush.msra.mxu0 %v1974
    %2632 = vmatpush.msra.mxu0 %v1973
    %2633 = vmatpush.msra.mxu0 %v1972
    %2634 = vmatpush.msra.mxu0 %v1971
    %2635 = vmatpush.msra.mxu0 %v1970
    %2636 = vmatpush.msra.mxu0 %v1969
    %2637 = vmatpush.msra.mxu0 %v1968
    %2638 = vmatpush.msra.mxu0 %v1967
    %2639 = vmatpush.msra.mxu0 %v1966
    %2640 = vmatmul.f32.gmra.mxu0 %v2474
    %v2641 = vpop.f32.mrf.mxu0
    %v2642 = vadd.f32 %v2622, %v2641
    %2643 = vdwg.mxu0
    %2644 = vmatpush.msra.mxu0 %v1997
    %2645 = vmatpush.msra.mxu0 %v1996
    %2646 = vmatpush.msra.mxu0 %v1995
    %2647 = vmatpush.msra.mxu0 %v1994
    %2648 = vmatpush.msra.mxu0 %v1993
    %2649 = vmatpush.msra.mxu0 %v1992
    %2650 = vmatpush.msra.mxu0 %v1991
    %2651 = vmatpush.msra.mxu0 %v1990
    %2652 = vmatpush.msra.mxu0 %v1989
    %2653 = vmatpush.msra.mxu0 %v1988
    %2654 = vmatpush.msra.mxu0 %v1987
    %2655 = vmatpush.msra.mxu0 %v1986
    %2656 = vmatpush.msra.mxu0 %v1985
    %2657 = vmatpush.msra.mxu0 %v1984
    %2658 = vmatpush.msra.mxu0 %v1983
    %2659 = vmatpush.msra.mxu0 %v1982
    %2660 = vmatmul.f32.gmra.mxu0 %v2475
    %v2661 = vpop.f32.mrf.mxu0
    %v2662 = vadd.f32 %v2642, %v2661
    %2663 = vdwg.mxu0
    %2664 = vmatpush.msra.mxu0 %v2013
    %2665 = vmatpush.msra.mxu0 %v2012
    %2666 = vmatpush.msra.mxu0 %v2011
    %2667 = vmatpush.msra.mxu0 %v2010
    %2668 = vmatpush.msra.mxu0 %v2009
    %2669 = vmatpush.msra.mxu0 %v2008
    %2670 = vmatpush.msra.mxu0 %v2007
    %2671 = vmatpush.msra.mxu0 %v2006
    %2672 = vmatpush.msra.mxu0 %v2005
    %2673 = vmatpush.msra.mxu0 %v2004
    %2674 = vmatpush.msra.mxu0 %v2003
    %2675 = vmatpush.msra.mxu0 %v2002
    %2676 = vmatpush.msra.mxu0 %v2001
    %2677 = vmatpush.msra.mxu0 %v2000
    %2678 = vmatpush.msra.mxu0 %v1999
    %2679 = vmatpush.msra.mxu0 %v1998
    %2680 = vmatmul.f32.gmra.mxu0 %v2476
    %v2681 = vpop.f32.mrf.mxu0
    %v2682 = vadd.f32 %v2662, %v2681
    %2683 = vdwg.mxu0
    %2684 = vmatpush.msra.mxu0 %v2029
    %2685 = vmatpush.msra.mxu0 %v2028
    %2686 = vmatpush.msra.mxu0 %v2027
    %2687 = vmatpush.msra.mxu0 %v2026
    %2688 = vmatpush.msra.mxu0 %v2025
    %2689 = vmatpush.msra.mxu0 %v2024
    %2690 = vmatpush.msra.mxu0 %v2023
    %2691 = vmatpush.msra.mxu0 %v2022
    %2692 = vmatpush.msra.mxu0 %v2021
    %2693 = vmatpush.msra.mxu0 %v2020
    %2694 = vmatpush.msra.mxu0 %v2019
    %2695 = vmatpush.msra.mxu0 %v2018
    %2696 = vmatpush.msra.mxu0 %v2017
    %2697 = vmatpush.msra.mxu0 %v2016
    %2698 = vmatpush.msra.mxu0 %v2015
    %2699 = vmatpush.msra.mxu0 %v2014
    %2700 = vmatmul.f32.gmra.mxu0 %v2477
    %v2701 = vpop.f32.mrf.mxu0
    %v2702 = vadd.f32 %v2682, %v2701
    %2703 = vdwg.mxu0
    %2704 = vmatpush.msra.mxu0 %v2045
    %2705 = vmatpush.msra.mxu0 %v2044
    %2706 = vmatpush.msra.mxu0 %v2043
    %2707 = vmatpush.msra.mxu0 %v2042
    %2708 = vmatpush.msra.mxu0 %v2041
    %2709 = vmatpush.msra.mxu0 %v2040
    %2710 = vmatpush.msra.mxu0 %v2039
    %2711 = vmatpush.msra.mxu0 %v2038
    %2712 = vmatpush.msra.mxu0 %v2037
    %2713 = vmatpush.msra.mxu0 %v2036
    %2714 = vmatpush.msra.mxu0 %v2035
    %2715 = vmatpush.msra.mxu0 %v2034
    %2716 = vmatpush.msra.mxu0 %v2033
    %2717 = vmatpush.msra.mxu0 %v2032
    %2718 = vmatpush.msra.mxu0 %v2031
    %2719 = vmatpush.msra.mxu0 %v2030
    %2720 = vmatmul.f32.gmra.mxu0 %v2478
    %v2721 = vpop.f32.mrf.mxu0
    %v2722 = vadd.f32 %v2702, %v2721
    %2723 = vdwg.mxu0
    %2724 = vmatpush.msra.mxu0 %v2061
    %2725 = vmatpush.msra.mxu0 %v2060
    %2726 = vmatpush.msra.mxu0 %v2059
    %2727 = vmatpush.msra.mxu0 %v2058
    %2728 = vmatpush.msra.mxu0 %v2057
    %2729 = vmatpush.msra.mxu0 %v2056
    %2730 = vmatpush.msra.mxu0 %v2055
    %2731 = vmatpush.msra.mxu0 %v2054
    %2732 = vmatpush.msra.mxu0 %v2053
    %2733 = vmatpush.msra.mxu0 %v2052
    %2734 = vmatpush.msra.mxu0 %v2051
    %2735 = vmatpush.msra.mxu0 %v2050
    %2736 = vmatpush.msra.mxu0 %v2049
    %2737 = vmatpush.msra.mxu0 %v2048
    %2738 = vmatpush.msra.mxu0 %v2047
    %2739 = vmatpush.msra.mxu0 %v2046
    %2740 = vmatmul.f32.gmra.mxu0 %v2479
    %v2741 = vpop.f32.mrf.mxu0
    %v2742 = vadd.f32 %v2722, %v2741
    %2743 = vdwg.mxu0
    %2744 = vmatpush.msra.mxu0 %v2077
    %2745 = vmatpush.msra.mxu0 %v2076
    %2746 = vmatpush.msra.mxu0 %v2075
    %2747 = vmatpush.msra.mxu0 %v2074
    %2748 = vmatpush.msra.mxu0 %v2073
    %2749 = vmatpush.msra.mxu0 %v2072
    %2750 = vmatpush.msra.mxu0 %v2071
    %2751 = vmatpush.msra.mxu0 %v2070
    %2752 = vmatpush.msra.mxu0 %v2069
    %2753 = vmatpush.msra.mxu0 %v2068
    %2754 = vmatpush.msra.mxu0 %v2067
    %2755 = vmatpush.msra.mxu0 %v2066
    %2756 = vmatpush.msra.mxu0 %v2065
    %2757 = vmatpush.msra.mxu0 %v2064
    %2758 = vmatpush.msra.mxu0 %v2063
    %2759 = vmatpush.msra.mxu0 %v2062
    %2760 = vmatmul.f32.gmra.mxu0 %v2480
    %v2761 = vpop.f32.mrf.mxu0
    %v2762 = vadd.f32 %v2742, %v2761
    %2763 = vdwg.mxu0
    %2764 = vmatpush.msra.mxu0 %v2093
    %2765 = vmatpush.msra.mxu0 %v2092
    %2766 = vmatpush.msra.mxu0 %v2091
    %2767 = vmatpush.msra.mxu0 %v2090
    %2768 = vmatpush.msra.mxu0 %v2089
    %2769 = vmatpush.msra.mxu0 %v2088
    %2770 = vmatpush.msra.mxu0 %v2087
    %2771 = vmatpush.msra.mxu0 %v2086
    %2772 = vmatpush.msra.mxu0 %v2085
    %2773 = vmatpush.msra.mxu0 %v2084
    %2774 = vmatpush.msra.mxu0 %v2083
    %2775 = vmatpush.msra.mxu0 %v2082
    %2776 = vmatpush.msra.mxu0 %v2081
    %2777 = vmatpush.msra.mxu0 %v2080
    %2778 = vmatpush.msra.mxu0 %v2079
    %2779 = vmatpush.msra.mxu0 %v2078
    %2780 = vmatmul.f32.gmra.mxu0 %v2481
    %v2781 = vpop.f32.mrf.mxu0
    %v2782 = vadd.f32 %v2762, %v2781
    %2783 = vdwg.mxu0
    %2784 = vmatpush.msra.mxu0 %v2109
    %2785 = vmatpush.msra.mxu0 %v2108
    %2786 = vmatpush.msra.mxu0 %v2107
    %2787 = vmatpush.msra.mxu0 %v2106
    %2788 = vmatpush.msra.mxu0 %v2105
    %2789 = vmatpush.msra.mxu0 %v2104
    %2790 = vmatpush.msra.mxu0 %v2103
    %2791 = vmatpush.msra.mxu0 %v2102
    %2792 = vmatpush.msra.mxu0 %v2101
    %2793 = vmatpush.msra.mxu0 %v2100
    %2794 = vmatpush.msra.mxu0 %v2099
    %2795 = vmatpush.msra.mxu0 %v2098
    %2796 = vmatpush.msra.mxu0 %v2097
    %2797 = vmatpush.msra.mxu0 %v2096
    %2798 = vmatpush.msra.mxu0 %v2095
    %2799 = vmatpush.msra.mxu0 %v2094
    %2800 = vmatmul.f32.gmra.mxu0 %v2482
    %v2801 = vpop.f32.mrf.mxu0
    %v2802 = vadd.f32 %v2782, %v2801
    %2803 = vdwg.mxu0
    %v2804 = vadd.f32 %v1717, %v2802
    %v2805 = vsel %vm70, %v2804, 0.0
    %2806 = vadd.xlane.f32.xlu0 %v2805
    %v2807 = vpop.xlane.xlu0 %2806
    %v2808 = vmul.f32 %v2807, %v331
    %v2809 = vsub.f32 %v2804, %v2808
    %v2810 = vmul.f32 %v2809, %v2809
    %v2811 = vsel %vm70, %v2810, 0.0
    %2812 = vadd.xlane.f32.xlu0 %v2811
    %v2813 = vpop.xlane.xlu0 %2812
    %v2814 = vmul.f32 %v2813, %v331
    %v2815 = vadd.f32 %v2814, 1e-05
    %v2816 = vrsqrt.pop %v2815
    %v2817 = vmul.f32 %v2816, %v2815
    %v2818 = vmul.f32 %v2817, %v2816
    %v2819 = vmul.f32 0.5, %v2818
    %v2820 = vsub.f32 1.5, %v2819
    %v2821 = vmul.f32 %v2816, %v2820
    %vm2822 = vweird.f32 %v2815
    %vm2823 = vweird.f32 %v2816
    %vm2824 = vmor %vm2822, %vm2823
    %v2825 = vsel %vm2824, %v2816, %v2821
    %v2826 = vmul.f32 %v2809, %v2825
    %v2827 = vperm.slane %v1492, 3
    %v2828 = vmul.f32 %v2826, %v2827
    %v2829 = vperm.slane %v1492, 4
    %v2830 = vadd.f32 %v2828, %v2829
    %v2831 = vld [vmem:[%s1 + $0x48] sm:$0xff]
    %v2832 = vld [vmem:[%s1 + $0x50] sm:$0xff]
    %v2833 = vld [vmem:[%s1 + $0x58] sm:$0xff]
    %v2834 = vld [vmem:[%s1 + $0x60] sm:$0xff]
    %v2835 = vld [vmem:[%s1 + $0x68] sm:$0xff]
    %v2836 = vld [vmem:[%s1 + $0x70] sm:$0xff]
    %v2837 = vld [vmem:[%s1 + $0x78] sm:$0xff]
    %v2838 = vld [vmem:[%s1 + $0x80] sm:$0xff]
    %v2839 = vld [vmem:[%s1 + $0x88] sm:$0x1]
    %v2841 = vsel %vm166, %v58, 0
    %2843 = vmatpush.msra.mxu0 0.0
    %2844 = vmatpush.msra.mxu0 0.0
    %2845 = vmatpush.msra.mxu0 0.0
    %2846 = vmatpush.msra.mxu0 0.0
    %2847 = vmatpush.msra.mxu0 0.0
    %2848 = vmatpush.msra.mxu0 0.0
    %2849 = vmatpush.msra.mxu0 0.0
    %2850 = vmatpush.msra.mxu0 0.0
    %2851 = vmatpush.msra.mxu0 0.0
    %2852 = vmatpush.msra.mxu0 0.0
    %2853 = vmatpush.msra.mxu0 0.0
    %2854 = vmatpush.msra.mxu0 0.0
    %2855 = vmatpush.msra.mxu0 0.0
    %2856 = vmatpush.msra.mxu0 0.0
    %2857 = vmatpush.msra.mxu0 0.0
    %2858 = vmatpush.msra.mxu0 %v2830
    %2859 = vmatmul.f32.gmra.mxu0 %v2841
    %v2860 = vpop.f32.mrf.mxu0
    %v2861 = vadd.f32 0.0, %v2860
    %2862 = vdwg.mxu0
    %v2863 = vperm.slane %v2839, 0
    %v2865 = vsel %vm70, %v2861, 0
    %2867 = vmatpush.msra.mxu0 0.0
    %2868 = vmatpush.msra.mxu0 0.0
    %2869 = vmatpush.msra.mxu0 0.0
    %2870 = vmatpush.msra.mxu0 0.0
    %2871 = vmatpush.msra.mxu0 0.0
    %2872 = vmatpush.msra.mxu0 0.0
    %2873 = vmatpush.msra.mxu0 0.0
    %2874 = vmatpush.msra.mxu0 0.0
    %2875 = vmatpush.msra.mxu0 %v2838
    %2876 = vmatpush.msra.mxu0 %v2837
    %2877 = vmatpush.msra.mxu0 %v2836
    %2878 = vmatpush.msra.mxu0 %v2835
    %2879 = vmatpush.msra.mxu0 %v2834
    %2880 = vmatpush.msra.mxu0 %v2833
    %2881 = vmatpush.msra.mxu0 %v2832
    %2882 = vmatpush.msra.mxu0 %v2831
    %2883 = vmatmul.f32.gmra.mxu0 %v2865
    %v2884 = vpop.f32.mrf.mxu0
    %v2885 = vadd.f32 %v2863, %v2884
    %2886 = vdwg.mxu0
    %vm2887 = vcmask 189440
    %2888 = vst.msk [vmem:[#allocation2] sm:$0x3] %vm2887, %v2885
    // Predicated region
    $region22: #{patchtst_forward.1} parent=1 // pred_check
      _
    $region23: #{patchtst_forward.1} parent=1 // pred_check_branch
      %2890 = sbr.rel (0) target = $region25
    $region24: #{patchtst_forward.1} parent=1 // pred_region
      %2892 = vsyncadd [#allocation3], 0
      %s2894 = sshll.u32 [#allocation2], 4
      %s2895 = int_to_ptr.vmem [resolvable:$true] %s2894
      %s2896 = sshll.u32 %s5, 4
      %s2897 = int_to_ptr.hbm [resolvable:$true] %s2896
      %2899 = dma.vmem_to_hbm [thread:$0]  %s2895, 32, %s2897, [#allocation3]
    $region25: #{patchtst_forward.1} parent=1 // pred_fallthru
      _
    // Predicated region
    $region26: #{patchtst_forward.1} parent=1 // pred_check
      _
    $region27: #{patchtst_forward.1} parent=1 // pred_check_branch
      %2901 = sbr.rel (0) target = $region29
    $region28: #{patchtst_forward.1} parent=1 // pred_region
      %2903 = dma.done [#allocation3], 32
    $region29: #{patchtst_forward.1} parent=1 // pred_fallthru
      _
    %2904 = vsyncpa [#allocation3], 1

</llo_original>
